<compile_context>
chip_gen: v5e
topology: v5e:2x2
jax: 0.10.0
libtpu: 0.0.40
codegen_flags: <defaults>
</compile_context>

<pallas_src>
import jax
import jax.numpy as jnp
from jax import lax
from jax.experimental import pallas as pl
from jax.experimental.pallas import tpu as pltpu


# ----------------------------------------------------------------------------
# Architecture construction — mirrors conv_layer.__init__ exactly (host-side).
# ----------------------------------------------------------------------------
def build_arch(w, input_channel=1):
    wtemp = w
    k_size = 7 if wtemp > 70 else 5 if (wtemp <= 70 and wtemp > 30) else 3
    layers = []
    channels_in = input_channel
    channels_out = 16
    while wtemp > k_size:
        k_size = 7 if wtemp > 50 else 5 if (wtemp < 50 and wtemp > 15) else 3
        layers.append((channels_in, channels_out, k_size))
        wtemp = (wtemp - 2 * k_size // 2) / 2  # same operator precedence as the torch code
        channels_in = channels_out
        channels_out *= 2
    return layers, channels_in  # channels_in == final conv channel count


# ----------------------------------------------------------------------------
# Pallas kernel: whole forward pass (convs + relus + maxpools + avgpool + fc)
# for one batch tile of Bt samples.  Activations live in a 2-D (L*Bt, C)
# layout: rows are L-major / batch-minor, so conv-tap slicing and the MaxPool1d
# row pairing are plain sublane-aligned slices (Bt is a multiple of 8).
# ----------------------------------------------------------------------------
def make_kernel(layer_cfgs, L0, Bt, out_size, pack_out):
    n_layers = len(layer_cfgs)

    def kernel(*refs):
        x_ref, scale_ref = refs[0], refs[1]
        conv_refs = refs[2:2 + 2 * n_layers]
        wc_ref, ws_ref, bfc_ref, o_ref = refs[2 + 2 * n_layers:]

        cin = x_ref.shape[2]
        # (L0, Bt, Cin) block -> dense 2-D (L0*Bt, Cin), L-major / batch-minor rows.
        h = x_ref[...].astype(jnp.float32).reshape(L0 * Bt, cin)
        L = L0

        for li, (ci, co, k) in enumerate(layer_cfgs):
            w_ref = conv_refs[2 * li]              # (k, ci, co): tap on leading dim
            b = conv_refs[2 * li + 1][...]         # (1, co)
            Lc = L - k + 1                         # Conv1d, 'valid', stride 1

            # Conv as k accumulated tap contributions — no im2col concat copy.
            acc = None
            for kk in range(k):
                h_tap = h[kk * Bt: kk * Bt + Lc * Bt, :]   # sublane-aligned (Bt % 8 == 0)
                w_tap = w_ref[kk]                          # (ci, co)
                if ci == 1:
                    part = h_tap * w_tap                   # outer product on the VPU
                else:
                    part = jnp.dot(h_tap, w_tap, preferred_element_type=jnp.float32)
                acc = part if acc is None else acc + part
            acc = jnp.maximum(acc + b, 0.0)                # conv bias + ReLU

            # MaxPool1d(2): pair consecutive L rows (floor semantics — drop odd tail).
            Lp = Lc // 2
            a2 = acc[: 2 * Lp * Bt, :].reshape(Lp, 2 * Bt, co)
            h = jnp.maximum(a2[:, :Bt, :], a2[:, Bt:, :]).reshape(Lp * Bt, co)
            L = Lp

        cf = h.shape[1]
        # AdaptiveAvgPool1d(1) + squeeze -> (Bt, cf)
        pooled = jnp.mean(h.reshape(L, Bt, cf), axis=0)

        # fc_scaler(cat((pooled, scale), dim=1)) == pooled @ Wc + scale @ Ws + b
        y = jnp.dot(pooled, wc_ref[...], preferred_element_type=jnp.float32)
        y = y + jnp.dot(scale_ref[...].astype(jnp.float32), ws_ref[...],
                        preferred_element_type=jnp.float32)
        y = jnp.maximum(y + bfc_ref[...], 0.0)

        if pack_out:
            # Lane-dense store: pack G sublane-aligned batch blocks of `out_size`
            # lanes side by side into 128-lane rows -> unmasked vst.  The wrapper
            # undoes the packing with a plain XLA reshape/transpose.
            G = 128 // out_size
            P = Bt // G
            packed = jnp.concatenate([y[g * P:(g + 1) * P, :] for g in range(G)],
                                     axis=1)
            o_ref[...] = packed.astype(o_ref.dtype)
        else:
            o_ref[...] = y.astype(o_ref.dtype)

    return kernel


def conv_layer_forward(RW, scale_prm, params, layer_cfgs, out_size, b_tile=64):
    """RW: (B, Cin, L) in PyTorch NCL layout; scale_prm: (B, scale_size)."""
    conv_ws, conv_bs, fc_w, fc_b = params
    Btot, Cin, L0 = RW.shape
    # Hard constraints: sublane alignment of every tap slice / pool split, and
    # an integral grid.  (On v7x prefer an even grid so both TCs are used.)
    assert b_tile % 8 == 0, "b_tile must be a multiple of 8 (sublane alignment)"
    assert Btot % b_tile == 0, "batch must be a multiple of the batch tile"
    cf = layer_cfgs[-1][1] if layer_cfgs else Cin
    scale_size = scale_prm.shape[1]
    grid_n = Btot // b_tile

    # Lane-dense output packing is possible when the per-tile output flattens
    # cleanly into sublane-aligned 128-lane rows.
    G = 128 // out_size if (0 < out_size < 128 and 128 % out_size == 0) else 0
    pack_out = bool(G) and b_tile % G == 0 and (b_tile // G) % 8 == 0

    # NCL -> (L, B, Cin): L-major rows so tap slicing is layout-trivial in-kernel.
    x = jnp.transpose(RW, (2, 0, 1))

    inputs = [x, scale_prm]
    in_specs = [
        pl.BlockSpec((L0, b_tile, Cin), lambda i: (0, i, 0)),      # activations advance
        pl.BlockSpec((b_tile, scale_size), lambda i: (i, 0)),      # with the batch grid
    ]
    for (ci, co, k), W, bias in zip(layer_cfgs, conv_ws, conv_bs):
        # (Cout, Cin, K) -> (K, Cin, Cout): tap on the leading (free) dim.
        inputs.append(jnp.transpose(W, (2, 1, 0)))
        in_specs.append(pl.BlockSpec((k, ci, co), lambda i: (0, 0, 0)))  # resident weights
        inputs.append(bias.reshape(1, co))
        in_specs.append(pl.BlockSpec((1, co), lambda i: (0, 0)))
    inputs.append(fc_w[:, :cf].T)                                        # (cf, out)
    in_specs.append(pl.BlockSpec((cf, out_size), lambda i: (0, 0)))
    inputs.append(fc_w[:, cf:].T)                                        # (scale_size, out)
    in_specs.append(pl.BlockSpec((scale_size, out_size), lambda i: (0, 0)))
    inputs.append(fc_b.reshape(1, out_size))
    in_specs.append(pl.BlockSpec((1, out_size), lambda i: (0, 0)))

    if pack_out:
        P = b_tile // G                      # packed rows per grid step
        out_shape = jax.ShapeDtypeStruct((grid_n * P, 128), RW.dtype)
        out_specs = pl.BlockSpec((P, 128), lambda i: (i, 0))
    else:
        out_shape = jax.ShapeDtypeStruct((Btot, out_size), RW.dtype)
        out_specs = pl.BlockSpec((b_tile, out_size), lambda i: (i, 0))

    out = pl.pallas_call(
        make_kernel(layer_cfgs, L0, b_tile, out_size, pack_out),
        out_shape=out_shape,
        grid=(grid_n,),
        in_specs=in_specs,
        out_specs=out_specs,
        compiler_params=pltpu.CompilerParams(dimension_semantics=("parallel",)),
    )(*inputs)

    if pack_out:
        P = b_tile // G
        # packed[i, r, g*out:(g+1)*out] == y_tile_i[g*P + r, :] == out[i*b_tile + g*P + r, :]
        out = (out.reshape(grid_n, P, G, out_size)
                  .transpose(0, 2, 1, 3)
                  .reshape(Btot, out_size))
    return out


# ----------------------------------------------------------------------------
# Deterministic parameter init + pure-JAX (XLA) reference for validation.
# ----------------------------------------------------------------------------
def init_params(key, layer_cfgs, cf, scale_size, out_size):
    conv_ws, conv_bs = [], []
    for (ci, co, k) in layer_cfgs:
        key, k1, k2 = jax.random.split(key, 3)
        conv_ws.append(jax.random.normal(k1, (co, ci, k), jnp.float32) / (ci * k) ** 0.5)
        conv_bs.append(jax.random.normal(k2, (co,), jnp.float32) * 0.1)
    key, k1, k2 = jax.random.split(key, 3)
    fan_in = cf + scale_size
    fc_w = jax.random.normal(k1, (out_size, fan_in), jnp.float32) / fan_in ** 0.5
    fc_b = jax.random.normal(k2, (out_size,), jnp.float32) * 0.1
    return conv_ws, conv_bs, fc_w, fc_b


def reference_forward(RW, scale_prm, params, layer_cfgs):
    conv_ws, conv_bs, fc_w, fc_b = params
    h = RW                                        # (B, C, L)
    for (ci, co, k), W, b in zip(layer_cfgs, conv_ws, conv_bs):
        h = lax.conv_general_dilated(h, W, window_strides=(1,), padding='VALID',
                                     dimension_numbers=('NCH', 'OIH', 'NCH'))
        h = jnp.maximum(h + b[None, :, None], 0.0)
        h = lax.reduce_window(h, -jnp.inf, lax.max, (1, 1, 2), (1, 1, 2), 'VALID')
    pooled = jnp.mean(h, axis=2)                  # AdaptiveAvgPool1d(1) + squeeze
    cat = jnp.concatenate([pooled, scale_prm], axis=1)
    return jnp.maximum(cat @ fc_w.T + fc_b, 0.0)


if __name__ == "__main__":
    # Small model, but a batch large enough for a meaningful tile: grid of 2
    # steps of 64 samples (even grid -> both v7x TensorCores busy).
    Btot, B_TILE, w, Cin, scale_size, out_size = 128, 64, 16, 1, 2, 32

    layer_cfgs, cf = build_arch(w, Cin)           # for w=16: [(1,16,5), (16,32,3)], cf=32

    key = jax.random.PRNGKey(0)
    key, kx, ks = jax.random.split(key, 3)
    RW = jax.random.normal(kx, (Btot, Cin, w), jnp.float32)
    scale_prm = jax.random.normal(ks, (Btot, scale_size), jnp.float32)
    params = init_params(key, layer_cfgs, cf, scale_size, out_size)

    out = conv_layer_forward(RW, scale_prm, params, layer_cfgs, out_size, b_tile=B_TILE)
    out = jax.block_until_ready(out)

    ref = reference_forward(RW, scale_prm, params, layer_cfgs)
    assert out.shape == (Btot, out_size)
    if not jnp.allclose(out, ref, atol=1e-4, rtol=1e-4):
        raise AssertionError("Pallas kernel output does not match reference")
    print("KERNEL_OK")
</pallas_src>

<mosaic_0001>
module attributes {stable_mosaic.version = 11 : i64} {
  func.func @kernel(%arg0: i32, %arg1: memref<16x64x1xf32, #tpu.memory_space<vmem>>, %arg2: memref<64x2xf32, #tpu.memory_space<vmem>>, %arg3: memref<5x1x16xf32, #tpu.memory_space<vmem>>, %arg4: memref<1x16xf32, #tpu.memory_space<vmem>>, %arg5: memref<3x16x32xf32, #tpu.memory_space<vmem>>, %arg6: memref<1x32xf32, #tpu.memory_space<vmem>>, %arg7: memref<32x32xf32, #tpu.memory_space<vmem>>, %arg8: memref<2x32xf32, #tpu.memory_space<vmem>>, %arg9: memref<1x32xf32, #tpu.memory_space<vmem>>, %arg10: memref<16x128xf32, #tpu.memory_space<vmem>>) attributes {dimension_semantics = [#tpu.dimension_semantics<parallel>], iteration_bounds = array<i64: 2>, scalar_prefetch = 0 : i64, scratch_operands = 0 : i64, tpu.core_type = #tpu.core_type<tc>, window_params = [{transform_indices = @transform_0, window_bounds = array<i64: 16, 64, 1>}, {transform_indices = @transform_1, window_bounds = array<i64: 64, 2>}, {pipeline_mode = #tpu.pipeline_mode<synchronous>, transform_indices = @transform_2, window_bounds = array<i64: 5, 1, 16>}, {pipeline_mode = #tpu.pipeline_mode<synchronous>, transform_indices = @transform_3, window_bounds = array<i64: 1, 16>}, {pipeline_mode = #tpu.pipeline_mode<synchronous>, transform_indices = @transform_4, window_bounds = array<i64: 3, 16, 32>}, {pipeline_mode = #tpu.pipeline_mode<synchronous>, transform_indices = @transform_5, window_bounds = array<i64: 1, 32>}, {pipeline_mode = #tpu.pipeline_mode<synchronous>, transform_indices = @transform_6, window_bounds = array<i64: 32, 32>}, {pipeline_mode = #tpu.pipeline_mode<synchronous>, transform_indices = @transform_7, window_bounds = array<i64: 2, 32>}, {pipeline_mode = #tpu.pipeline_mode<synchronous>, transform_indices = @transform_8, window_bounds = array<i64: 1, 32>}, {transform_indices = @transform_9, window_bounds = array<i64: 16, 128>}]} {
    %c0 = arith.constant 0 : index
    %c0_0 = arith.constant 0 : index
    %c0_1 = arith.constant 0 : index
    %0 = vector.load %arg1[%c0, %c0_0, %c0_1] : memref<16x64x1xf32, #tpu.memory_space<vmem>>, vector<16x64x1xf32>
    %1 = vector.shape_cast %0 : vector<16x64x1xf32> to vector<1024x1xf32>
    %c0_2 = arith.constant 0 : index
    %c0_3 = arith.constant 0 : index
    %2 = vector.load %arg4[%c0_2, %c0_3] : memref<1x16xf32, #tpu.memory_space<vmem>>, vector<1x16xf32>
    %3 = vector.extract_strided_slice %1 {offsets = [0, 0], sizes = [768, 1], strides = [1, 1]} : vector<1024x1xf32> to vector<768x1xf32>
    %c0_4 = arith.constant 0 : index
    %c0_5 = arith.constant 0 : index
    %c0_6 = arith.constant 0 : index
    %4 = vector.load %arg3[%c0_4, %c0_5, %c0_6] : memref<5x1x16xf32, #tpu.memory_space<vmem>>, vector<1x1x16xf32>
    %5 = vector.shape_cast %4 : vector<1x1x16xf32> to vector<1x16xf32>
    %6 = vector.broadcast %3 : vector<768x1xf32> to vector<768x16xf32>
    %7 = vector.broadcast %5 : vector<1x16xf32> to vector<768x16xf32>
    %8 = arith.mulf %6, %7 : vector<768x16xf32>
    %9 = vector.extract_strided_slice %1 {offsets = [64, 0], sizes = [768, 1], strides = [1, 1]} : vector<1024x1xf32> to vector<768x1xf32>
    %c1 = arith.constant 1 : index
    %c0_7 = arith.constant 0 : index
    %c0_8 = arith.constant 0 : index
    %10 = vector.load %arg3[%c1, %c0_7, %c0_8] : memref<5x1x16xf32, #tpu.memory_space<vmem>>, vector<1x1x16xf32>
    %11 = vector.shape_cast %10 : vector<1x1x16xf32> to vector<1x16xf32>
    %12 = vector.broadcast %9 : vector<768x1xf32> to vector<768x16xf32>
    %13 = vector.broadcast %11 : vector<1x16xf32> to vector<768x16xf32>
    %14 = arith.mulf %12, %13 : vector<768x16xf32>
    %15 = arith.addf %8, %14 : vector<768x16xf32>
    %16 = vector.extract_strided_slice %1 {offsets = [128, 0], sizes = [768, 1], strides = [1, 1]} : vector<1024x1xf32> to vector<768x1xf32>
    %c2 = arith.constant 2 : index
    %c0_9 = arith.constant 0 : index
    %c0_10 = arith.constant 0 : index
    %17 = vector.load %arg3[%c2, %c0_9, %c0_10] : memref<5x1x16xf32, #tpu.memory_space<vmem>>, vector<1x1x16xf32>
    %18 = vector.shape_cast %17 : vector<1x1x16xf32> to vector<1x16xf32>
    %19 = vector.broadcast %16 : vector<768x1xf32> to vector<768x16xf32>
    %20 = vector.broadcast %18 : vector<1x16xf32> to vector<768x16xf32>
    %21 = arith.mulf %19, %20 : vector<768x16xf32>
    %22 = arith.addf %15, %21 : vector<768x16xf32>
    %23 = vector.extract_strided_slice %1 {offsets = [192, 0], sizes = [768, 1], strides = [1, 1]} : vector<1024x1xf32> to vector<768x1xf32>
    %c3 = arith.constant 3 : index
    %c0_11 = arith.constant 0 : index
    %c0_12 = arith.constant 0 : index
    %24 = vector.load %arg3[%c3, %c0_11, %c0_12] : memref<5x1x16xf32, #tpu.memory_space<vmem>>, vector<1x1x16xf32>
    %25 = vector.shape_cast %24 : vector<1x1x16xf32> to vector<1x16xf32>
    %26 = vector.broadcast %23 : vector<768x1xf32> to vector<768x16xf32>
    %27 = vector.broadcast %25 : vector<1x16xf32> to vector<768x16xf32>
    %28 = arith.mulf %26, %27 : vector<768x16xf32>
    %29 = arith.addf %22, %28 : vector<768x16xf32>
    %30 = vector.extract_strided_slice %1 {offsets = [256, 0], sizes = [768, 1], strides = [1, 1]} : vector<1024x1xf32> to vector<768x1xf32>
    %c4 = arith.constant 4 : index
    %c0_13 = arith.constant 0 : index
    %c0_14 = arith.constant 0 : index
    %31 = vector.load %arg3[%c4, %c0_13, %c0_14] : memref<5x1x16xf32, #tpu.memory_space<vmem>>, vector<1x1x16xf32>
    %32 = vector.shape_cast %31 : vector<1x1x16xf32> to vector<1x16xf32>
    %33 = vector.broadcast %30 : vector<768x1xf32> to vector<768x16xf32>
    %34 = vector.broadcast %32 : vector<1x16xf32> to vector<768x16xf32>
    %35 = arith.mulf %33, %34 : vector<768x16xf32>
    %36 = arith.addf %29, %35 : vector<768x16xf32>
    %37 = vector.broadcast %2 : vector<1x16xf32> to vector<768x16xf32>
    %38 = arith.addf %36, %37 : vector<768x16xf32>
    %cst = arith.constant 0.000000e+00 : f32
    %39 = vector.broadcast %cst : f32 to vector<768x16xf32>
    %40 = arith.maximumf %38, %39 : vector<768x16xf32>
    %41 = vector.shape_cast %40 : vector<768x16xf32> to vector<6x128x16xf32>
    %42 = vector.extract_strided_slice %41 {offsets = [0, 0, 0], sizes = [6, 64, 16], strides = [1, 1, 1]} : vector<6x128x16xf32> to vector<6x64x16xf32>
    %43 = vector.extract_strided_slice %41 {offsets = [0, 64, 0], sizes = [6, 64, 16], strides = [1, 1, 1]} : vector<6x128x16xf32> to vector<6x64x16xf32>
    %44 = arith.maximumf %42, %43 : vector<6x64x16xf32>
    %45 = vector.shape_cast %44 : vector<6x64x16xf32> to vector<384x16xf32>
    %c0_15 = arith.constant 0 : index
    %c0_16 = arith.constant 0 : index
    %46 = vector.load %arg6[%c0_15, %c0_16] : memref<1x32xf32, #tpu.memory_space<vmem>>, vector<1x32xf32>
    %47 = vector.extract_strided_slice %45 {offsets = [0, 0], sizes = [256, 16], strides = [1, 1]} : vector<384x16xf32> to vector<256x16xf32>
    %c0_17 = arith.constant 0 : index
    %c0_18 = arith.constant 0 : index
    %c0_19 = arith.constant 0 : index
    %48 = vector.load %arg5[%c0_17, %c0_18, %c0_19] : memref<3x16x32xf32, #tpu.memory_space<vmem>>, vector<1x16x32xf32>
    %49 = vector.shape_cast %48 : vector<1x16x32xf32> to vector<16x32xf32>
    %cst_20 = arith.constant dense<0.000000e+00> : vector<256x32xf32>
    %50 = tpu.matmul %47, %49, %cst_20 {dimension_numbers = #tpu.dot_dimension_numbers<[1], [0], [0], [1], [0, 0, 1, 1], [], []>} : vector<256x16xf32>, vector<16x32xf32>, vector<256x32xf32> -> vector<256x32xf32>
    %51 = vector.extract_strided_slice %45 {offsets = [64, 0], sizes = [256, 16], strides = [1, 1]} : vector<384x16xf32> to vector<256x16xf32>
    %c1_21 = arith.constant 1 : index
    %c0_22 = arith.constant 0 : index
    %c0_23 = arith.constant 0 : index
    %52 = vector.load %arg5[%c1_21, %c0_22, %c0_23] : memref<3x16x32xf32, #tpu.memory_space<vmem>>, vector<1x16x32xf32>
    %53 = vector.shape_cast %52 : vector<1x16x32xf32> to vector<16x32xf32>
    %cst_24 = arith.constant dense<0.000000e+00> : vector<256x32xf32>
    %54 = tpu.matmul %51, %53, %cst_24 {dimension_numbers = #tpu.dot_dimension_numbers<[1], [0], [0], [1], [0, 0, 1, 1], [], []>} : vector<256x16xf32>, vector<16x32xf32>, vector<256x32xf32> -> vector<256x32xf32>
    %55 = arith.addf %50, %54 : vector<256x32xf32>
    %56 = vector.extract_strided_slice %45 {offsets = [128, 0], sizes = [256, 16], strides = [1, 1]} : vector<384x16xf32> to vector<256x16xf32>
    %c2_25 = arith.constant 2 : index
    %c0_26 = arith.constant 0 : index
    %c0_27 = arith.constant 0 : index
    %57 = vector.load %arg5[%c2_25, %c0_26, %c0_27] : memref<3x16x32xf32, #tpu.memory_space<vmem>>, vector<1x16x32xf32>
    %58 = vector.shape_cast %57 : vector<1x16x32xf32> to vector<16x32xf32>
    %cst_28 = arith.constant dense<0.000000e+00> : vector<256x32xf32>
    %59 = tpu.matmul %56, %58, %cst_28 {dimension_numbers = #tpu.dot_dimension_numbers<[1], [0], [0], [1], [0, 0, 1, 1], [], []>} : vector<256x16xf32>, vector<16x32xf32>, vector<256x32xf32> -> vector<256x32xf32>
    %60 = arith.addf %55, %59 : vector<256x32xf32>
    %61 = vector.broadcast %46 : vector<1x32xf32> to vector<256x32xf32>
    %62 = arith.addf %60, %61 : vector<256x32xf32>
    %cst_29 = arith.constant 0.000000e+00 : f32
    %63 = vector.broadcast %cst_29 : f32 to vector<256x32xf32>
    %64 = arith.maximumf %62, %63 : vector<256x32xf32>
    %65 = vector.shape_cast %64 : vector<256x32xf32> to vector<2x128x32xf32>
    %66 = vector.extract_strided_slice %65 {offsets = [0, 0, 0], sizes = [2, 64, 32], strides = [1, 1, 1]} : vector<2x128x32xf32> to vector<2x64x32xf32>
    %67 = vector.extract_strided_slice %65 {offsets = [0, 64, 0], sizes = [2, 64, 32], strides = [1, 1, 1]} : vector<2x128x32xf32> to vector<2x64x32xf32>
    %68 = arith.maximumf %66, %67 : vector<2x64x32xf32>
    %69 = vector.shape_cast %68 : vector<2x64x32xf32> to vector<128x32xf32>
    %70 = vector.shape_cast %69 : vector<128x32xf32> to vector<2x64x32xf32>
    %cst_30 = arith.constant dense<0.000000e+00> : vector<64x32xf32>
    %71 = vector.multi_reduction <add>, %70, %cst_30 [0] : vector<2x64x32xf32> to vector<64x32xf32>
    %cst_31 = arith.constant 2.000000e+00 : f32
    %72 = vector.broadcast %cst_31 : f32 to vector<64x32xf32>
    %73 = arith.divf %71, %72 : vector<64x32xf32>
    %c0_32 = arith.constant 0 : index
    %c0_33 = arith.constant 0 : index
    %74 = vector.load %arg7[%c0_32, %c0_33] : memref<32x32xf32, #tpu.memory_space<vmem>>, vector<32x32xf32>
    %cst_34 = arith.constant dense<0.000000e+00> : vector<64x32xf32>
    %75 = tpu.matmul %73, %74, %cst_34 {dimension_numbers = #tpu.dot_dimension_numbers<[1], [0], [0], [1], [0, 0, 1, 1], [], []>} : vector<64x32xf32>, vector<32x32xf32>, vector<64x32xf32> -> vector<64x32xf32>
    %c0_35 = arith.constant 0 : index
    %c0_36 = arith.constant 0 : index
    %76 = vector.load %arg2[%c0_35, %c0_36] : memref<64x2xf32, #tpu.memory_space<vmem>>, vector<64x2xf32>
    %c0_37 = arith.constant 0 : index
    %c0_38 = arith.constant 0 : index
    %77 = vector.load %arg8[%c0_37, %c0_38] : memref<2x32xf32, #tpu.memory_space<vmem>>, vector<2x32xf32>
    %cst_39 = arith.constant dense<0.000000e+00> : vector<64x32xf32>
    %78 = tpu.matmul %76, %77, %cst_39 {dimension_numbers = #tpu.dot_dimension_numbers<[1], [0], [0], [1], [0, 0, 1, 1], [], []>} : vector<64x2xf32>, vector<2x32xf32>, vector<64x32xf32> -> vector<64x32xf32>
    %79 = arith.addf %75, %78 : vector<64x32xf32>
    %c0_40 = arith.constant 0 : index
    %c0_41 = arith.constant 0 : index
    %80 = vector.load %arg9[%c0_40, %c0_41] : memref<1x32xf32, #tpu.memory_space<vmem>>, vector<1x32xf32>
    %81 = vector.broadcast %80 : vector<1x32xf32> to vector<64x32xf32>
    %82 = arith.addf %79, %81 : vector<64x32xf32>
    %cst_42 = arith.constant 0.000000e+00 : f32
    %83 = vector.broadcast %cst_42 : f32 to vector<64x32xf32>
    %84 = arith.maximumf %82, %83 : vector<64x32xf32>
    %85 = vector.extract_strided_slice %84 {offsets = [0, 0], sizes = [16, 32], strides = [1, 1]} : vector<64x32xf32> to vector<16x32xf32>
    %86 = vector.extract_strided_slice %84 {offsets = [16, 0], sizes = [16, 32], strides = [1, 1]} : vector<64x32xf32> to vector<16x32xf32>
    %87 = vector.extract_strided_slice %84 {offsets = [32, 0], sizes = [16, 32], strides = [1, 1]} : vector<64x32xf32> to vector<16x32xf32>
    %88 = vector.extract_strided_slice %84 {offsets = [48, 0], sizes = [16, 32], strides = [1, 1]} : vector<64x32xf32> to vector<16x32xf32>
    %89 = tpu.concatenate %85, %86, %87, %88 in 1 : vector<16x32xf32>, vector<16x32xf32>, vector<16x32xf32>, vector<16x32xf32> -> vector<16x128xf32>
    %c0_43 = arith.constant 0 : index
    %c0_44 = arith.constant 0 : index
    %90 = vector.load %arg10[%c0_43, %c0_44] : memref<16x128xf32, #tpu.memory_space<vmem>>, vector<16x128xf32>
    tpu.vector_store %arg10[%c0_43, %c0_44], %89 {strides = array<i32>} : memref<16x128xf32, #tpu.memory_space<vmem>>, vector<16x128xf32>,
    return
  }
  func.func @transform_0(%arg0: i32) -> (i32, i32, i32) {
    %c0_i32 = arith.constant 0 : i32
    %c0_i32_0 = arith.constant 0 : i32
    %c0_i32_1 = arith.constant 0 : i32
    return %c0_i32, %arg0, %c0_i32_0 : i32, i32, i32
  }
  func.func @transform_1(%arg0: i32) -> (i32, i32) {
    %c0_i32 = arith.constant 0 : i32
    %c0_i32_0 = arith.constant 0 : i32
    return %arg0, %c0_i32 : i32, i32
  }
  func.func @transform_2(%arg0: i32) -> (i32, i32, i32) {
    %c0_i32 = arith.constant 0 : i32
    %c0_i32_0 = arith.constant 0 : i32
    %c0_i32_1 = arith.constant 0 : i32
    %c0_i32_2 = arith.constant 0 : i32
    return %c0_i32, %c0_i32_0, %c0_i32_1 : i32, i32, i32
  }
  func.func @transform_3(%arg0: i32) -> (i32, i32) {
    %c0_i32 = arith.constant 0 : i32
    %c0_i32_0 = arith.constant 0 : i32
    %c0_i32_1 = arith.constant 0 : i32
    return %c0_i32, %c0_i32_0 : i32, i32
  }
  func.func @transform_4(%arg0: i32) -> (i32, i32, i32) {
    %c0_i32 = arith.constant 0 : i32
    %c0_i32_0 = arith.constant 0 : i32
    %c0_i32_1 = arith.constant 0 : i32
    %c0_i32_2 = arith.constant 0 : i32
    return %c0_i32, %c0_i32_0, %c0_i32_1 : i32, i32, i32
  }
  func.func @transform_5(%arg0: i32) -> (i32, i32) {
    %c0_i32 = arith.constant 0 : i32
    %c0_i32_0 = arith.constant 0 : i32
    %c0_i32_1 = arith.constant 0 : i32
    return %c0_i32, %c0_i32_0 : i32, i32
  }
  func.func @transform_6(%arg0: i32) -> (i32, i32) {
    %c0_i32 = arith.constant 0 : i32
    %c0_i32_0 = arith.constant 0 : i32
    %c0_i32_1 = arith.constant 0 : i32
    return %c0_i32, %c0_i32_0 : i32, i32
  }
  func.func @transform_7(%arg0: i32) -> (i32, i32) {
    %c0_i32 = arith.constant 0 : i32
    %c0_i32_0 = arith.constant 0 : i32
    %c0_i32_1 = arith.constant 0 : i32
    return %c0_i32, %c0_i32_0 : i32, i32
  }
  func.func @transform_8(%arg0: i32) -> (i32, i32) {
    %c0_i32 = arith.constant 0 : i32
    %c0_i32_0 = arith.constant 0 : i32
    %c0_i32_1 = arith.constant 0 : i32
    return %c0_i32, %c0_i32_0 : i32, i32
  }
  func.func @transform_9(%arg0: i32) -> (i32, i32) {
    %c0_i32 = arith.constant 0 : i32
    %c0_i32_0 = arith.constant 0 : i32
    return %arg0, %c0_i32 : i32, i32
  }
}

</mosaic_0001>

<llo_original>
// kernel: tpu_custom_call.1
$region0: #{tpu_custom_call.1}
  #allocation0 [shape = 'u32[]', space=smem, size = 0x4, offset = 0x4, fixed_abs, tag = 'smem constant byte address 0x4 - core index']
  #allocation1 [shape = 'u32[72,128]{1,0:T(1,128)}', space=vmem, size = 0x9000, scoped, tag = 'internal scratch']
  %s0 = inlined_call_operand.vmem [shape: f32[16,128,1], index: 0, kind: input, shape index: {}]
  %s1 = inlined_call_operand.vmem [shape: f32[128,2], index: 1, kind: input, shape index: {}]
  %s2 = inlined_call_operand.vmem [shape: f32[5,1,16], index: 2, kind: input, shape index: {}]
  %s3 = inlined_call_operand.vmem [shape: f32[1,16], index: 3, kind: input, shape index: {}]
  %s4 = inlined_call_operand.vmem [shape: f32[3,16,32], index: 4, kind: input, shape index: {}]
  %s5 = inlined_call_operand.vmem [shape: f32[1,32], index: 5, kind: input, shape index: {}]
  %s6 = inlined_call_operand.vmem [shape: f32[32,32], index: 6, kind: input, shape index: {}]
  %s7 = inlined_call_operand.vmem [shape: f32[2,32], index: 7, kind: input, shape index: {}]
  %s8 = inlined_call_operand.vmem [shape: f32[1,32], index: 8, kind: input, shape index: {}]
  %s9 = inlined_call_operand.hbm [shape: f32[32,128], index: 9, kind: output, shape index: {}]
  %s10 = sld [smem:[#allocation0]]
  $region107: #{tpu_custom_call.1} parent=0
    _
  %s12 = ssub.s32 1, %s10
  %s13 = scalar_select 0, %s12, %s10
  $region1: #{tpu_custom_call.1} parent=0
    #allocation2 [shape = 'u8[1048576]{0}', space=vmem, size = 0x100000, scoped, tag = 'input window, operand 0']
    #allocation3 [shape = 'u8[16384]{0}', space=vmem, size = 0x4000, scoped, tag = 'output window, operand 0']
    #allocation4 [shape = 's32[2]{0}', space=sflag, size = 0x8, scoped, tag = 'scoped memory for tpu_custom_call.1']
    %14 = vsyncpa [#allocation4], 0
    %s15 = scalar_lea.sflag [#allocation4], 1
    %16 = vsyncpa %s15, 0
    loop: start=0, step=1, limit=4
    $region2: #{tpu_custom_call.1} parent=1 // loop_pre_header
      _
    $region3: #{tpu_custom_call.1} parent=1 // loop_header
      %s18 = sphi 0, %s22
      %p19 = scmp.ge.s32.totalorder %s18, 4
      %s28 = sphi 0, %s30
      %s31 = sphi 0, %s28
      %s32 = sphi 0, %s31
      %s48 = sphi 0, %s32
      %s54 = sphi 0, %s56
      %s57 = sphi 0, %s54
      %s58 = sphi 0, %s57
      %s74 = sphi 0, %s58
      %s78 = sphi 0, %s78
      %s80 = sphi 0, %s78
      %s81 = sphi 0, %s80
      %s95 = sphi 0, %s81
      %s99 = sphi 0, %s99
      %s101 = sphi 0, %s99
      %s102 = sphi 0, %s101
      %s116 = sphi 0, %s102
      %s120 = sphi 0, %s120
      %s122 = sphi 0, %s120
      %s123 = sphi 0, %s122
      %s137 = sphi 0, %s123
      %s141 = sphi 0, %s141
      %s143 = sphi 0, %s141
      %s144 = sphi 0, %s143
      %s158 = sphi 0, %s144
      %s162 = sphi 0, %s162
      %s164 = sphi 0, %s162
      %s165 = sphi 0, %s164
      %s179 = sphi 0, %s165
      %s183 = sphi 0, %s183
      %s185 = sphi 0, %s183
      %s186 = sphi 0, %s185
      %s200 = sphi 0, %s186
      %s204 = sphi 0, %s204
      %s206 = sphi 0, %s204
      %s207 = sphi 0, %s206
      %s221 = sphi 0, %s207
      %s227 = sphi 0, %s229
      %s230 = sphi 0, %s227
      %s231 = sphi 0, %s230
      %s247 = sphi 0, %s231
    $region4: #{tpu_custom_call.1} parent=1 // loop_header_branch
      %21 = sbr.rel (%p19) target = $region8
    $region5: #{tpu_custom_call.1} parent=1 // loop_body
      %s23 = ssub.s32 %s18, 1
      %s24 = ssub.s32 %s18, 2
      %s25 = sadd.s32 %s18, 1
      %s26 = ssub.s32 %s18, %s25
      %p27 = scmp.eq.s32.totalorder %s26, 0
      %s29 = sadd.s32 %s28, 1
      %s30 = scalar_select %p27, %s28, %s29
      %p33 = pneg %p27
      %p34 = scmp.eq.s32.totalorder %s18, 1
      %p35 = por %p33, %p34
      %p36 = scmp.ne.s32.totalorder %s28, %s31
      %p37 = scmp.eq.s32.totalorder %s18, 0
      %p38 = por %p36, %p37
      %p39 = scmp.ne.s32.totalorder %s28, %s31
      %p40 = scmp.eq.s32.totalorder %s23, 1
      %p41 = por %p39, %p40
      %p42 = scmp.ne.s32.totalorder %s31, %s32
      %p43 = scmp.eq.s32.totalorder %s23, 0
      %p44 = por %p42, %p43
      %p45 = scmp.ne.s32.totalorder %s31, %s32
      %p46 = scmp.eq.s32.totalorder %s24, 1
      %p47 = por %p45, %p46
      %p49 = scmp.ne.s32.totalorder %s32, %s48
      %p50 = scmp.eq.s32.totalorder %s24, 0
      %p51 = por %p49, %p50
      %s52 = ssub.s32 %s18, %s25
      %p53 = scmp.eq.s32.totalorder %s52, 0
      %s55 = sadd.s32 %s54, 1
      %s56 = scalar_select %p53, %s54, %s55
      %p59 = pneg %p53
      %p60 = scmp.eq.s32.totalorder %s18, 1
      %p61 = por %p59, %p60
      %p62 = scmp.ne.s32.totalorder %s54, %s57
      %p63 = scmp.eq.s32.totalorder %s18, 0
      %p64 = por %p62, %p63
      %p65 = scmp.ne.s32.totalorder %s54, %s57
      %p66 = scmp.eq.s32.totalorder %s23, 1
      %p67 = por %p65, %p66
      %p68 = scmp.ne.s32.totalorder %s57, %s58
      %p69 = scmp.eq.s32.totalorder %s23, 0
      %p70 = por %p68, %p69
      %p71 = scmp.ne.s32.totalorder %s57, %s58
      %p72 = scmp.eq.s32.totalorder %s24, 1
      %p73 = por %p71, %p72
      %p75 = scmp.ne.s32.totalorder %s58, %s74
      %p76 = scmp.eq.s32.totalorder %s24, 0
      %p77 = por %p75, %p76
      %s79 = sadd.s32 %s78, 1
      %p82 = scmp.eq.s32.totalorder %s18, 1
      %p83 = scmp.ne.s32.totalorder %s78, %s80
      %p84 = scmp.eq.s32.totalorder %s18, 0
      %p85 = por %p83, %p84
      %p86 = scmp.ne.s32.totalorder %s78, %s80
      %p87 = scmp.eq.s32.totalorder %s23, 1
      %p88 = por %p86, %p87
      %p89 = scmp.ne.s32.totalorder %s80, %s81
      %p90 = scmp.eq.s32.totalorder %s23, 0
      %p91 = por %p89, %p90
      %p92 = scmp.ne.s32.totalorder %s80, %s81
      %p93 = scmp.eq.s32.totalorder %s24, 1
      %p94 = por %p92, %p93
      %p96 = scmp.ne.s32.totalorder %s81, %s95
      %p97 = scmp.eq.s32.totalorder %s24, 0
      %p98 = por %p96, %p97
      %s100 = sadd.s32 %s99, 1
      %p103 = scmp.eq.s32.totalorder %s18, 1
      %p104 = scmp.ne.s32.totalorder %s99, %s101
      %p105 = scmp.eq.s32.totalorder %s18, 0
      %p106 = por %p104, %p105
      %p107 = scmp.ne.s32.totalorder %s99, %s101
      %p108 = scmp.eq.s32.totalorder %s23, 1
      %p109 = por %p107, %p108
      %p110 = scmp.ne.s32.totalorder %s101, %s102
      %p111 = scmp.eq.s32.totalorder %s23, 0
      %p112 = por %p110, %p111
      %p113 = scmp.ne.s32.totalorder %s101, %s102
      %p114 = scmp.eq.s32.totalorder %s24, 1
      %p115 = por %p113, %p114
      %p117 = scmp.ne.s32.totalorder %s102, %s116
      %p118 = scmp.eq.s32.totalorder %s24, 0
      %p119 = por %p117, %p118
      %s121 = sadd.s32 %s120, 1
      %p124 = scmp.eq.s32.totalorder %s18, 1
      %p125 = scmp.ne.s32.totalorder %s120, %s122
      %p126 = scmp.eq.s32.totalorder %s18, 0
      %p127 = por %p125, %p126
      %p128 = scmp.ne.s32.totalorder %s120, %s122
      %p129 = scmp.eq.s32.totalorder %s23, 1
      %p130 = por %p128, %p129
      %p131 = scmp.ne.s32.totalorder %s122, %s123
      %p132 = scmp.eq.s32.totalorder %s23, 0
      %p133 = por %p131, %p132
      %p134 = scmp.ne.s32.totalorder %s122, %s123
      %p135 = scmp.eq.s32.totalorder %s24, 1
      %p136 = por %p134, %p135
      %p138 = scmp.ne.s32.totalorder %s123, %s137
      %p139 = scmp.eq.s32.totalorder %s24, 0
      %p140 = por %p138, %p139
      %s142 = sadd.s32 %s141, 1
      %p145 = scmp.eq.s32.totalorder %s18, 1
      %p146 = scmp.ne.s32.totalorder %s141, %s143
      %p147 = scmp.eq.s32.totalorder %s18, 0
      %p148 = por %p146, %p147
      %p149 = scmp.ne.s32.totalorder %s141, %s143
      %p150 = scmp.eq.s32.totalorder %s23, 1
      %p151 = por %p149, %p150
      %p152 = scmp.ne.s32.totalorder %s143, %s144
      %p153 = scmp.eq.s32.totalorder %s23, 0
      %p154 = por %p152, %p153
      %p155 = scmp.ne.s32.totalorder %s143, %s144
      %p156 = scmp.eq.s32.totalorder %s24, 1
      %p157 = por %p155, %p156
      %p159 = scmp.ne.s32.totalorder %s144, %s158
      %p160 = scmp.eq.s32.totalorder %s24, 0
      %p161 = por %p159, %p160
      %s163 = sadd.s32 %s162, 1
      %p166 = scmp.eq.s32.totalorder %s18, 1
      %p167 = scmp.ne.s32.totalorder %s162, %s164
      %p168 = scmp.eq.s32.totalorder %s18, 0
      %p169 = por %p167, %p168
      %p170 = scmp.ne.s32.totalorder %s162, %s164
      %p171 = scmp.eq.s32.totalorder %s23, 1
      %p172 = por %p170, %p171
      %p173 = scmp.ne.s32.totalorder %s164, %s165
      %p174 = scmp.eq.s32.totalorder %s23, 0
      %p175 = por %p173, %p174
      %p176 = scmp.ne.s32.totalorder %s164, %s165
      %p177 = scmp.eq.s32.totalorder %s24, 1
      %p178 = por %p176, %p177
      %p180 = scmp.ne.s32.totalorder %s165, %s179
      %p181 = scmp.eq.s32.totalorder %s24, 0
      %p182 = por %p180, %p181
      %s184 = sadd.s32 %s183, 1
      %p187 = scmp.eq.s32.totalorder %s18, 1
      %p188 = scmp.ne.s32.totalorder %s183, %s185
      %p189 = scmp.eq.s32.totalorder %s18, 0
      %p190 = por %p188, %p189
      %p191 = scmp.ne.s32.totalorder %s183, %s185
      %p192 = scmp.eq.s32.totalorder %s23, 1
      %p193 = por %p191, %p192
      %p194 = scmp.ne.s32.totalorder %s185, %s186
      %p195 = scmp.eq.s32.totalorder %s23, 0
      %p196 = por %p194, %p195
      %p197 = scmp.ne.s32.totalorder %s185, %s186
      %p198 = scmp.eq.s32.totalorder %s24, 1
      %p199 = por %p197, %p198
      %p201 = scmp.ne.s32.totalorder %s186, %s200
      %p202 = scmp.eq.s32.totalorder %s24, 0
      %p203 = por %p201, %p202
      %s205 = sadd.s32 %s204, 1
      %p208 = scmp.eq.s32.totalorder %s18, 1
      %p209 = scmp.ne.s32.totalorder %s204, %s206
      %p210 = scmp.eq.s32.totalorder %s18, 0
      %p211 = por %p209, %p210
      %p212 = scmp.ne.s32.totalorder %s204, %s206
      %p213 = scmp.eq.s32.totalorder %s23, 1
      %p214 = por %p212, %p213
      %p215 = scmp.ne.s32.totalorder %s206, %s207
      %p216 = scmp.eq.s32.totalorder %s23, 0
      %p217 = por %p215, %p216
      %p218 = scmp.ne.s32.totalorder %s206, %s207
      %p219 = scmp.eq.s32.totalorder %s24, 1
      %p220 = por %p218, %p219
      %p222 = scmp.ne.s32.totalorder %s207, %s221
      %p223 = scmp.eq.s32.totalorder %s24, 0
      %p224 = por %p222, %p223
      %s225 = ssub.s32 %s18, %s25
      %p226 = scmp.eq.s32.totalorder %s225, 0
      %s228 = sadd.s32 %s227, 1
      %s229 = scalar_select %p226, %s227, %s228
      %p232 = pneg %p226
      %p233 = scmp.eq.s32.totalorder %s18, 1
      %p234 = por %p232, %p233
      %p235 = scmp.ne.s32.totalorder %s227, %s230
      %p236 = scmp.eq.s32.totalorder %s18, 0
      %p237 = por %p235, %p236
      %p238 = scmp.ne.s32.totalorder %s227, %s230
      %p239 = scmp.eq.s32.totalorder %s23, 1
      %p240 = por %p238, %p239
      %p241 = scmp.ne.s32.totalorder %s230, %s231
      %p242 = scmp.eq.s32.totalorder %s23, 0
      %p243 = por %p241, %p242
      %p244 = scmp.ne.s32.totalorder %s230, %s231
      %p245 = scmp.eq.s32.totalorder %s24, 1
      %p246 = por %p244, %p245
      %p248 = scmp.ne.s32.totalorder %s231, %s247
      %p249 = scmp.eq.s32.totalorder %s24, 0
      %p250 = por %p248, %p249
      %p251 = scmp.le.s32.totalorder 1, %s18
      %p252 = scmp.lt.s32.totalorder %s18, 3
      %p253 = pnand %p251, %p252
      %p254 = pneg %p253
      // Predicated region
      $region9: #{tpu_custom_call.1} parent=5 // pred_check
        _
      $region10: #{tpu_custom_call.1} parent=5 // pred_check_branch
        %256 = sbr.rel (%p253) target = $region12
      $region11: #{tpu_custom_call.1} parent=5 // pred_region
        %s257 = ssub.s32 %s18, 1
        // Predicated region
        $region13: #{tpu_custom_call.1} parent=11 // pred_check
          %p258 = pneg %p91
        $region14: #{tpu_custom_call.1} parent=11 // pred_check_branch
          %260 = sbr.rel (%p258) target = $region16
        $region15: #{tpu_custom_call.1} parent=11 // pred_region
          _
        $region16: #{tpu_custom_call.1} parent=11 // pred_fallthru
          _
        // Predicated region
        $region17: #{tpu_custom_call.1} parent=11 // pred_check
          %p261 = pneg %p112
        $region18: #{tpu_custom_call.1} parent=11 // pred_check_branch
          %263 = sbr.rel (%p261) target = $region20
        $region19: #{tpu_custom_call.1} parent=11 // pred_region
          _
        $region20: #{tpu_custom_call.1} parent=11 // pred_fallthru
          _
        // Predicated region
        $region21: #{tpu_custom_call.1} parent=11 // pred_check
          %p264 = pneg %p133
        $region22: #{tpu_custom_call.1} parent=11 // pred_check_branch
          %266 = sbr.rel (%p264) target = $region24
        $region23: #{tpu_custom_call.1} parent=11 // pred_region
          _
        $region24: #{tpu_custom_call.1} parent=11 // pred_fallthru
          _
        // Predicated region
        $region25: #{tpu_custom_call.1} parent=11 // pred_check
          %p267 = pneg %p154
        $region26: #{tpu_custom_call.1} parent=11 // pred_check_branch
          %269 = sbr.rel (%p267) target = $region28
        $region27: #{tpu_custom_call.1} parent=11 // pred_region
          _
        $region28: #{tpu_custom_call.1} parent=11 // pred_fallthru
          _
        // Predicated region
        $region29: #{tpu_custom_call.1} parent=11 // pred_check
          %p270 = pneg %p175
        $region30: #{tpu_custom_call.1} parent=11 // pred_check_branch
          %272 = sbr.rel (%p270) target = $region32
        $region31: #{tpu_custom_call.1} parent=11 // pred_region
          _
        $region32: #{tpu_custom_call.1} parent=11 // pred_fallthru
          _
        // Predicated region
        $region33: #{tpu_custom_call.1} parent=11 // pred_check
          %p273 = pneg %p196
        $region34: #{tpu_custom_call.1} parent=11 // pred_check_branch
          %275 = sbr.rel (%p273) target = $region36
        $region35: #{tpu_custom_call.1} parent=11 // pred_region
          _
        $region36: #{tpu_custom_call.1} parent=11 // pred_fallthru
          _
        // Predicated region
        $region37: #{tpu_custom_call.1} parent=11 // pred_check
          %p276 = pneg %p217
        $region38: #{tpu_custom_call.1} parent=11 // pred_check_branch
          %278 = sbr.rel (%p276) target = $region40
        $region39: #{tpu_custom_call.1} parent=11 // pred_region
          _
        $region40: #{tpu_custom_call.1} parent=11 // pred_fallthru
          _
      $region12: #{tpu_custom_call.1} parent=5 // pred_fallthru
        _
      %p279 = scmp.lt.s32.totalorder %s18, 2
      // Predicated region
      $region41: #{tpu_custom_call.1} parent=5 // pred_check
        %p280 = pneg %p279
      $region42: #{tpu_custom_call.1} parent=5 // pred_check_branch
        %282 = sbr.rel (%p280) target = $region44
      $region43: #{tpu_custom_call.1} parent=5 // pred_region
        // Predicated region
        $region45: #{tpu_custom_call.1} parent=43 // pred_check
          %p283 = pneg %p38
        $region46: #{tpu_custom_call.1} parent=43 // pred_check_branch
          %285 = sbr.rel (%p283) target = $region48
        $region47: #{tpu_custom_call.1} parent=43 // pred_region
          %s286 = sand.u32 %s28, 1
          %s287 = sand.u32 %s28, 1
          %s288 = smul.addr %s287, 1024
          %s289 = scalar_lea.vmem [#allocation2], %s288
          %s290 = smul.u32 8, %s18
          %s291 = smul.addr %s290, 8
          %s292 = scalar_lea.vmem %s0, %s291
          // Predicated region
          $region49: #{tpu_custom_call.1} parent=47 // pred_check
            _
          $region50: #{tpu_custom_call.1} parent=47 // pred_check_branch
            %294 = sbr.rel (0) target = $region52
          $region51: #{tpu_custom_call.1} parent=47 // pred_region
            // Predicated region
            $region53: #{tpu_custom_call.1} parent=51 // pred_check
              _
            $region54: #{tpu_custom_call.1} parent=51 // pred_check_branch
              %296 = sbr.rel (0) target = $region56
            $region55: #{tpu_custom_call.1} parent=51 // pred_region
              // Predicated region
              $region68: #{tpu_custom_call.1} parent=55 // pred_check
                _
              $region69: #{tpu_custom_call.1} parent=55 // pred_check_branch
                %566 = sbr.rel (0) target = $region71
              $region70: #{tpu_custom_call.1} parent=55 // pred_region
                loop: start=0, step=1, limit=1
                $region72: #{tpu_custom_call.1} parent=70 // loop_pre_header
                  _
                $region73: #{tpu_custom_call.1} parent=70 // loop_header
                  %s568 = sphi 0, %s572
                  %p569 = scmp.ge.s32.totalorder %s568, 1
                  %s573 = sphi %s292, %s292
                  %s574 = sphi %s289, %s289
                $region74: #{tpu_custom_call.1} parent=70 // loop_header_branch
                  %571 = sbr.rel (%p569) target = $region78
                $region75: #{tpu_custom_call.1} parent=70 // loop_body
                  %v575 = vld [vmem:[%s573] sm:$0xff]
                  %576 = vst [vmem:[%s574] sm:$0xff] %v575
                  %v577 = vld [vmem:[%s573 + $0x8] sm:$0xff]
                  %578 = vst [vmem:[%s574 + $0x8] sm:$0xff] %v577
                  %v579 = vld [vmem:[%s573 + $0x10] sm:$0xff]
                  %580 = vst [vmem:[%s574 + $0x10] sm:$0xff] %v579
                  %v581 = vld [vmem:[%s573 + $0x18] sm:$0xff]
                  %582 = vst [vmem:[%s574 + $0x18] sm:$0xff] %v581
                  %v583 = vld [vmem:[%s573 + $0x20] sm:$0xff]
                  %584 = vst [vmem:[%s574 + $0x20] sm:$0xff] %v583
                  %v585 = vld [vmem:[%s573 + $0x28] sm:$0xff]
                  %586 = vst [vmem:[%s574 + $0x28] sm:$0xff] %v585
                  %v587 = vld [vmem:[%s573 + $0x30] sm:$0xff]
                  %588 = vst [vmem:[%s574 + $0x30] sm:$0xff] %v587
                  %v589 = vld [vmem:[%s573 + $0x38] sm:$0xff]
                  %590 = vst [vmem:[%s574 + $0x38] sm:$0xff] %v589
                  %v591 = vld [vmem:[%s573 + $0x80] sm:$0xff]
                  %592 = vst [vmem:[%s574 + $0x40] sm:$0xff] %v591
                  %v593 = vld [vmem:[%s573 + $0x88] sm:$0xff]
                  %594 = vst [vmem:[%s574 + $0x48] sm:$0xff] %v593
                  %v595 = vld [vmem:[%s573 + $0x90] sm:$0xff]
                  %596 = vst [vmem:[%s574 + $0x50] sm:$0xff] %v595
                  %v597 = vld [vmem:[%s573 + $0x98] sm:$0xff]
                  %598 = vst [vmem:[%s574 + $0x58] sm:$0xff] %v597
                  %v599 = vld [vmem:[%s573 + $0xa0] sm:$0xff]
                  %600 = vst [vmem:[%s574 + $0x60] sm:$0xff] %v599
                  %v601 = vld [vmem:[%s573 + $0xa8] sm:$0xff]
                  %602 = vst [vmem:[%s574 + $0x68] sm:$0xff] %v601
                  %v603 = vld [vmem:[%s573 + $0xb0] sm:$0xff]
                  %604 = vst [vmem:[%s574 + $0x70] sm:$0xff] %v603
                  %v605 = vld [vmem:[%s573 + $0xb8] sm:$0xff]
                  %606 = vst [vmem:[%s574 + $0x78] sm:$0xff] %v605
                  %v607 = vld [vmem:[%s573 + $0x100] sm:$0xff]
                  %608 = vst [vmem:[%s574 + $0x80] sm:$0xff] %v607
                  %v609 = vld [vmem:[%s573 + $0x108] sm:$0xff]
                  %610 = vst [vmem:[%s574 + $0x88] sm:$0xff] %v609
                  %v611 = vld [vmem:[%s573 + $0x110] sm:$0xff]
                  %612 = vst [vmem:[%s574 + $0x90] sm:$0xff] %v611
                  %v613 = vld [vmem:[%s573 + $0x118] sm:$0xff]
                  %614 = vst [vmem:[%s574 + $0x98] sm:$0xff] %v613
                  %v615 = vld [vmem:[%s573 + $0x120] sm:$0xff]
                  %616 = vst [vmem:[%s574 + $0xa0] sm:$0xff] %v615
                  %v617 = vld [vmem:[%s573 + $0x128] sm:$0xff]
                  %618 = vst [vmem:[%s574 + $0xa8] sm:$0xff] %v617
                  %v619 = vld [vmem:[%s573 + $0x130] sm:$0xff]
                  %620 = vst [vmem:[%s574 + $0xb0] sm:$0xff] %v619
                  %v621 = vld [vmem:[%s573 + $0x138] sm:$0xff]
                  %622 = vst [vmem:[%s574 + $0xb8] sm:$0xff] %v621
                  %v623 = vld [vmem:[%s573 + $0x180] sm:$0xff]
                  %624 = vst [vmem:[%s574 + $0xc0] sm:$0xff] %v623
                  %v625 = vld [vmem:[%s573 + $0x188] sm:$0xff]
                  %626 = vst [vmem:[%s574 + $0xc8] sm:$0xff] %v625
                  %v627 = vld [vmem:[%s573 + $0x190] sm:$0xff]
                  %628 = vst [vmem:[%s574 + $0xd0] sm:$0xff] %v627
                  %v629 = vld [vmem:[%s573 + $0x198] sm:$0xff]
                  %630 = vst [vmem:[%s574 + $0xd8] sm:$0xff] %v629
                  %v631 = vld [vmem:[%s573 + $0x1a0] sm:$0xff]
                  %632 = vst [vmem:[%s574 + $0xe0] sm:$0xff] %v631
                  %v633 = vld [vmem:[%s573 + $0x1a8] sm:$0xff]
                  %634 = vst [vmem:[%s574 + $0xe8] sm:$0xff] %v633
                  %v635 = vld [vmem:[%s573 + $0x1b0] sm:$0xff]
                  %636 = vst [vmem:[%s574 + $0xf0] sm:$0xff] %v635
                  %v637 = vld [vmem:[%s573 + $0x1b8] sm:$0xff]
                  %638 = vst [vmem:[%s574 + $0xf8] sm:$0xff] %v637
                  %v639 = vld [vmem:[%s573 + $0x200] sm:$0xff]
                  %640 = vst [vmem:[%s574 + $0x100] sm:$0xff] %v639
                  %v641 = vld [vmem:[%s573 + $0x208] sm:$0xff]
                  %642 = vst [vmem:[%s574 + $0x108] sm:$0xff] %v641
                  %v643 = vld [vmem:[%s573 + $0x210] sm:$0xff]
                  %644 = vst [vmem:[%s574 + $0x110] sm:$0xff] %v643
                  %v645 = vld [vmem:[%s573 + $0x218] sm:$0xff]
                  %646 = vst [vmem:[%s574 + $0x118] sm:$0xff] %v645
                  %v647 = vld [vmem:[%s573 + $0x220] sm:$0xff]
                  %648 = vst [vmem:[%s574 + $0x120] sm:$0xff] %v647
                  %v649 = vld [vmem:[%s573 + $0x228] sm:$0xff]
                  %650 = vst [vmem:[%s574 + $0x128] sm:$0xff] %v649
                  %v651 = vld [vmem:[%s573 + $0x230] sm:$0xff]
                  %652 = vst [vmem:[%s574 + $0x130] sm:$0xff] %v651
                  %v653 = vld [vmem:[%s573 + $0x238] sm:$0xff]
                  %654 = vst [vmem:[%s574 + $0x138] sm:$0xff] %v653
                  %v655 = vld [vmem:[%s573 + $0x280] sm:$0xff]
                  %656 = vst [vmem:[%s574 + $0x140] sm:$0xff] %v655
                  %v657 = vld [vmem:[%s573 + $0x288] sm:$0xff]
                  %658 = vst [vmem:[%s574 + $0x148] sm:$0xff] %v657
                  %v659 = vld [vmem:[%s573 + $0x290] sm:$0xff]
                  %660 = vst [vmem:[%s574 + $0x150] sm:$0xff] %v659
                  %v661 = vld [vmem:[%s573 + $0x298] sm:$0xff]
                  %662 = vst [vmem:[%s574 + $0x158] sm:$0xff] %v661
                  %v663 = vld [vmem:[%s573 + $0x2a0] sm:$0xff]
                  %664 = vst [vmem:[%s574 + $0x160] sm:$0xff] %v663
                  %v665 = vld [vmem:[%s573 + $0x2a8] sm:$0xff]
                  %666 = vst [vmem:[%s574 + $0x168] sm:$0xff] %v665
                  %v667 = vld [vmem:[%s573 + $0x2b0] sm:$0xff]
                  %668 = vst [vmem:[%s574 + $0x170] sm:$0xff] %v667
                  %v669 = vld [vmem:[%s573 + $0x2b8] sm:$0xff]
                  %670 = vst [vmem:[%s574 + $0x178] sm:$0xff] %v669
                  %v671 = vld [vmem:[%s573 + $0x300] sm:$0xff]
                  %672 = vst [vmem:[%s574 + $0x180] sm:$0xff] %v671
                  %v673 = vld [vmem:[%s573 + $0x308] sm:$0xff]
                  %674 = vst [vmem:[%s574 + $0x188] sm:$0xff] %v673
                  %v675 = vld [vmem:[%s573 + $0x310] sm:$0xff]
                  %676 = vst [vmem:[%s574 + $0x190] sm:$0xff] %v675
                  %v677 = vld [vmem:[%s573 + $0x318] sm:$0xff]
                  %678 = vst [vmem:[%s574 + $0x198] sm:$0xff] %v677
                  %v679 = vld [vmem:[%s573 + $0x320] sm:$0xff]
                  %680 = vst [vmem:[%s574 + $0x1a0] sm:$0xff] %v679
                  %v681 = vld [vmem:[%s573 + $0x328] sm:$0xff]
                  %682 = vst [vmem:[%s574 + $0x1a8] sm:$0xff] %v681
                  %v683 = vld [vmem:[%s573 + $0x330] sm:$0xff]
                  %684 = vst [vmem:[%s574 + $0x1b0] sm:$0xff] %v683
                  %v685 = vld [vmem:[%s573 + $0x338] sm:$0xff]
                  %686 = vst [vmem:[%s574 + $0x1b8] sm:$0xff] %v685
                  %v687 = vld [vmem:[%s573 + $0x380] sm:$0xff]
                  %688 = vst [vmem:[%s574 + $0x1c0] sm:$0xff] %v687
                  %v689 = vld [vmem:[%s573 + $0x388] sm:$0xff]
                  %690 = vst [vmem:[%s574 + $0x1c8] sm:$0xff] %v689
                  %v691 = vld [vmem:[%s573 + $0x390] sm:$0xff]
                  %692 = vst [vmem:[%s574 + $0x1d0] sm:$0xff] %v691
                  %v693 = vld [vmem:[%s573 + $0x398] sm:$0xff]
                  %694 = vst [vmem:[%s574 + $0x1d8] sm:$0xff] %v693
                  %v695 = vld [vmem:[%s573 + $0x3a0] sm:$0xff]
                  %696 = vst [vmem:[%s574 + $0x1e0] sm:$0xff] %v695
                  %v697 = vld [vmem:[%s573 + $0x3a8] sm:$0xff]
                  %698 = vst [vmem:[%s574 + $0x1e8] sm:$0xff] %v697
                  %v699 = vld [vmem:[%s573 + $0x3b0] sm:$0xff]
                  %700 = vst [vmem:[%s574 + $0x1f0] sm:$0xff] %v699
                  %v701 = vld [vmem:[%s573 + $0x3b8] sm:$0xff]
                  %702 = vst [vmem:[%s574 + $0x1f8] sm:$0xff] %v701
                  %v703 = vld [vmem:[%s573 + $0x400] sm:$0xff]
                  %704 = vst [vmem:[%s574 + $0x200] sm:$0xff] %v703
                  %v705 = vld [vmem:[%s573 + $0x408] sm:$0xff]
                  %706 = vst [vmem:[%s574 + $0x208] sm:$0xff] %v705
                  %v707 = vld [vmem:[%s573 + $0x410] sm:$0xff]
                  %708 = vst [vmem:[%s574 + $0x210] sm:$0xff] %v707
                  %v709 = vld [vmem:[%s573 + $0x418] sm:$0xff]
                  %710 = vst [vmem:[%s574 + $0x218] sm:$0xff] %v709
                  %v711 = vld [vmem:[%s573 + $0x420] sm:$0xff]
                  %712 = vst [vmem:[%s574 + $0x220] sm:$0xff] %v711
                  %v713 = vld [vmem:[%s573 + $0x428] sm:$0xff]
                  %714 = vst [vmem:[%s574 + $0x228] sm:$0xff] %v713
                  %v715 = vld [vmem:[%s573 + $0x430] sm:$0xff]
                  %716 = vst [vmem:[%s574 + $0x230] sm:$0xff] %v715
                  %v717 = vld [vmem:[%s573 + $0x438] sm:$0xff]
                  %718 = vst [vmem:[%s574 + $0x238] sm:$0xff] %v717
                  %v719 = vld [vmem:[%s573 + $0x480] sm:$0xff]
                  %720 = vst [vmem:[%s574 + $0x240] sm:$0xff] %v719
                  %v721 = vld [vmem:[%s573 + $0x488] sm:$0xff]
                  %722 = vst [vmem:[%s574 + $0x248] sm:$0xff] %v721
                  %v723 = vld [vmem:[%s573 + $0x490] sm:$0xff]
                  %724 = vst [vmem:[%s574 + $0x250] sm:$0xff] %v723
                  %v725 = vld [vmem:[%s573 + $0x498] sm:$0xff]
                  %726 = vst [vmem:[%s574 + $0x258] sm:$0xff] %v725
                  %v727 = vld [vmem:[%s573 + $0x4a0] sm:$0xff]
                  %728 = vst [vmem:[%s574 + $0x260] sm:$0xff] %v727
                  %v729 = vld [vmem:[%s573 + $0x4a8] sm:$0xff]
                  %730 = vst [vmem:[%s574 + $0x268] sm:$0xff] %v729
                  %v731 = vld [vmem:[%s573 + $0x4b0] sm:$0xff]
                  %732 = vst [vmem:[%s574 + $0x270] sm:$0xff] %v731
                  %v733 = vld [vmem:[%s573 + $0x4b8] sm:$0xff]
                  %734 = vst [vmem:[%s574 + $0x278] sm:$0xff] %v733
                  %v735 = vld [vmem:[%s573 + $0x500] sm:$0xff]
                  %736 = vst [vmem:[%s574 + $0x280] sm:$0xff] %v735
                  %v737 = vld [vmem:[%s573 + $0x508] sm:$0xff]
                  %738 = vst [vmem:[%s574 + $0x288] sm:$0xff] %v737
                  %v739 = vld [vmem:[%s573 + $0x510] sm:$0xff]
                  %740 = vst [vmem:[%s574 + $0x290] sm:$0xff] %v739
                  %v741 = vld [vmem:[%s573 + $0x518] sm:$0xff]
                  %742 = vst [vmem:[%s574 + $0x298] sm:$0xff] %v741
                  %v743 = vld [vmem:[%s573 + $0x520] sm:$0xff]
                  %744 = vst [vmem:[%s574 + $0x2a0] sm:$0xff] %v743
                  %v745 = vld [vmem:[%s573 + $0x528] sm:$0xff]
                  %746 = vst [vmem:[%s574 + $0x2a8] sm:$0xff] %v745
                  %v747 = vld [vmem:[%s573 + $0x530] sm:$0xff]
                  %748 = vst [vmem:[%s574 + $0x2b0] sm:$0xff] %v747
                  %v749 = vld [vmem:[%s573 + $0x538] sm:$0xff]
                  %750 = vst [vmem:[%s574 + $0x2b8] sm:$0xff] %v749
                  %v751 = vld [vmem:[%s573 + $0x580] sm:$0xff]
                  %752 = vst [vmem:[%s574 + $0x2c0] sm:$0xff] %v751
                  %v753 = vld [vmem:[%s573 + $0x588] sm:$0xff]
                  %754 = vst [vmem:[%s574 + $0x2c8] sm:$0xff] %v753
                  %v755 = vld [vmem:[%s573 + $0x590] sm:$0xff]
                  %756 = vst [vmem:[%s574 + $0x2d0] sm:$0xff] %v755
                  %v757 = vld [vmem:[%s573 + $0x598] sm:$0xff]
                  %758 = vst [vmem:[%s574 + $0x2d8] sm:$0xff] %v757
                  %v759 = vld [vmem:[%s573 + $0x5a0] sm:$0xff]
                  %760 = vst [vmem:[%s574 + $0x2e0] sm:$0xff] %v759
                  %v761 = vld [vmem:[%s573 + $0x5a8] sm:$0xff]
                  %762 = vst [vmem:[%s574 + $0x2e8] sm:$0xff] %v761
                  %v763 = vld [vmem:[%s573 + $0x5b0] sm:$0xff]
                  %764 = vst [vmem:[%s574 + $0x2f0] sm:$0xff] %v763
                  %v765 = vld [vmem:[%s573 + $0x5b8] sm:$0xff]
                  %766 = vst [vmem:[%s574 + $0x2f8] sm:$0xff] %v765
                  %v767 = vld [vmem:[%s573 + $0x600] sm:$0xff]
                  %768 = vst [vmem:[%s574 + $0x300] sm:$0xff] %v767
                  %v769 = vld [vmem:[%s573 + $0x608] sm:$0xff]
                  %770 = vst [vmem:[%s574 + $0x308] sm:$0xff] %v769
                  %v771 = vld [vmem:[%s573 + $0x610] sm:$0xff]
                  %772 = vst [vmem:[%s574 + $0x310] sm:$0xff] %v771
                  %v773 = vld [vmem:[%s573 + $0x618] sm:$0xff]
                  %774 = vst [vmem:[%s574 + $0x318] sm:$0xff] %v773
                  %v775 = vld [vmem:[%s573 + $0x620] sm:$0xff]
                  %776 = vst [vmem:[%s574 + $0x320] sm:$0xff] %v775
                  %v777 = vld [vmem:[%s573 + $0x628] sm:$0xff]
                  %778 = vst [vmem:[%s574 + $0x328] sm:$0xff] %v777
                  %v779 = vld [vmem:[%s573 + $0x630] sm:$0xff]
                  %780 = vst [vmem:[%s574 + $0x330] sm:$0xff] %v779
                  %v781 = vld [vmem:[%s573 + $0x638] sm:$0xff]
                  %782 = vst [vmem:[%s574 + $0x338] sm:$0xff] %v781
                  %v783 = vld [vmem:[%s573 + $0x680] sm:$0xff]
                  %784 = vst [vmem:[%s574 + $0x340] sm:$0xff] %v783
                  %v785 = vld [vmem:[%s573 + $0x688] sm:$0xff]
                  %786 = vst [vmem:[%s574 + $0x348] sm:$0xff] %v785
                  %v787 = vld [vmem:[%s573 + $0x690] sm:$0xff]
                  %788 = vst [vmem:[%s574 + $0x350] sm:$0xff] %v787
                  %v789 = vld [vmem:[%s573 + $0x698] sm:$0xff]
                  %790 = vst [vmem:[%s574 + $0x358] sm:$0xff] %v789
                  %v791 = vld [vmem:[%s573 + $0x6a0] sm:$0xff]
                  %792 = vst [vmem:[%s574 + $0x360] sm:$0xff] %v791
                  %v793 = vld [vmem:[%s573 + $0x6a8] sm:$0xff]
                  %794 = vst [vmem:[%s574 + $0x368] sm:$0xff] %v793
                  %v795 = vld [vmem:[%s573 + $0x6b0] sm:$0xff]
                  %796 = vst [vmem:[%s574 + $0x370] sm:$0xff] %v795
                  %v797 = vld [vmem:[%s573 + $0x6b8] sm:$0xff]
                  %798 = vst [vmem:[%s574 + $0x378] sm:$0xff] %v797
                  %v799 = vld [vmem:[%s573 + $0x700] sm:$0xff]
                  %800 = vst [vmem:[%s574 + $0x380] sm:$0xff] %v799
                  %v801 = vld [vmem:[%s573 + $0x708] sm:$0xff]
                  %802 = vst [vmem:[%s574 + $0x388] sm:$0xff] %v801
                  %v803 = vld [vmem:[%s573 + $0x710] sm:$0xff]
                  %804 = vst [vmem:[%s574 + $0x390] sm:$0xff] %v803
                  %v805 = vld [vmem:[%s573 + $0x718] sm:$0xff]
                  %806 = vst [vmem:[%s574 + $0x398] sm:$0xff] %v805
                  %v807 = vld [vmem:[%s573 + $0x720] sm:$0xff]
                  %808 = vst [vmem:[%s574 + $0x3a0] sm:$0xff] %v807
                  %v809 = vld [vmem:[%s573 + $0x728] sm:$0xff]
                  %810 = vst [vmem:[%s574 + $0x3a8] sm:$0xff] %v809
                  %v811 = vld [vmem:[%s573 + $0x730] sm:$0xff]
                  %812 = vst [vmem:[%s574 + $0x3b0] sm:$0xff] %v811
                  %v813 = vld [vmem:[%s573 + $0x738] sm:$0xff]
                  %814 = vst [vmem:[%s574 + $0x3b8] sm:$0xff] %v813
                  %v815 = vld [vmem:[%s573 + $0x780] sm:$0xff]
                  %816 = vst [vmem:[%s574 + $0x3c0] sm:$0xff] %v815
                  %v817 = vld [vmem:[%s573 + $0x788] sm:$0xff]
                  %818 = vst [vmem:[%s574 + $0x3c8] sm:$0xff] %v817
                  %v819 = vld [vmem:[%s573 + $0x790] sm:$0xff]
                  %820 = vst [vmem:[%s574 + $0x3d0] sm:$0xff] %v819
                  %v821 = vld [vmem:[%s573 + $0x798] sm:$0xff]
                  %822 = vst [vmem:[%s574 + $0x3d8] sm:$0xff] %v821
                  %v823 = vld [vmem:[%s573 + $0x7a0] sm:$0xff]
                  %824 = vst [vmem:[%s574 + $0x3e0] sm:$0xff] %v823
                  %v825 = vld [vmem:[%s573 + $0x7a8] sm:$0xff]
                  %826 = vst [vmem:[%s574 + $0x3e8] sm:$0xff] %v825
                  %v827 = vld [vmem:[%s573 + $0x7b0] sm:$0xff]
                  %828 = vst [vmem:[%s574 + $0x3f0] sm:$0xff] %v827
                  %v829 = vld [vmem:[%s573 + $0x7b8] sm:$0xff]
                  %830 = vst [vmem:[%s574 + $0x3f8] sm:$0xff] %v829
                $region76: #{tpu_custom_call.1} parent=70 // loop_footer
                  %s572 = sadd.s32 1, %s568
                $region77: #{tpu_custom_call.1} parent=70 // loop_footer_branch
                  %567 = sbr.rel target = $region73
                $region78: #{tpu_custom_call.1} parent=70 // loop_exit
                  _
              $region71: #{tpu_custom_call.1} parent=55 // pred_fallthru
                _
              // Predicated region
              $region79: #{tpu_custom_call.1} parent=55 // pred_check
                _
              $region80: #{tpu_custom_call.1} parent=55 // pred_check_branch
                %832 = sbr.rel target = $region82
              $region81: #{tpu_custom_call.1} parent=55 // pred_region
                _
              $region82: #{tpu_custom_call.1} parent=55 // pred_fallthru
                _
            $region56: #{tpu_custom_call.1} parent=51 // pred_fallthru
              _
            // Predicated region
            $region57: #{tpu_custom_call.1} parent=51 // pred_check
              _
            $region58: #{tpu_custom_call.1} parent=51 // pred_check_branch
              %298 = sbr.rel target = $region60
            $region59: #{tpu_custom_call.1} parent=51 // pred_region
              %s300 = ssub.s32 256, 1
              loop: start=0, step=1, limit=1
              $region61: #{tpu_custom_call.1} parent=59 // loop_pre_header
                _
              $region62: #{tpu_custom_call.1} parent=59 // loop_header
                %s302 = sphi 0, %s306
                %p303 = scmp.ge.s32.totalorder %s302, 1
                %s307 = sphi %s292, %s292
                %s308 = sphi %s289, %s289
              $region63: #{tpu_custom_call.1} parent=59 // loop_header_branch
                %305 = sbr.rel (%p303) target = $region67
              $region64: #{tpu_custom_call.1} parent=59 // loop_body
                %v309 = vld [vmem:[%s307] sm:%s300]
                %310 = vst [vmem:[%s308] sm:%s300] %v309
                %v311 = vld [vmem:[%s307 + $0x8] sm:%s300]
                %312 = vst [vmem:[%s308 + $0x8] sm:%s300] %v311
                %v313 = vld [vmem:[%s307 + $0x10] sm:%s300]
                %314 = vst [vmem:[%s308 + $0x10] sm:%s300] %v313
                %v315 = vld [vmem:[%s307 + $0x18] sm:%s300]
                %316 = vst [vmem:[%s308 + $0x18] sm:%s300] %v315
                %v317 = vld [vmem:[%s307 + $0x20] sm:%s300]
                %318 = vst [vmem:[%s308 + $0x20] sm:%s300] %v317
                %v319 = vld [vmem:[%s307 + $0x28] sm:%s300]
                %320 = vst [vmem:[%s308 + $0x28] sm:%s300] %v319
                %v321 = vld [vmem:[%s307 + $0x30] sm:%s300]
                %322 = vst [vmem:[%s308 + $0x30] sm:%s300] %v321
                %v323 = vld [vmem:[%s307 + $0x38] sm:%s300]
                %324 = vst [vmem:[%s308 + $0x38] sm:%s300] %v323
                %v325 = vld [vmem:[%s307 + $0x80] sm:%s300]
                %326 = vst [vmem:[%s308 + $0x40] sm:%s300] %v325
                %v327 = vld [vmem:[%s307 + $0x88] sm:%s300]
                %328 = vst [vmem:[%s308 + $0x48] sm:%s300] %v327
                %v329 = vld [vmem:[%s307 + $0x90] sm:%s300]
                %330 = vst [vmem:[%s308 + $0x50] sm:%s300] %v329
                %v331 = vld [vmem:[%s307 + $0x98] sm:%s300]
                %332 = vst [vmem:[%s308 + $0x58] sm:%s300] %v331
                %v333 = vld [vmem:[%s307 + $0xa0] sm:%s300]
                %334 = vst [vmem:[%s308 + $0x60] sm:%s300] %v333
                %v335 = vld [vmem:[%s307 + $0xa8] sm:%s300]
                %336 = vst [vmem:[%s308 + $0x68] sm:%s300] %v335
                %v337 = vld [vmem:[%s307 + $0xb0] sm:%s300]
                %338 = vst [vmem:[%s308 + $0x70] sm:%s300] %v337
                %v339 = vld [vmem:[%s307 + $0xb8] sm:%s300]
                %340 = vst [vmem:[%s308 + $0x78] sm:%s300] %v339
                %v341 = vld [vmem:[%s307 + $0x100] sm:%s300]
                %342 = vst [vmem:[%s308 + $0x80] sm:%s300] %v341
                %v343 = vld [vmem:[%s307 + $0x108] sm:%s300]
                %344 = vst [vmem:[%s308 + $0x88] sm:%s300] %v343
                %v345 = vld [vmem:[%s307 + $0x110] sm:%s300]
                %346 = vst [vmem:[%s308 + $0x90] sm:%s300] %v345
                %v347 = vld [vmem:[%s307 + $0x118] sm:%s300]
                %348 = vst [vmem:[%s308 + $0x98] sm:%s300] %v347
                %v349 = vld [vmem:[%s307 + $0x120] sm:%s300]
                %350 = vst [vmem:[%s308 + $0xa0] sm:%s300] %v349
                %v351 = vld [vmem:[%s307 + $0x128] sm:%s300]
                %352 = vst [vmem:[%s308 + $0xa8] sm:%s300] %v351
                %v353 = vld [vmem:[%s307 + $0x130] sm:%s300]
                %354 = vst [vmem:[%s308 + $0xb0] sm:%s300] %v353
                %v355 = vld [vmem:[%s307 + $0x138] sm:%s300]
                %356 = vst [vmem:[%s308 + $0xb8] sm:%s300] %v355
                %v357 = vld [vmem:[%s307 + $0x180] sm:%s300]
                %358 = vst [vmem:[%s308 + $0xc0] sm:%s300] %v357
                %v359 = vld [vmem:[%s307 + $0x188] sm:%s300]
                %360 = vst [vmem:[%s308 + $0xc8] sm:%s300] %v359
                %v361 = vld [vmem:[%s307 + $0x190] sm:%s300]
                %362 = vst [vmem:[%s308 + $0xd0] sm:%s300] %v361
                %v363 = vld [vmem:[%s307 + $0x198] sm:%s300]
                %364 = vst [vmem:[%s308 + $0xd8] sm:%s300] %v363
                %v365 = vld [vmem:[%s307 + $0x1a0] sm:%s300]
                %366 = vst [vmem:[%s308 + $0xe0] sm:%s300] %v365
                %v367 = vld [vmem:[%s307 + $0x1a8] sm:%s300]
                %368 = vst [vmem:[%s308 + $0xe8] sm:%s300] %v367
                %v369 = vld [vmem:[%s307 + $0x1b0] sm:%s300]
                %370 = vst [vmem:[%s308 + $0xf0] sm:%s300] %v369
                %v371 = vld [vmem:[%s307 + $0x1b8] sm:%s300]
                %372 = vst [vmem:[%s308 + $0xf8] sm:%s300] %v371
                %v373 = vld [vmem:[%s307 + $0x200] sm:%s300]
                %374 = vst [vmem:[%s308 + $0x100] sm:%s300] %v373
                %v375 = vld [vmem:[%s307 + $0x208] sm:%s300]
                %376 = vst [vmem:[%s308 + $0x108] sm:%s300] %v375
                %v377 = vld [vmem:[%s307 + $0x210] sm:%s300]
                %378 = vst [vmem:[%s308 + $0x110] sm:%s300] %v377
                %v379 = vld [vmem:[%s307 + $0x218] sm:%s300]
                %380 = vst [vmem:[%s308 + $0x118] sm:%s300] %v379
                %v381 = vld [vmem:[%s307 + $0x220] sm:%s300]
                %382 = vst [vmem:[%s308 + $0x120] sm:%s300] %v381
                %v383 = vld [vmem:[%s307 + $0x228] sm:%s300]
                %384 = vst [vmem:[%s308 + $0x128] sm:%s300] %v383
                %v385 = vld [vmem:[%s307 + $0x230] sm:%s300]
                %386 = vst [vmem:[%s308 + $0x130] sm:%s300] %v385
                %v387 = vld [vmem:[%s307 + $0x238] sm:%s300]
                %388 = vst [vmem:[%s308 + $0x138] sm:%s300] %v387
                %v389 = vld [vmem:[%s307 + $0x280] sm:%s300]
                %390 = vst [vmem:[%s308 + $0x140] sm:%s300] %v389
                %v391 = vld [vmem:[%s307 + $0x288] sm:%s300]
                %392 = vst [vmem:[%s308 + $0x148] sm:%s300] %v391
                %v393 = vld [vmem:[%s307 + $0x290] sm:%s300]
                %394 = vst [vmem:[%s308 + $0x150] sm:%s300] %v393
                %v395 = vld [vmem:[%s307 + $0x298] sm:%s300]
                %396 = vst [vmem:[%s308 + $0x158] sm:%s300] %v395
                %v397 = vld [vmem:[%s307 + $0x2a0] sm:%s300]
                %398 = vst [vmem:[%s308 + $0x160] sm:%s300] %v397
                %v399 = vld [vmem:[%s307 + $0x2a8] sm:%s300]
                %400 = vst [vmem:[%s308 + $0x168] sm:%s300] %v399
                %v401 = vld [vmem:[%s307 + $0x2b0] sm:%s300]
                %402 = vst [vmem:[%s308 + $0x170] sm:%s300] %v401
                %v403 = vld [vmem:[%s307 + $0x2b8] sm:%s300]
                %404 = vst [vmem:[%s308 + $0x178] sm:%s300] %v403
                %v405 = vld [vmem:[%s307 + $0x300] sm:%s300]
                %406 = vst [vmem:[%s308 + $0x180] sm:%s300] %v405
                %v407 = vld [vmem:[%s307 + $0x308] sm:%s300]
                %408 = vst [vmem:[%s308 + $0x188] sm:%s300] %v407
                %v409 = vld [vmem:[%s307 + $0x310] sm:%s300]
                %410 = vst [vmem:[%s308 + $0x190] sm:%s300] %v409
                %v411 = vld [vmem:[%s307 + $0x318] sm:%s300]
                %412 = vst [vmem:[%s308 + $0x198] sm:%s300] %v411
                %v413 = vld [vmem:[%s307 + $0x320] sm:%s300]
                %414 = vst [vmem:[%s308 + $0x1a0] sm:%s300] %v413
                %v415 = vld [vmem:[%s307 + $0x328] sm:%s300]
                %416 = vst [vmem:[%s308 + $0x1a8] sm:%s300] %v415
                %v417 = vld [vmem:[%s307 + $0x330] sm:%s300]
                %418 = vst [vmem:[%s308 + $0x1b0] sm:%s300] %v417
                %v419 = vld [vmem:[%s307 + $0x338] sm:%s300]
                %420 = vst [vmem:[%s308 + $0x1b8] sm:%s300] %v419
                %v421 = vld [vmem:[%s307 + $0x380] sm:%s300]
                %422 = vst [vmem:[%s308 + $0x1c0] sm:%s300] %v421
                %v423 = vld [vmem:[%s307 + $0x388] sm:%s300]
                %424 = vst [vmem:[%s308 + $0x1c8] sm:%s300] %v423
                %v425 = vld [vmem:[%s307 + $0x390] sm:%s300]
                %426 = vst [vmem:[%s308 + $0x1d0] sm:%s300] %v425
                %v427 = vld [vmem:[%s307 + $0x398] sm:%s300]
                %428 = vst [vmem:[%s308 + $0x1d8] sm:%s300] %v427
                %v429 = vld [vmem:[%s307 + $0x3a0] sm:%s300]
                %430 = vst [vmem:[%s308 + $0x1e0] sm:%s300] %v429
                %v431 = vld [vmem:[%s307 + $0x3a8] sm:%s300]
                %432 = vst [vmem:[%s308 + $0x1e8] sm:%s300] %v431
                %v433 = vld [vmem:[%s307 + $0x3b0] sm:%s300]
                %434 = vst [vmem:[%s308 + $0x1f0] sm:%s300] %v433
                %v435 = vld [vmem:[%s307 + $0x3b8] sm:%s300]
                %436 = vst [vmem:[%s308 + $0x1f8] sm:%s300] %v435
                %v437 = vld [vmem:[%s307 + $0x400] sm:%s300]
                %438 = vst [vmem:[%s308 + $0x200] sm:%s300] %v437
                %v439 = vld [vmem:[%s307 + $0x408] sm:%s300]
                %440 = vst [vmem:[%s308 + $0x208] sm:%s300] %v439
                %v441 = vld [vmem:[%s307 + $0x410] sm:%s300]
                %442 = vst [vmem:[%s308 + $0x210] sm:%s300] %v441
                %v443 = vld [vmem:[%s307 + $0x418] sm:%s300]
                %444 = vst [vmem:[%s308 + $0x218] sm:%s300] %v443
                %v445 = vld [vmem:[%s307 + $0x420] sm:%s300]
                %446 = vst [vmem:[%s308 + $0x220] sm:%s300] %v445
                %v447 = vld [vmem:[%s307 + $0x428] sm:%s300]
                %448 = vst [vmem:[%s308 + $0x228] sm:%s300] %v447
                %v449 = vld [vmem:[%s307 + $0x430] sm:%s300]
                %450 = vst [vmem:[%s308 + $0x230] sm:%s300] %v449
                %v451 = vld [vmem:[%s307 + $0x438] sm:%s300]
                %452 = vst [vmem:[%s308 + $0x238] sm:%s300] %v451
                %v453 = vld [vmem:[%s307 + $0x480] sm:%s300]
                %454 = vst [vmem:[%s308 + $0x240] sm:%s300] %v453
                %v455 = vld [vmem:[%s307 + $0x488] sm:%s300]
                %456 = vst [vmem:[%s308 + $0x248] sm:%s300] %v455
                %v457 = vld [vmem:[%s307 + $0x490] sm:%s300]
                %458 = vst [vmem:[%s308 + $0x250] sm:%s300] %v457
                %v459 = vld [vmem:[%s307 + $0x498] sm:%s300]
                %460 = vst [vmem:[%s308 + $0x258] sm:%s300] %v459
                %v461 = vld [vmem:[%s307 + $0x4a0] sm:%s300]
                %462 = vst [vmem:[%s308 + $0x260] sm:%s300] %v461
                %v463 = vld [vmem:[%s307 + $0x4a8] sm:%s300]
                %464 = vst [vmem:[%s308 + $0x268] sm:%s300] %v463
                %v465 = vld [vmem:[%s307 + $0x4b0] sm:%s300]
                %466 = vst [vmem:[%s308 + $0x270] sm:%s300] %v465
                %v467 = vld [vmem:[%s307 + $0x4b8] sm:%s300]
                %468 = vst [vmem:[%s308 + $0x278] sm:%s300] %v467
                %v469 = vld [vmem:[%s307 + $0x500] sm:%s300]
                %470 = vst [vmem:[%s308 + $0x280] sm:%s300] %v469
                %v471 = vld [vmem:[%s307 + $0x508] sm:%s300]
                %472 = vst [vmem:[%s308 + $0x288] sm:%s300] %v471
                %v473 = vld [vmem:[%s307 + $0x510] sm:%s300]
                %474 = vst [vmem:[%s308 + $0x290] sm:%s300] %v473
                %v475 = vld [vmem:[%s307 + $0x518] sm:%s300]
                %476 = vst [vmem:[%s308 + $0x298] sm:%s300] %v475
                %v477 = vld [vmem:[%s307 + $0x520] sm:%s300]
                %478 = vst [vmem:[%s308 + $0x2a0] sm:%s300] %v477
                %v479 = vld [vmem:[%s307 + $0x528] sm:%s300]
                %480 = vst [vmem:[%s308 + $0x2a8] sm:%s300] %v479
                %v481 = vld [vmem:[%s307 + $0x530] sm:%s300]
                %482 = vst [vmem:[%s308 + $0x2b0] sm:%s300] %v481
                %v483 = vld [vmem:[%s307 + $0x538] sm:%s300]
                %484 = vst [vmem:[%s308 + $0x2b8] sm:%s300] %v483
                %v485 = vld [vmem:[%s307 + $0x580] sm:%s300]
                %486 = vst [vmem:[%s308 + $0x2c0] sm:%s300] %v485
                %v487 = vld [vmem:[%s307 + $0x588] sm:%s300]
                %488 = vst [vmem:[%s308 + $0x2c8] sm:%s300] %v487
                %v489 = vld [vmem:[%s307 + $0x590] sm:%s300]
                %490 = vst [vmem:[%s308 + $0x2d0] sm:%s300] %v489
                %v491 = vld [vmem:[%s307 + $0x598] sm:%s300]
                %492 = vst [vmem:[%s308 + $0x2d8] sm:%s300] %v491
                %v493 = vld [vmem:[%s307 + $0x5a0] sm:%s300]
                %494 = vst [vmem:[%s308 + $0x2e0] sm:%s300] %v493
                %v495 = vld [vmem:[%s307 + $0x5a8] sm:%s300]
                %496 = vst [vmem:[%s308 + $0x2e8] sm:%s300] %v495
                %v497 = vld [vmem:[%s307 + $0x5b0] sm:%s300]
                %498 = vst [vmem:[%s308 + $0x2f0] sm:%s300] %v497
                %v499 = vld [vmem:[%s307 + $0x5b8] sm:%s300]
                %500 = vst [vmem:[%s308 + $0x2f8] sm:%s300] %v499
                %v501 = vld [vmem:[%s307 + $0x600] sm:%s300]
                %502 = vst [vmem:[%s308 + $0x300] sm:%s300] %v501
                %v503 = vld [vmem:[%s307 + $0x608] sm:%s300]
                %504 = vst [vmem:[%s308 + $0x308] sm:%s300] %v503
                %v505 = vld [vmem:[%s307 + $0x610] sm:%s300]
                %506 = vst [vmem:[%s308 + $0x310] sm:%s300] %v505
                %v507 = vld [vmem:[%s307 + $0x618] sm:%s300]
                %508 = vst [vmem:[%s308 + $0x318] sm:%s300] %v507
                %v509 = vld [vmem:[%s307 + $0x620] sm:%s300]
                %510 = vst [vmem:[%s308 + $0x320] sm:%s300] %v509
                %v511 = vld [vmem:[%s307 + $0x628] sm:%s300]
                %512 = vst [vmem:[%s308 + $0x328] sm:%s300] %v511
                %v513 = vld [vmem:[%s307 + $0x630] sm:%s300]
                %514 = vst [vmem:[%s308 + $0x330] sm:%s300] %v513
                %v515 = vld [vmem:[%s307 + $0x638] sm:%s300]
                %516 = vst [vmem:[%s308 + $0x338] sm:%s300] %v515
                %v517 = vld [vmem:[%s307 + $0x680] sm:%s300]
                %518 = vst [vmem:[%s308 + $0x340] sm:%s300] %v517
                %v519 = vld [vmem:[%s307 + $0x688] sm:%s300]
                %520 = vst [vmem:[%s308 + $0x348] sm:%s300] %v519
                %v521 = vld [vmem:[%s307 + $0x690] sm:%s300]
                %522 = vst [vmem:[%s308 + $0x350] sm:%s300] %v521
                %v523 = vld [vmem:[%s307 + $0x698] sm:%s300]
                %524 = vst [vmem:[%s308 + $0x358] sm:%s300] %v523
                %v525 = vld [vmem:[%s307 + $0x6a0] sm:%s300]
                %526 = vst [vmem:[%s308 + $0x360] sm:%s300] %v525
                %v527 = vld [vmem:[%s307 + $0x6a8] sm:%s300]
                %528 = vst [vmem:[%s308 + $0x368] sm:%s300] %v527
                %v529 = vld [vmem:[%s307 + $0x6b0] sm:%s300]
                %530 = vst [vmem:[%s308 + $0x370] sm:%s300] %v529
                %v531 = vld [vmem:[%s307 + $0x6b8] sm:%s300]
                %532 = vst [vmem:[%s308 + $0x378] sm:%s300] %v531
                %v533 = vld [vmem:[%s307 + $0x700] sm:%s300]
                %534 = vst [vmem:[%s308 + $0x380] sm:%s300] %v533
                %v535 = vld [vmem:[%s307 + $0x708] sm:%s300]
                %536 = vst [vmem:[%s308 + $0x388] sm:%s300] %v535
                %v537 = vld [vmem:[%s307 + $0x710] sm:%s300]
                %538 = vst [vmem:[%s308 + $0x390] sm:%s300] %v537
                %v539 = vld [vmem:[%s307 + $0x718] sm:%s300]
                %540 = vst [vmem:[%s308 + $0x398] sm:%s300] %v539
                %v541 = vld [vmem:[%s307 + $0x720] sm:%s300]
                %542 = vst [vmem:[%s308 + $0x3a0] sm:%s300] %v541
                %v543 = vld [vmem:[%s307 + $0x728] sm:%s300]
                %544 = vst [vmem:[%s308 + $0x3a8] sm:%s300] %v543
                %v545 = vld [vmem:[%s307 + $0x730] sm:%s300]
                %546 = vst [vmem:[%s308 + $0x3b0] sm:%s300] %v545
                %v547 = vld [vmem:[%s307 + $0x738] sm:%s300]
                %548 = vst [vmem:[%s308 + $0x3b8] sm:%s300] %v547
                %v549 = vld [vmem:[%s307 + $0x780] sm:%s300]
                %550 = vst [vmem:[%s308 + $0x3c0] sm:%s300] %v549
                %v551 = vld [vmem:[%s307 + $0x788] sm:%s300]
                %552 = vst [vmem:[%s308 + $0x3c8] sm:%s300] %v551
                %v553 = vld [vmem:[%s307 + $0x790] sm:%s300]
                %554 = vst [vmem:[%s308 + $0x3d0] sm:%s300] %v553
                %v555 = vld [vmem:[%s307 + $0x798] sm:%s300]
                %556 = vst [vmem:[%s308 + $0x3d8] sm:%s300] %v555
                %v557 = vld [vmem:[%s307 + $0x7a0] sm:%s300]
                %558 = vst [vmem:[%s308 + $0x3e0] sm:%s300] %v557
                %v559 = vld [vmem:[%s307 + $0x7a8] sm:%s300]
                %560 = vst [vmem:[%s308 + $0x3e8] sm:%s300] %v559
                %v561 = vld [vmem:[%s307 + $0x7b0] sm:%s300]
                %562 = vst [vmem:[%s308 + $0x3f0] sm:%s300] %v561
                %v563 = vld [vmem:[%s307 + $0x7b8] sm:%s300]
                %564 = vst [vmem:[%s308 + $0x3f8] sm:%s300] %v563
              $region65: #{tpu_custom_call.1} parent=59 // loop_footer
                %s306 = sadd.s32 1, %s302
              $region66: #{tpu_custom_call.1} parent=59 // loop_footer_branch
                %301 = sbr.rel target = $region62
              $region67: #{tpu_custom_call.1} parent=59 // loop_exit
                _
            $region60: #{tpu_custom_call.1} parent=51 // pred_fallthru
              _
          $region52: #{tpu_custom_call.1} parent=47 // pred_fallthru
            _
          %833 = vnop
        $region48: #{tpu_custom_call.1} parent=43 // pred_fallthru
          _
        // Predicated region
        $region83: #{tpu_custom_call.1} parent=43 // pred_check
          %p834 = pneg %p64
        $region84: #{tpu_custom_call.1} parent=43 // pred_check_branch
          %836 = sbr.rel (%p834) target = $region86
        $region85: #{tpu_custom_call.1} parent=43 // pred_region
          %s837 = smul.u32 8, %s18
          %p838 = scmp.lt.s32.totalorder %s837, 15
          %s839 = scalar_select %p838, %s837, 15
          %s840 = smul.addr %s839, 8
          %s841 = scalar_lea.vmem %s1, %s840
          %s842 = smul.u32 8, %s18
        $region86: #{tpu_custom_call.1} parent=43 // pred_fallthru
          _
      $region44: #{tpu_custom_call.1} parent=5 // pred_fallthru
        _
      %p843 = scmp.le.s32.totalorder 1, %s18
      %p844 = scmp.lt.s32.totalorder %s18, 3
      %p845 = pnand %p843, %p844
      %p846 = pneg %p845
      // Predicated region
      $region87: #{tpu_custom_call.1} parent=5 // pred_check
        _
      $region88: #{tpu_custom_call.1} parent=5 // pred_check_branch
        %848 = sbr.rel (%p845) target = $region90
      $region89: #{tpu_custom_call.1} parent=5 // pred_region
        %s849 = ssub.s32 %s18, 1
        %s850 = sand.u32 %s31, 1
        %s851 = sand.u32 %s31, 1
        %s852 = smul.addr %s851, 1024
        %s853 = scalar_lea.vmem [#allocation2], %s852
        // Predicated region
        $region91: #{tpu_custom_call.1} parent=89 // pred_check
          %p854 = pneg %p44
        $region92: #{tpu_custom_call.1} parent=89 // pred_check_branch
          %856 = sbr.rel (%p854) target = $region94
        $region93: #{tpu_custom_call.1} parent=89 // pred_region
          _
        $region94: #{tpu_custom_call.1} parent=89 // pred_fallthru
          _
        %s857 = sand.u32 %s31, 1
        %s858 = sand.u32 %s31, 1
        %s859 = smul.addr %s858, 1024
        %s860 = scalar_lea.vmem [#allocation2], %s859
        %p861 = pneg %p44
        %p862 = pneg %p41
        %s863 = smul.u32 8, %s23
        %p864 = scmp.lt.s32.totalorder %s863, 15
        %s865 = scalar_select %p864, %s863, 15
        %s866 = smul.addr %s865, 8
        %s867 = scalar_lea.vmem %s1, %s866
        %p868 = pneg %p70
        %p869 = pneg %p67
        %p870 = pneg %p91
        %p871 = pneg %p88
        %p872 = pneg %p112
        %p873 = pneg %p109
        %p874 = pneg %p133
        %p875 = pneg %p130
        %p876 = pneg %p154
        %p877 = pneg %p151
        %p878 = pneg %p175
        %p879 = pneg %p172
        %p880 = pneg %p196
        %p881 = pneg %p193
        %p882 = pneg %p217
        %p883 = pneg %p214
        %p884 = pneg %p243
        %p885 = pneg %p240
        %s886 = sand.u32 %s230, 1
        %s887 = scalar_lea.sflag [#allocation4], %s886
        %s888 = sand.u32 %s230, 1
        %s889 = smul.addr %s888, 16
        %s890 = scalar_lea.vmem [#allocation3], %s889
        %s891 = smul.u32 8, %s23
        %s892 = smul.u32 8, %s23
        %p893 = scmp.lt.s32.totalorder %s892, 15
        %s894 = scalar_select %p893, %s892, 15
        %s895 = smul.addr %s894, 8
        %s896 = scalar_lea.vmem %s1, %s895
        %s897 = smul.u32 8, %s23
        %s898 = smul.u32 2, %s23
        %v899 = vld [vmem:[%s853] sm:$0xff]
        %v900 = vld [vmem:[%s853 + $0x8] sm:$0xff]
        %v901 = vld [vmem:[%s853 + $0x10] sm:$0xff]
        %v902 = vld [vmem:[%s853 + $0x18] sm:$0xff]
        %v903 = vld [vmem:[%s853 + $0x20] sm:$0xff]
        %v904 = vld [vmem:[%s853 + $0x28] sm:$0xff]
        %v905 = vld [vmem:[%s853 + $0x30] sm:$0xff]
        %v906 = vld [vmem:[%s853 + $0x38] sm:$0xff]
        %v907 = vld [vmem:[%s853 + $0x40] sm:$0xff]
        %v908 = vld [vmem:[%s853 + $0x48] sm:$0xff]
        %v909 = vld [vmem:[%s853 + $0x50] sm:$0xff]
        %v910 = vld [vmem:[%s853 + $0x58] sm:$0xff]
        %v911 = vld [vmem:[%s853 + $0x60] sm:$0xff]
        %v912 = vld [vmem:[%s853 + $0x68] sm:$0xff]
        %v913 = vld [vmem:[%s853 + $0x70] sm:$0xff]
        %v914 = vld [vmem:[%s853 + $0x78] sm:$0xff]
        %v915 = vld [vmem:[%s853 + $0x80] sm:$0xff]
        %v916 = vld [vmem:[%s853 + $0x88] sm:$0xff]
        %v917 = vld [vmem:[%s853 + $0x90] sm:$0xff]
        %v918 = vld [vmem:[%s853 + $0x98] sm:$0xff]
        %v919 = vld [vmem:[%s853 + $0xa0] sm:$0xff]
        %v920 = vld [vmem:[%s853 + $0xa8] sm:$0xff]
        %v921 = vld [vmem:[%s853 + $0xb0] sm:$0xff]
        %v922 = vld [vmem:[%s853 + $0xb8] sm:$0xff]
        %v923 = vld [vmem:[%s853 + $0xc0] sm:$0xff]
        %v924 = vld [vmem:[%s853 + $0xc8] sm:$0xff]
        %v925 = vld [vmem:[%s853 + $0xd0] sm:$0xff]
        %v926 = vld [vmem:[%s853 + $0xd8] sm:$0xff]
        %v927 = vld [vmem:[%s853 + $0xe0] sm:$0xff]
        %v928 = vld [vmem:[%s853 + $0xe8] sm:$0xff]
        %v929 = vld [vmem:[%s853 + $0xf0] sm:$0xff]
        %v930 = vld [vmem:[%s853 + $0xf8] sm:$0xff]
        %v931 = vld [vmem:[%s853 + $0x100] sm:$0xff]
        %v932 = vld [vmem:[%s853 + $0x108] sm:$0xff]
        %v933 = vld [vmem:[%s853 + $0x110] sm:$0xff]
        %v934 = vld [vmem:[%s853 + $0x118] sm:$0xff]
        %v935 = vld [vmem:[%s853 + $0x120] sm:$0xff]
        %v936 = vld [vmem:[%s853 + $0x128] sm:$0xff]
        %v937 = vld [vmem:[%s853 + $0x130] sm:$0xff]
        %v938 = vld [vmem:[%s853 + $0x138] sm:$0xff]
        %v939 = vld [vmem:[%s853 + $0x140] sm:$0xff]
        %v940 = vld [vmem:[%s853 + $0x148] sm:$0xff]
        %v941 = vld [vmem:[%s853 + $0x150] sm:$0xff]
        %v942 = vld [vmem:[%s853 + $0x158] sm:$0xff]
        %v943 = vld [vmem:[%s853 + $0x160] sm:$0xff]
        %v944 = vld [vmem:[%s853 + $0x168] sm:$0xff]
        %v945 = vld [vmem:[%s853 + $0x170] sm:$0xff]
        %v946 = vld [vmem:[%s853 + $0x178] sm:$0xff]
        %v947 = vld [vmem:[%s853 + $0x180] sm:$0xff]
        %v948 = vld [vmem:[%s853 + $0x188] sm:$0xff]
        %v949 = vld [vmem:[%s853 + $0x190] sm:$0xff]
        %v950 = vld [vmem:[%s853 + $0x198] sm:$0xff]
        %v951 = vld [vmem:[%s853 + $0x1a0] sm:$0xff]
        %v952 = vld [vmem:[%s853 + $0x1a8] sm:$0xff]
        %v953 = vld [vmem:[%s853 + $0x1b0] sm:$0xff]
        %v954 = vld [vmem:[%s853 + $0x1b8] sm:$0xff]
        %v955 = vld [vmem:[%s853 + $0x1c0] sm:$0xff]
        %v956 = vld [vmem:[%s853 + $0x1c8] sm:$0xff]
        %v957 = vld [vmem:[%s853 + $0x1d0] sm:$0xff]
        %v958 = vld [vmem:[%s853 + $0x1d8] sm:$0xff]
        %v959 = vld [vmem:[%s853 + $0x1e0] sm:$0xff]
        %v960 = vld [vmem:[%s853 + $0x1e8] sm:$0xff]
        %v961 = vld [vmem:[%s853 + $0x1f0] sm:$0xff]
        %v962 = vld [vmem:[%s853 + $0x1f8] sm:$0xff]
        %v963 = vld [vmem:[%s853 + $0x200] sm:$0xff]
        %v964 = vld [vmem:[%s853 + $0x208] sm:$0xff]
        %v965 = vld [vmem:[%s853 + $0x210] sm:$0xff]
        %v966 = vld [vmem:[%s853 + $0x218] sm:$0xff]
        %v967 = vld [vmem:[%s853 + $0x220] sm:$0xff]
        %v968 = vld [vmem:[%s853 + $0x228] sm:$0xff]
        %v969 = vld [vmem:[%s853 + $0x230] sm:$0xff]
        %v970 = vld [vmem:[%s853 + $0x238] sm:$0xff]
        %v971 = vld [vmem:[%s853 + $0x240] sm:$0xff]
        %v972 = vld [vmem:[%s853 + $0x248] sm:$0xff]
        %v973 = vld [vmem:[%s853 + $0x250] sm:$0xff]
        %v974 = vld [vmem:[%s853 + $0x258] sm:$0xff]
        %v975 = vld [vmem:[%s853 + $0x260] sm:$0xff]
        %v976 = vld [vmem:[%s853 + $0x268] sm:$0xff]
        %v977 = vld [vmem:[%s853 + $0x270] sm:$0xff]
        %v978 = vld [vmem:[%s853 + $0x278] sm:$0xff]
        %v979 = vld [vmem:[%s853 + $0x280] sm:$0xff]
        %v980 = vld [vmem:[%s853 + $0x288] sm:$0xff]
        %v981 = vld [vmem:[%s853 + $0x290] sm:$0xff]
        %v982 = vld [vmem:[%s853 + $0x298] sm:$0xff]
        %v983 = vld [vmem:[%s853 + $0x2a0] sm:$0xff]
        %v984 = vld [vmem:[%s853 + $0x2a8] sm:$0xff]
        %v985 = vld [vmem:[%s853 + $0x2b0] sm:$0xff]
        %v986 = vld [vmem:[%s853 + $0x2b8] sm:$0xff]
        %v987 = vld [vmem:[%s853 + $0x2c0] sm:$0xff]
        %v988 = vld [vmem:[%s853 + $0x2c8] sm:$0xff]
        %v989 = vld [vmem:[%s853 + $0x2d0] sm:$0xff]
        %v990 = vld [vmem:[%s853 + $0x2d8] sm:$0xff]
        %v991 = vld [vmem:[%s853 + $0x2e0] sm:$0xff]
        %v992 = vld [vmem:[%s853 + $0x2e8] sm:$0xff]
        %v993 = vld [vmem:[%s853 + $0x2f0] sm:$0xff]
        %v994 = vld [vmem:[%s853 + $0x2f8] sm:$0xff]
        %v995 = vld [vmem:[%s853 + $0x300] sm:$0xff]
        %v996 = vld [vmem:[%s853 + $0x308] sm:$0xff]
        %v997 = vld [vmem:[%s853 + $0x310] sm:$0xff]
        %v998 = vld [vmem:[%s853 + $0x318] sm:$0xff]
        %v999 = vld [vmem:[%s853 + $0x320] sm:$0xff]
        %v1000 = vld [vmem:[%s853 + $0x328] sm:$0xff]
        %v1001 = vld [vmem:[%s853 + $0x330] sm:$0xff]
        %v1002 = vld [vmem:[%s853 + $0x338] sm:$0xff]
        %v1003 = vld [vmem:[%s853 + $0x340] sm:$0xff]
        %v1004 = vld [vmem:[%s853 + $0x348] sm:$0xff]
        %v1005 = vld [vmem:[%s853 + $0x350] sm:$0xff]
        %v1006 = vld [vmem:[%s853 + $0x358] sm:$0xff]
        %v1007 = vld [vmem:[%s853 + $0x360] sm:$0xff]
        %v1008 = vld [vmem:[%s853 + $0x368] sm:$0xff]
        %v1009 = vld [vmem:[%s853 + $0x370] sm:$0xff]
        %v1010 = vld [vmem:[%s853 + $0x378] sm:$0xff]
        %v1011 = vld [vmem:[%s853 + $0x380] sm:$0xff]
        %v1012 = vld [vmem:[%s853 + $0x388] sm:$0xff]
        %v1013 = vld [vmem:[%s853 + $0x390] sm:$0xff]
        %v1014 = vld [vmem:[%s853 + $0x398] sm:$0xff]
        %v1015 = vld [vmem:[%s853 + $0x3a0] sm:$0xff]
        %v1016 = vld [vmem:[%s853 + $0x3a8] sm:$0xff]
        %v1017 = vld [vmem:[%s853 + $0x3b0] sm:$0xff]
        %v1018 = vld [vmem:[%s853 + $0x3b8] sm:$0xff]
        %v1019 = vld [vmem:[%s853 + $0x3c0] sm:$0xff]
        %v1020 = vld [vmem:[%s853 + $0x3c8] sm:$0xff]
        %v1021 = vld [vmem:[%s853 + $0x3d0] sm:$0xff]
        %v1022 = vld [vmem:[%s853 + $0x3d8] sm:$0xff]
        %v1023 = vld [vmem:[%s853 + $0x3e0] sm:$0xff]
        %v1024 = vld [vmem:[%s853 + $0x3e8] sm:$0xff]
        %v1025 = vld [vmem:[%s853 + $0x3f0] sm:$0xff]
        %v1026 = vld [vmem:[%s853 + $0x3f8] sm:$0xff]
        %v1027 = vld [vmem:[%s3] sm:$0x1]
        %v1028 = vld [vmem:[%s2] sm:$0x1]
        %1030 = vset.pattern.permute.xlu0 0
        %1031 = vperm.xlu0 %1030, %v899
        %v1032 = vpop.permute.xlu0 %1031
        %1035 = vset.pattern.permute.xlu0 0
        %1036 = vperm.xlu0 %1035, %v900
        %v1037 = vpop.permute.xlu0 %1036
        %1040 = vset.pattern.permute.xlu0 0
        %1041 = vperm.xlu0 %1040, %v901
        %v1042 = vpop.permute.xlu0 %1041
        %1045 = vset.pattern.permute.xlu0 0
        %1046 = vperm.xlu0 %1045, %v902
        %v1047 = vpop.permute.xlu0 %1046
        %1050 = vset.pattern.permute.xlu0 0
        %1051 = vperm.xlu0 %1050, %v903
        %v1052 = vpop.permute.xlu0 %1051
        %1055 = vset.pattern.permute.xlu0 0
        %1056 = vperm.xlu0 %1055, %v904
        %v1057 = vpop.permute.xlu0 %1056
        %1060 = vset.pattern.permute.xlu0 0
        %1061 = vperm.xlu0 %1060, %v905
        %v1062 = vpop.permute.xlu0 %1061
        %1065 = vset.pattern.permute.xlu0 0
        %1066 = vperm.xlu0 %1065, %v906
        %v1067 = vpop.permute.xlu0 %1066
        %1070 = vset.pattern.permute.xlu0 0
        %1071 = vperm.xlu0 %1070, %v907
        %v1072 = vpop.permute.xlu0 %1071
        %1075 = vset.pattern.permute.xlu0 0
        %1076 = vperm.xlu0 %1075, %v908
        %v1077 = vpop.permute.xlu0 %1076
        %1080 = vset.pattern.permute.xlu0 0
        %1081 = vperm.xlu0 %1080, %v909
        %v1082 = vpop.permute.xlu0 %1081
        %1085 = vset.pattern.permute.xlu0 0
        %1086 = vperm.xlu0 %1085, %v910
        %v1087 = vpop.permute.xlu0 %1086
        %1090 = vset.pattern.permute.xlu0 0
        %1091 = vperm.xlu0 %1090, %v911
        %v1092 = vpop.permute.xlu0 %1091
        %1095 = vset.pattern.permute.xlu0 0
        %1096 = vperm.xlu0 %1095, %v912
        %v1097 = vpop.permute.xlu0 %1096
        %1100 = vset.pattern.permute.xlu0 0
        %1101 = vperm.xlu0 %1100, %v913
        %v1102 = vpop.permute.xlu0 %1101
        %1105 = vset.pattern.permute.xlu0 0
        %1106 = vperm.xlu0 %1105, %v914
        %v1107 = vpop.permute.xlu0 %1106
        %1110 = vset.pattern.permute.xlu0 0
        %1111 = vperm.xlu0 %1110, %v915
        %v1112 = vpop.permute.xlu0 %1111
        %1115 = vset.pattern.permute.xlu0 0
        %1116 = vperm.xlu0 %1115, %v916
        %v1117 = vpop.permute.xlu0 %1116
        %1120 = vset.pattern.permute.xlu0 0
        %1121 = vperm.xlu0 %1120, %v917
        %v1122 = vpop.permute.xlu0 %1121
        %1125 = vset.pattern.permute.xlu0 0
        %1126 = vperm.xlu0 %1125, %v918
        %v1127 = vpop.permute.xlu0 %1126
        %1130 = vset.pattern.permute.xlu0 0
        %1131 = vperm.xlu0 %1130, %v919
        %v1132 = vpop.permute.xlu0 %1131
        %1135 = vset.pattern.permute.xlu0 0
        %1136 = vperm.xlu0 %1135, %v920
        %v1137 = vpop.permute.xlu0 %1136
        %1140 = vset.pattern.permute.xlu0 0
        %1141 = vperm.xlu0 %1140, %v921
        %v1142 = vpop.permute.xlu0 %1141
        %1145 = vset.pattern.permute.xlu0 0
        %1146 = vperm.xlu0 %1145, %v922
        %v1147 = vpop.permute.xlu0 %1146
        %1150 = vset.pattern.permute.xlu0 0
        %1151 = vperm.xlu0 %1150, %v923
        %v1152 = vpop.permute.xlu0 %1151
        %1155 = vset.pattern.permute.xlu0 0
        %1156 = vperm.xlu0 %1155, %v924
        %v1157 = vpop.permute.xlu0 %1156
        %1160 = vset.pattern.permute.xlu0 0
        %1161 = vperm.xlu0 %1160, %v925
        %v1162 = vpop.permute.xlu0 %1161
        %1165 = vset.pattern.permute.xlu0 0
        %1166 = vperm.xlu0 %1165, %v926
        %v1167 = vpop.permute.xlu0 %1166
        %1170 = vset.pattern.permute.xlu0 0
        %1171 = vperm.xlu0 %1170, %v927
        %v1172 = vpop.permute.xlu0 %1171
        %1175 = vset.pattern.permute.xlu0 0
        %1176 = vperm.xlu0 %1175, %v928
        %v1177 = vpop.permute.xlu0 %1176
        %1180 = vset.pattern.permute.xlu0 0
        %1181 = vperm.xlu0 %1180, %v929
        %v1182 = vpop.permute.xlu0 %1181
        %1185 = vset.pattern.permute.xlu0 0
        %1186 = vperm.xlu0 %1185, %v930
        %v1187 = vpop.permute.xlu0 %1186
        %1190 = vset.pattern.permute.xlu0 0
        %1191 = vperm.xlu0 %1190, %v931
        %v1192 = vpop.permute.xlu0 %1191
        %1195 = vset.pattern.permute.xlu0 0
        %1196 = vperm.xlu0 %1195, %v932
        %v1197 = vpop.permute.xlu0 %1196
        %1200 = vset.pattern.permute.xlu0 0
        %1201 = vperm.xlu0 %1200, %v933
        %v1202 = vpop.permute.xlu0 %1201
        %1205 = vset.pattern.permute.xlu0 0
        %1206 = vperm.xlu0 %1205, %v934
        %v1207 = vpop.permute.xlu0 %1206
        %1210 = vset.pattern.permute.xlu0 0
        %1211 = vperm.xlu0 %1210, %v935
        %v1212 = vpop.permute.xlu0 %1211
        %1215 = vset.pattern.permute.xlu0 0
        %1216 = vperm.xlu0 %1215, %v936
        %v1217 = vpop.permute.xlu0 %1216
        %1220 = vset.pattern.permute.xlu0 0
        %1221 = vperm.xlu0 %1220, %v937
        %v1222 = vpop.permute.xlu0 %1221
        %1225 = vset.pattern.permute.xlu0 0
        %1226 = vperm.xlu0 %1225, %v938
        %v1227 = vpop.permute.xlu0 %1226
        %1230 = vset.pattern.permute.xlu0 0
        %1231 = vperm.xlu0 %1230, %v939
        %v1232 = vpop.permute.xlu0 %1231
        %1235 = vset.pattern.permute.xlu0 0
        %1236 = vperm.xlu0 %1235, %v940
        %v1237 = vpop.permute.xlu0 %1236
        %1240 = vset.pattern.permute.xlu0 0
        %1241 = vperm.xlu0 %1240, %v941
        %v1242 = vpop.permute.xlu0 %1241
        %1245 = vset.pattern.permute.xlu0 0
        %1246 = vperm.xlu0 %1245, %v942
        %v1247 = vpop.permute.xlu0 %1246
        %1250 = vset.pattern.permute.xlu0 0
        %1251 = vperm.xlu0 %1250, %v943
        %v1252 = vpop.permute.xlu0 %1251
        %1255 = vset.pattern.permute.xlu0 0
        %1256 = vperm.xlu0 %1255, %v944
        %v1257 = vpop.permute.xlu0 %1256
        %1260 = vset.pattern.permute.xlu0 0
        %1261 = vperm.xlu0 %1260, %v945
        %v1262 = vpop.permute.xlu0 %1261
        %1265 = vset.pattern.permute.xlu0 0
        %1266 = vperm.xlu0 %1265, %v946
        %v1267 = vpop.permute.xlu0 %1266
        %1270 = vset.pattern.permute.xlu0 0
        %1271 = vperm.xlu0 %1270, %v947
        %v1272 = vpop.permute.xlu0 %1271
        %1275 = vset.pattern.permute.xlu0 0
        %1276 = vperm.xlu0 %1275, %v948
        %v1277 = vpop.permute.xlu0 %1276
        %1280 = vset.pattern.permute.xlu0 0
        %1281 = vperm.xlu0 %1280, %v949
        %v1282 = vpop.permute.xlu0 %1281
        %1285 = vset.pattern.permute.xlu0 0
        %1286 = vperm.xlu0 %1285, %v950
        %v1287 = vpop.permute.xlu0 %1286
        %1290 = vset.pattern.permute.xlu0 0
        %1291 = vperm.xlu0 %1290, %v951
        %v1292 = vpop.permute.xlu0 %1291
        %1295 = vset.pattern.permute.xlu0 0
        %1296 = vperm.xlu0 %1295, %v952
        %v1297 = vpop.permute.xlu0 %1296
        %1300 = vset.pattern.permute.xlu0 0
        %1301 = vperm.xlu0 %1300, %v953
        %v1302 = vpop.permute.xlu0 %1301
        %1305 = vset.pattern.permute.xlu0 0
        %1306 = vperm.xlu0 %1305, %v954
        %v1307 = vpop.permute.xlu0 %1306
        %1310 = vset.pattern.permute.xlu0 0
        %1311 = vperm.xlu0 %1310, %v955
        %v1312 = vpop.permute.xlu0 %1311
        %1315 = vset.pattern.permute.xlu0 0
        %1316 = vperm.xlu0 %1315, %v956
        %v1317 = vpop.permute.xlu0 %1316
        %1320 = vset.pattern.permute.xlu0 0
        %1321 = vperm.xlu0 %1320, %v957
        %v1322 = vpop.permute.xlu0 %1321
        %1325 = vset.pattern.permute.xlu0 0
        %1326 = vperm.xlu0 %1325, %v958
        %v1327 = vpop.permute.xlu0 %1326
        %1330 = vset.pattern.permute.xlu0 0
        %1331 = vperm.xlu0 %1330, %v959
        %v1332 = vpop.permute.xlu0 %1331
        %1335 = vset.pattern.permute.xlu0 0
        %1336 = vperm.xlu0 %1335, %v960
        %v1337 = vpop.permute.xlu0 %1336
        %1340 = vset.pattern.permute.xlu0 0
        %1341 = vperm.xlu0 %1340, %v961
        %v1342 = vpop.permute.xlu0 %1341
        %1345 = vset.pattern.permute.xlu0 0
        %1346 = vperm.xlu0 %1345, %v962
        %v1347 = vpop.permute.xlu0 %1346
        %1350 = vset.pattern.permute.xlu0 0
        %1351 = vperm.xlu0 %1350, %v963
        %v1352 = vpop.permute.xlu0 %1351
        %1355 = vset.pattern.permute.xlu0 0
        %1356 = vperm.xlu0 %1355, %v964
        %v1357 = vpop.permute.xlu0 %1356
        %1360 = vset.pattern.permute.xlu0 0
        %1361 = vperm.xlu0 %1360, %v965
        %v1362 = vpop.permute.xlu0 %1361
        %1365 = vset.pattern.permute.xlu0 0
        %1366 = vperm.xlu0 %1365, %v966
        %v1367 = vpop.permute.xlu0 %1366
        %1370 = vset.pattern.permute.xlu0 0
        %1371 = vperm.xlu0 %1370, %v967
        %v1372 = vpop.permute.xlu0 %1371
        %1375 = vset.pattern.permute.xlu0 0
        %1376 = vperm.xlu0 %1375, %v968
        %v1377 = vpop.permute.xlu0 %1376
        %1380 = vset.pattern.permute.xlu0 0
        %1381 = vperm.xlu0 %1380, %v969
        %v1382 = vpop.permute.xlu0 %1381
        %1385 = vset.pattern.permute.xlu0 0
        %1386 = vperm.xlu0 %1385, %v970
        %v1387 = vpop.permute.xlu0 %1386
        %1390 = vset.pattern.permute.xlu0 0
        %1391 = vperm.xlu0 %1390, %v971
        %v1392 = vpop.permute.xlu0 %1391
        %1395 = vset.pattern.permute.xlu0 0
        %1396 = vperm.xlu0 %1395, %v972
        %v1397 = vpop.permute.xlu0 %1396
        %1400 = vset.pattern.permute.xlu0 0
        %1401 = vperm.xlu0 %1400, %v973
        %v1402 = vpop.permute.xlu0 %1401
        %1405 = vset.pattern.permute.xlu0 0
        %1406 = vperm.xlu0 %1405, %v974
        %v1407 = vpop.permute.xlu0 %1406
        %1410 = vset.pattern.permute.xlu0 0
        %1411 = vperm.xlu0 %1410, %v975
        %v1412 = vpop.permute.xlu0 %1411
        %1415 = vset.pattern.permute.xlu0 0
        %1416 = vperm.xlu0 %1415, %v976
        %v1417 = vpop.permute.xlu0 %1416
        %1420 = vset.pattern.permute.xlu0 0
        %1421 = vperm.xlu0 %1420, %v977
        %v1422 = vpop.permute.xlu0 %1421
        %1425 = vset.pattern.permute.xlu0 0
        %1426 = vperm.xlu0 %1425, %v978
        %v1427 = vpop.permute.xlu0 %1426
        %1430 = vset.pattern.permute.xlu0 0
        %1431 = vperm.xlu0 %1430, %v979
        %v1432 = vpop.permute.xlu0 %1431
        %1435 = vset.pattern.permute.xlu0 0
        %1436 = vperm.xlu0 %1435, %v980
        %v1437 = vpop.permute.xlu0 %1436
        %1440 = vset.pattern.permute.xlu0 0
        %1441 = vperm.xlu0 %1440, %v981
        %v1442 = vpop.permute.xlu0 %1441
        %1445 = vset.pattern.permute.xlu0 0
        %1446 = vperm.xlu0 %1445, %v982
        %v1447 = vpop.permute.xlu0 %1446
        %1450 = vset.pattern.permute.xlu0 0
        %1451 = vperm.xlu0 %1450, %v983
        %v1452 = vpop.permute.xlu0 %1451
        %1455 = vset.pattern.permute.xlu0 0
        %1456 = vperm.xlu0 %1455, %v984
        %v1457 = vpop.permute.xlu0 %1456
        %1460 = vset.pattern.permute.xlu0 0
        %1461 = vperm.xlu0 %1460, %v985
        %v1462 = vpop.permute.xlu0 %1461
        %1465 = vset.pattern.permute.xlu0 0
        %1466 = vperm.xlu0 %1465, %v986
        %v1467 = vpop.permute.xlu0 %1466
        %1470 = vset.pattern.permute.xlu0 0
        %1471 = vperm.xlu0 %1470, %v987
        %v1472 = vpop.permute.xlu0 %1471
        %1475 = vset.pattern.permute.xlu0 0
        %1476 = vperm.xlu0 %1475, %v988
        %v1477 = vpop.permute.xlu0 %1476
        %1480 = vset.pattern.permute.xlu0 0
        %1481 = vperm.xlu0 %1480, %v989
        %v1482 = vpop.permute.xlu0 %1481
        %1485 = vset.pattern.permute.xlu0 0
        %1486 = vperm.xlu0 %1485, %v990
        %v1487 = vpop.permute.xlu0 %1486
        %1490 = vset.pattern.permute.xlu0 0
        %1491 = vperm.xlu0 %1490, %v991
        %v1492 = vpop.permute.xlu0 %1491
        %1495 = vset.pattern.permute.xlu0 0
        %1496 = vperm.xlu0 %1495, %v992
        %v1497 = vpop.permute.xlu0 %1496
        %1500 = vset.pattern.permute.xlu0 0
        %1501 = vperm.xlu0 %1500, %v993
        %v1502 = vpop.permute.xlu0 %1501
        %1505 = vset.pattern.permute.xlu0 0
        %1506 = vperm.xlu0 %1505, %v994
        %v1507 = vpop.permute.xlu0 %1506
        %v1510 = vperm.slane %v1028, 0
        %v1512 = vmul.f32 %v1032, %v1510
        %v1513 = vmul.f32 %v1037, %v1510
        %v1514 = vmul.f32 %v1042, %v1510
        %v1515 = vmul.f32 %v1047, %v1510
        %v1516 = vmul.f32 %v1052, %v1510
        %v1517 = vmul.f32 %v1057, %v1510
        %v1518 = vmul.f32 %v1062, %v1510
        %v1519 = vmul.f32 %v1067, %v1510
        %v1520 = vmul.f32 %v1072, %v1510
        %v1521 = vmul.f32 %v1077, %v1510
        %v1522 = vmul.f32 %v1082, %v1510
        %v1523 = vmul.f32 %v1087, %v1510
        %v1524 = vmul.f32 %v1092, %v1510
        %v1525 = vmul.f32 %v1097, %v1510
        %v1526 = vmul.f32 %v1102, %v1510
        %v1527 = vmul.f32 %v1107, %v1510
        %v1528 = vmul.f32 %v1112, %v1510
        %v1529 = vmul.f32 %v1117, %v1510
        %v1530 = vmul.f32 %v1122, %v1510
        %v1531 = vmul.f32 %v1127, %v1510
        %v1532 = vmul.f32 %v1132, %v1510
        %v1533 = vmul.f32 %v1137, %v1510
        %v1534 = vmul.f32 %v1142, %v1510
        %v1535 = vmul.f32 %v1147, %v1510
        %v1536 = vmul.f32 %v1152, %v1510
        %v1537 = vmul.f32 %v1157, %v1510
        %v1538 = vmul.f32 %v1162, %v1510
        %v1539 = vmul.f32 %v1167, %v1510
        %v1540 = vmul.f32 %v1172, %v1510
        %v1541 = vmul.f32 %v1177, %v1510
        %v1542 = vmul.f32 %v1182, %v1510
        %v1543 = vmul.f32 %v1187, %v1510
        %v1544 = vmul.f32 %v1192, %v1510
        %v1545 = vmul.f32 %v1197, %v1510
        %v1546 = vmul.f32 %v1202, %v1510
        %v1547 = vmul.f32 %v1207, %v1510
        %v1548 = vmul.f32 %v1212, %v1510
        %v1549 = vmul.f32 %v1217, %v1510
        %v1550 = vmul.f32 %v1222, %v1510
        %v1551 = vmul.f32 %v1227, %v1510
        %v1552 = vmul.f32 %v1232, %v1510
        %v1553 = vmul.f32 %v1237, %v1510
        %v1554 = vmul.f32 %v1242, %v1510
        %v1555 = vmul.f32 %v1247, %v1510
        %v1556 = vmul.f32 %v1252, %v1510
        %v1557 = vmul.f32 %v1257, %v1510
        %v1558 = vmul.f32 %v1262, %v1510
        %v1559 = vmul.f32 %v1267, %v1510
        %v1560 = vmul.f32 %v1272, %v1510
        %v1561 = vmul.f32 %v1277, %v1510
        %v1562 = vmul.f32 %v1282, %v1510
        %v1563 = vmul.f32 %v1287, %v1510
        %v1564 = vmul.f32 %v1292, %v1510
        %v1565 = vmul.f32 %v1297, %v1510
        %v1566 = vmul.f32 %v1302, %v1510
        %v1567 = vmul.f32 %v1307, %v1510
        %v1568 = vmul.f32 %v1312, %v1510
        %v1569 = vmul.f32 %v1317, %v1510
        %v1570 = vmul.f32 %v1322, %v1510
        %v1571 = vmul.f32 %v1327, %v1510
        %v1572 = vmul.f32 %v1332, %v1510
        %v1573 = vmul.f32 %v1337, %v1510
        %v1574 = vmul.f32 %v1342, %v1510
        %v1575 = vmul.f32 %v1347, %v1510
        %v1576 = vmul.f32 %v1352, %v1510
        %v1577 = vmul.f32 %v1357, %v1510
        %v1578 = vmul.f32 %v1362, %v1510
        %v1579 = vmul.f32 %v1367, %v1510
        %v1580 = vmul.f32 %v1372, %v1510
        %v1581 = vmul.f32 %v1377, %v1510
        %v1582 = vmul.f32 %v1382, %v1510
        %v1583 = vmul.f32 %v1387, %v1510
        %v1584 = vmul.f32 %v1392, %v1510
        %v1585 = vmul.f32 %v1397, %v1510
        %v1586 = vmul.f32 %v1402, %v1510
        %v1587 = vmul.f32 %v1407, %v1510
        %v1588 = vmul.f32 %v1412, %v1510
        %v1589 = vmul.f32 %v1417, %v1510
        %v1590 = vmul.f32 %v1422, %v1510
        %v1591 = vmul.f32 %v1427, %v1510
        %v1592 = vmul.f32 %v1432, %v1510
        %v1593 = vmul.f32 %v1437, %v1510
        %v1594 = vmul.f32 %v1442, %v1510
        %v1595 = vmul.f32 %v1447, %v1510
        %v1596 = vmul.f32 %v1452, %v1510
        %v1597 = vmul.f32 %v1457, %v1510
        %v1598 = vmul.f32 %v1462, %v1510
        %v1599 = vmul.f32 %v1467, %v1510
        %v1600 = vmul.f32 %v1472, %v1510
        %v1601 = vmul.f32 %v1477, %v1510
        %v1602 = vmul.f32 %v1482, %v1510
        %v1603 = vmul.f32 %v1487, %v1510
        %v1604 = vmul.f32 %v1492, %v1510
        %v1605 = vmul.f32 %v1497, %v1510
        %v1606 = vmul.f32 %v1502, %v1510
        %v1607 = vmul.f32 %v1507, %v1510
        %s1608 = scalar_lea.vmem %s2, 1
        %v1609 = vld [vmem:[%s1608] sm:$0x1]
        %1611 = vset.pattern.permute.xlu0 0
        %1612 = vperm.xlu0 %1611, %v995
        %v1613 = vpop.permute.xlu0 %1612
        %1616 = vset.pattern.permute.xlu0 0
        %1617 = vperm.xlu0 %1616, %v996
        %v1618 = vpop.permute.xlu0 %1617
        %1621 = vset.pattern.permute.xlu0 0
        %1622 = vperm.xlu0 %1621, %v997
        %v1623 = vpop.permute.xlu0 %1622
        %1626 = vset.pattern.permute.xlu0 0
        %1627 = vperm.xlu0 %1626, %v998
        %v1628 = vpop.permute.xlu0 %1627
        %1631 = vset.pattern.permute.xlu0 0
        %1632 = vperm.xlu0 %1631, %v999
        %v1633 = vpop.permute.xlu0 %1632
        %1636 = vset.pattern.permute.xlu0 0
        %1637 = vperm.xlu0 %1636, %v1000
        %v1638 = vpop.permute.xlu0 %1637
        %1641 = vset.pattern.permute.xlu0 0
        %1642 = vperm.xlu0 %1641, %v1001
        %v1643 = vpop.permute.xlu0 %1642
        %1646 = vset.pattern.permute.xlu0 0
        %1647 = vperm.xlu0 %1646, %v1002
        %v1648 = vpop.permute.xlu0 %1647
        %v1651 = vperm.slane %v1609, 0
        %v1653 = vmul.f32 %v1072, %v1651
        %v1654 = vmul.f32 %v1077, %v1651
        %v1655 = vmul.f32 %v1082, %v1651
        %v1656 = vmul.f32 %v1087, %v1651
        %v1657 = vmul.f32 %v1092, %v1651
        %v1658 = vmul.f32 %v1097, %v1651
        %v1659 = vmul.f32 %v1102, %v1651
        %v1660 = vmul.f32 %v1107, %v1651
        %v1661 = vmul.f32 %v1112, %v1651
        %v1662 = vmul.f32 %v1117, %v1651
        %v1663 = vmul.f32 %v1122, %v1651
        %v1664 = vmul.f32 %v1127, %v1651
        %v1665 = vmul.f32 %v1132, %v1651
        %v1666 = vmul.f32 %v1137, %v1651
        %v1667 = vmul.f32 %v1142, %v1651
        %v1668 = vmul.f32 %v1147, %v1651
        %v1669 = vmul.f32 %v1152, %v1651
        %v1670 = vmul.f32 %v1157, %v1651
        %v1671 = vmul.f32 %v1162, %v1651
        %v1672 = vmul.f32 %v1167, %v1651
        %v1673 = vmul.f32 %v1172, %v1651
        %v1674 = vmul.f32 %v1177, %v1651
        %v1675 = vmul.f32 %v1182, %v1651
        %v1676 = vmul.f32 %v1187, %v1651
        %v1677 = vmul.f32 %v1192, %v1651
        %v1678 = vmul.f32 %v1197, %v1651
        %v1679 = vmul.f32 %v1202, %v1651
        %v1680 = vmul.f32 %v1207, %v1651
        %v1681 = vmul.f32 %v1212, %v1651
        %v1682 = vmul.f32 %v1217, %v1651
        %v1683 = vmul.f32 %v1222, %v1651
        %v1684 = vmul.f32 %v1227, %v1651
        %v1685 = vmul.f32 %v1232, %v1651
        %v1686 = vmul.f32 %v1237, %v1651
        %v1687 = vmul.f32 %v1242, %v1651
        %v1688 = vmul.f32 %v1247, %v1651
        %v1689 = vmul.f32 %v1252, %v1651
        %v1690 = vmul.f32 %v1257, %v1651
        %v1691 = vmul.f32 %v1262, %v1651
        %v1692 = vmul.f32 %v1267, %v1651
        %v1693 = vmul.f32 %v1272, %v1651
        %v1694 = vmul.f32 %v1277, %v1651
        %v1695 = vmul.f32 %v1282, %v1651
        %v1696 = vmul.f32 %v1287, %v1651
        %v1697 = vmul.f32 %v1292, %v1651
        %v1698 = vmul.f32 %v1297, %v1651
        %v1699 = vmul.f32 %v1302, %v1651
        %v1700 = vmul.f32 %v1307, %v1651
        %v1701 = vmul.f32 %v1312, %v1651
        %v1702 = vmul.f32 %v1317, %v1651
        %v1703 = vmul.f32 %v1322, %v1651
        %v1704 = vmul.f32 %v1327, %v1651
        %v1705 = vmul.f32 %v1332, %v1651
        %v1706 = vmul.f32 %v1337, %v1651
        %v1707 = vmul.f32 %v1342, %v1651
        %v1708 = vmul.f32 %v1347, %v1651
        %v1709 = vmul.f32 %v1352, %v1651
        %v1710 = vmul.f32 %v1357, %v1651
        %v1711 = vmul.f32 %v1362, %v1651
        %v1712 = vmul.f32 %v1367, %v1651
        %v1713 = vmul.f32 %v1372, %v1651
        %v1714 = vmul.f32 %v1377, %v1651
        %v1715 = vmul.f32 %v1382, %v1651
        %v1716 = vmul.f32 %v1387, %v1651
        %v1717 = vmul.f32 %v1392, %v1651
        %v1718 = vmul.f32 %v1397, %v1651
        %v1719 = vmul.f32 %v1402, %v1651
        %v1720 = vmul.f32 %v1407, %v1651
        %v1721 = vmul.f32 %v1412, %v1651
        %v1722 = vmul.f32 %v1417, %v1651
        %v1723 = vmul.f32 %v1422, %v1651
        %v1724 = vmul.f32 %v1427, %v1651
        %v1725 = vmul.f32 %v1432, %v1651
        %v1726 = vmul.f32 %v1437, %v1651
        %v1727 = vmul.f32 %v1442, %v1651
        %v1728 = vmul.f32 %v1447, %v1651
        %v1729 = vmul.f32 %v1452, %v1651
        %v1730 = vmul.f32 %v1457, %v1651
        %v1731 = vmul.f32 %v1462, %v1651
        %v1732 = vmul.f32 %v1467, %v1651
        %v1733 = vmul.f32 %v1472, %v1651
        %v1734 = vmul.f32 %v1477, %v1651
        %v1735 = vmul.f32 %v1482, %v1651
        %v1736 = vmul.f32 %v1487, %v1651
        %v1737 = vmul.f32 %v1492, %v1651
        %v1738 = vmul.f32 %v1497, %v1651
        %v1739 = vmul.f32 %v1502, %v1651
        %v1740 = vmul.f32 %v1507, %v1651
        %v1741 = vmul.f32 %v1613, %v1651
        %v1742 = vmul.f32 %v1618, %v1651
        %v1743 = vmul.f32 %v1623, %v1651
        %v1744 = vmul.f32 %v1628, %v1651
        %v1745 = vmul.f32 %v1633, %v1651
        %v1746 = vmul.f32 %v1638, %v1651
        %v1747 = vmul.f32 %v1643, %v1651
        %v1748 = vmul.f32 %v1648, %v1651
        %v1749 = vadd.f32 %v1512, %v1653
        %v1750 = vadd.f32 %v1513, %v1654
        %v1751 = vadd.f32 %v1514, %v1655
        %v1752 = vadd.f32 %v1515, %v1656
        %v1753 = vadd.f32 %v1516, %v1657
        %v1754 = vadd.f32 %v1517, %v1658
        %v1755 = vadd.f32 %v1518, %v1659
        %v1756 = vadd.f32 %v1519, %v1660
        %v1757 = vadd.f32 %v1520, %v1661
        %v1758 = vadd.f32 %v1521, %v1662
        %v1759 = vadd.f32 %v1522, %v1663
        %v1760 = vadd.f32 %v1523, %v1664
        %v1761 = vadd.f32 %v1524, %v1665
        %v1762 = vadd.f32 %v1525, %v1666
        %v1763 = vadd.f32 %v1526, %v1667
        %v1764 = vadd.f32 %v1527, %v1668
        %v1765 = vadd.f32 %v1528, %v1669
        %v1766 = vadd.f32 %v1529, %v1670
        %v1767 = vadd.f32 %v1530, %v1671
        %v1768 = vadd.f32 %v1531, %v1672
        %v1769 = vadd.f32 %v1532, %v1673
        %v1770 = vadd.f32 %v1533, %v1674
        %v1771 = vadd.f32 %v1534, %v1675
        %v1772 = vadd.f32 %v1535, %v1676
        %v1773 = vadd.f32 %v1536, %v1677
        %v1774 = vadd.f32 %v1537, %v1678
        %v1775 = vadd.f32 %v1538, %v1679
        %v1776 = vadd.f32 %v1539, %v1680
        %v1777 = vadd.f32 %v1540, %v1681
        %v1778 = vadd.f32 %v1541, %v1682
        %v1779 = vadd.f32 %v1542, %v1683
        %v1780 = vadd.f32 %v1543, %v1684
        %v1781 = vadd.f32 %v1544, %v1685
        %v1782 = vadd.f32 %v1545, %v1686
        %v1783 = vadd.f32 %v1546, %v1687
        %v1784 = vadd.f32 %v1547, %v1688
        %v1785 = vadd.f32 %v1548, %v1689
        %v1786 = vadd.f32 %v1549, %v1690
        %v1787 = vadd.f32 %v1550, %v1691
        %v1788 = vadd.f32 %v1551, %v1692
        %v1789 = vadd.f32 %v1552, %v1693
        %v1790 = vadd.f32 %v1553, %v1694
        %v1791 = vadd.f32 %v1554, %v1695
        %v1792 = vadd.f32 %v1555, %v1696
        %v1793 = vadd.f32 %v1556, %v1697
        %v1794 = vadd.f32 %v1557, %v1698
        %v1795 = vadd.f32 %v1558, %v1699
        %v1796 = vadd.f32 %v1559, %v1700
        %v1797 = vadd.f32 %v1560, %v1701
        %v1798 = vadd.f32 %v1561, %v1702
        %v1799 = vadd.f32 %v1562, %v1703
        %v1800 = vadd.f32 %v1563, %v1704
        %v1801 = vadd.f32 %v1564, %v1705
        %v1802 = vadd.f32 %v1565, %v1706
        %v1803 = vadd.f32 %v1566, %v1707
        %v1804 = vadd.f32 %v1567, %v1708
        %v1805 = vadd.f32 %v1568, %v1709
        %v1806 = vadd.f32 %v1569, %v1710
        %v1807 = vadd.f32 %v1570, %v1711
        %v1808 = vadd.f32 %v1571, %v1712
        %v1809 = vadd.f32 %v1572, %v1713
        %v1810 = vadd.f32 %v1573, %v1714
        %v1811 = vadd.f32 %v1574, %v1715
        %v1812 = vadd.f32 %v1575, %v1716
        %v1813 = vadd.f32 %v1576, %v1717
        %v1814 = vadd.f32 %v1577, %v1718
        %v1815 = vadd.f32 %v1578, %v1719
        %v1816 = vadd.f32 %v1579, %v1720
        %v1817 = vadd.f32 %v1580, %v1721
        %v1818 = vadd.f32 %v1581, %v1722
        %v1819 = vadd.f32 %v1582, %v1723
        %v1820 = vadd.f32 %v1583, %v1724
        %v1821 = vadd.f32 %v1584, %v1725
        %v1822 = vadd.f32 %v1585, %v1726
        %v1823 = vadd.f32 %v1586, %v1727
        %v1824 = vadd.f32 %v1587, %v1728
        %v1825 = vadd.f32 %v1588, %v1729
        %v1826 = vadd.f32 %v1589, %v1730
        %v1827 = vadd.f32 %v1590, %v1731
        %v1828 = vadd.f32 %v1591, %v1732
        %v1829 = vadd.f32 %v1592, %v1733
        %v1830 = vadd.f32 %v1593, %v1734
        %v1831 = vadd.f32 %v1594, %v1735
        %v1832 = vadd.f32 %v1595, %v1736
        %v1833 = vadd.f32 %v1596, %v1737
        %v1834 = vadd.f32 %v1597, %v1738
        %v1835 = vadd.f32 %v1598, %v1739
        %v1836 = vadd.f32 %v1599, %v1740
        %v1837 = vadd.f32 %v1600, %v1741
        %v1838 = vadd.f32 %v1601, %v1742
        %v1839 = vadd.f32 %v1602, %v1743
        %v1840 = vadd.f32 %v1603, %v1744
        %v1841 = vadd.f32 %v1604, %v1745
        %v1842 = vadd.f32 %v1605, %v1746
        %v1843 = vadd.f32 %v1606, %v1747
        %v1844 = vadd.f32 %v1607, %v1748
        %s1845 = scalar_lea.vmem %s2, 2
        %v1846 = vld [vmem:[%s1845] sm:$0x1]
        %1848 = vset.pattern.permute.xlu0 0
        %1849 = vperm.xlu0 %1848, %v1003
        %v1850 = vpop.permute.xlu0 %1849
        %1853 = vset.pattern.permute.xlu0 0
        %1854 = vperm.xlu0 %1853, %v1004
        %v1855 = vpop.permute.xlu0 %1854
        %1858 = vset.pattern.permute.xlu0 0
        %1859 = vperm.xlu0 %1858, %v1005
        %v1860 = vpop.permute.xlu0 %1859
        %1863 = vset.pattern.permute.xlu0 0
        %1864 = vperm.xlu0 %1863, %v1006
        %v1865 = vpop.permute.xlu0 %1864
        %1868 = vset.pattern.permute.xlu0 0
        %1869 = vperm.xlu0 %1868, %v1007
        %v1870 = vpop.permute.xlu0 %1869
        %1873 = vset.pattern.permute.xlu0 0
        %1874 = vperm.xlu0 %1873, %v1008
        %v1875 = vpop.permute.xlu0 %1874
        %1878 = vset.pattern.permute.xlu0 0
        %1879 = vperm.xlu0 %1878, %v1009
        %v1880 = vpop.permute.xlu0 %1879
        %1883 = vset.pattern.permute.xlu0 0
        %1884 = vperm.xlu0 %1883, %v1010
        %v1885 = vpop.permute.xlu0 %1884
        %v1888 = vperm.slane %v1846, 0
        %v1890 = vmul.f32 %v1112, %v1888
        %v1891 = vmul.f32 %v1117, %v1888
        %v1892 = vmul.f32 %v1122, %v1888
        %v1893 = vmul.f32 %v1127, %v1888
        %v1894 = vmul.f32 %v1132, %v1888
        %v1895 = vmul.f32 %v1137, %v1888
        %v1896 = vmul.f32 %v1142, %v1888
        %v1897 = vmul.f32 %v1147, %v1888
        %v1898 = vmul.f32 %v1152, %v1888
        %v1899 = vmul.f32 %v1157, %v1888
        %v1900 = vmul.f32 %v1162, %v1888
        %v1901 = vmul.f32 %v1167, %v1888
        %v1902 = vmul.f32 %v1172, %v1888
        %v1903 = vmul.f32 %v1177, %v1888
        %v1904 = vmul.f32 %v1182, %v1888
        %v1905 = vmul.f32 %v1187, %v1888
        %v1906 = vmul.f32 %v1192, %v1888
        %v1907 = vmul.f32 %v1197, %v1888
        %v1908 = vmul.f32 %v1202, %v1888
        %v1909 = vmul.f32 %v1207, %v1888
        %v1910 = vmul.f32 %v1212, %v1888
        %v1911 = vmul.f32 %v1217, %v1888
        %v1912 = vmul.f32 %v1222, %v1888
        %v1913 = vmul.f32 %v1227, %v1888
        %v1914 = vmul.f32 %v1232, %v1888
        %v1915 = vmul.f32 %v1237, %v1888
        %v1916 = vmul.f32 %v1242, %v1888
        %v1917 = vmul.f32 %v1247, %v1888
        %v1918 = vmul.f32 %v1252, %v1888
        %v1919 = vmul.f32 %v1257, %v1888
        %v1920 = vmul.f32 %v1262, %v1888
        %v1921 = vmul.f32 %v1267, %v1888
        %v1922 = vmul.f32 %v1272, %v1888
        %v1923 = vmul.f32 %v1277, %v1888
        %v1924 = vmul.f32 %v1282, %v1888
        %v1925 = vmul.f32 %v1287, %v1888
        %v1926 = vmul.f32 %v1292, %v1888
        %v1927 = vmul.f32 %v1297, %v1888
        %v1928 = vmul.f32 %v1302, %v1888
        %v1929 = vmul.f32 %v1307, %v1888
        %v1930 = vmul.f32 %v1312, %v1888
        %v1931 = vmul.f32 %v1317, %v1888
        %v1932 = vmul.f32 %v1322, %v1888
        %v1933 = vmul.f32 %v1327, %v1888
        %v1934 = vmul.f32 %v1332, %v1888
        %v1935 = vmul.f32 %v1337, %v1888
        %v1936 = vmul.f32 %v1342, %v1888
        %v1937 = vmul.f32 %v1347, %v1888
        %v1938 = vmul.f32 %v1352, %v1888
        %v1939 = vmul.f32 %v1357, %v1888
        %v1940 = vmul.f32 %v1362, %v1888
        %v1941 = vmul.f32 %v1367, %v1888
        %v1942 = vmul.f32 %v1372, %v1888
        %v1943 = vmul.f32 %v1377, %v1888
        %v1944 = vmul.f32 %v1382, %v1888
        %v1945 = vmul.f32 %v1387, %v1888
        %v1946 = vmul.f32 %v1392, %v1888
        %v1947 = vmul.f32 %v1397, %v1888
        %v1948 = vmul.f32 %v1402, %v1888
        %v1949 = vmul.f32 %v1407, %v1888
        %v1950 = vmul.f32 %v1412, %v1888
        %v1951 = vmul.f32 %v1417, %v1888
        %v1952 = vmul.f32 %v1422, %v1888
        %v1953 = vmul.f32 %v1427, %v1888
        %v1954 = vmul.f32 %v1432, %v1888
        %v1955 = vmul.f32 %v1437, %v1888
        %v1956 = vmul.f32 %v1442, %v1888
        %v1957 = vmul.f32 %v1447, %v1888
        %v1958 = vmul.f32 %v1452, %v1888
        %v1959 = vmul.f32 %v1457, %v1888
        %v1960 = vmul.f32 %v1462, %v1888
        %v1961 = vmul.f32 %v1467, %v1888
        %v1962 = vmul.f32 %v1472, %v1888
        %v1963 = vmul.f32 %v1477, %v1888
        %v1964 = vmul.f32 %v1482, %v1888
        %v1965 = vmul.f32 %v1487, %v1888
        %v1966 = vmul.f32 %v1492, %v1888
        %v1967 = vmul.f32 %v1497, %v1888
        %v1968 = vmul.f32 %v1502, %v1888
        %v1969 = vmul.f32 %v1507, %v1888
        %v1970 = vmul.f32 %v1613, %v1888
        %v1971 = vmul.f32 %v1618, %v1888
        %v1972 = vmul.f32 %v1623, %v1888
        %v1973 = vmul.f32 %v1628, %v1888
        %v1974 = vmul.f32 %v1633, %v1888
        %v1975 = vmul.f32 %v1638, %v1888
        %v1976 = vmul.f32 %v1643, %v1888
        %v1977 = vmul.f32 %v1648, %v1888
        %v1978 = vmul.f32 %v1850, %v1888
        %v1979 = vmul.f32 %v1855, %v1888
        %v1980 = vmul.f32 %v1860, %v1888
        %v1981 = vmul.f32 %v1865, %v1888
        %v1982 = vmul.f32 %v1870, %v1888
        %v1983 = vmul.f32 %v1875, %v1888
        %v1984 = vmul.f32 %v1880, %v1888
        %v1985 = vmul.f32 %v1885, %v1888
        %v1986 = vadd.f32 %v1749, %v1890
        %v1987 = vadd.f32 %v1750, %v1891
        %v1988 = vadd.f32 %v1751, %v1892
        %v1989 = vadd.f32 %v1752, %v1893
        %v1990 = vadd.f32 %v1753, %v1894
        %v1991 = vadd.f32 %v1754, %v1895
        %v1992 = vadd.f32 %v1755, %v1896
        %v1993 = vadd.f32 %v1756, %v1897
        %v1994 = vadd.f32 %v1757, %v1898
        %v1995 = vadd.f32 %v1758, %v1899
        %v1996 = vadd.f32 %v1759, %v1900
        %v1997 = vadd.f32 %v1760, %v1901
        %v1998 = vadd.f32 %v1761, %v1902
        %v1999 = vadd.f32 %v1762, %v1903
        %v2000 = vadd.f32 %v1763, %v1904
        %v2001 = vadd.f32 %v1764, %v1905
        %v2002 = vadd.f32 %v1765, %v1906
        %v2003 = vadd.f32 %v1766, %v1907
        %v2004 = vadd.f32 %v1767, %v1908
        %v2005 = vadd.f32 %v1768, %v1909
        %v2006 = vadd.f32 %v1769, %v1910
        %v2007 = vadd.f32 %v1770, %v1911
        %v2008 = vadd.f32 %v1771, %v1912
        %v2009 = vadd.f32 %v1772, %v1913
        %v2010 = vadd.f32 %v1773, %v1914
        %v2011 = vadd.f32 %v1774, %v1915
        %v2012 = vadd.f32 %v1775, %v1916
        %v2013 = vadd.f32 %v1776, %v1917
        %v2014 = vadd.f32 %v1777, %v1918
        %v2015 = vadd.f32 %v1778, %v1919
        %v2016 = vadd.f32 %v1779, %v1920
        %v2017 = vadd.f32 %v1780, %v1921
        %v2018 = vadd.f32 %v1781, %v1922
        %v2019 = vadd.f32 %v1782, %v1923
        %v2020 = vadd.f32 %v1783, %v1924
        %v2021 = vadd.f32 %v1784, %v1925
        %v2022 = vadd.f32 %v1785, %v1926
        %v2023 = vadd.f32 %v1786, %v1927
        %v2024 = vadd.f32 %v1787, %v1928
        %v2025 = vadd.f32 %v1788, %v1929
        %v2026 = vadd.f32 %v1789, %v1930
        %v2027 = vadd.f32 %v1790, %v1931
        %v2028 = vadd.f32 %v1791, %v1932
        %v2029 = vadd.f32 %v1792, %v1933
        %v2030 = vadd.f32 %v1793, %v1934
        %v2031 = vadd.f32 %v1794, %v1935
        %v2032 = vadd.f32 %v1795, %v1936
        %v2033 = vadd.f32 %v1796, %v1937
        %v2034 = vadd.f32 %v1797, %v1938
        %v2035 = vadd.f32 %v1798, %v1939
        %v2036 = vadd.f32 %v1799, %v1940
        %v2037 = vadd.f32 %v1800, %v1941
        %v2038 = vadd.f32 %v1801, %v1942
        %v2039 = vadd.f32 %v1802, %v1943
        %v2040 = vadd.f32 %v1803, %v1944
        %v2041 = vadd.f32 %v1804, %v1945
        %v2042 = vadd.f32 %v1805, %v1946
        %v2043 = vadd.f32 %v1806, %v1947
        %v2044 = vadd.f32 %v1807, %v1948
        %v2045 = vadd.f32 %v1808, %v1949
        %v2046 = vadd.f32 %v1809, %v1950
        %v2047 = vadd.f32 %v1810, %v1951
        %v2048 = vadd.f32 %v1811, %v1952
        %v2049 = vadd.f32 %v1812, %v1953
        %v2050 = vadd.f32 %v1813, %v1954
        %v2051 = vadd.f32 %v1814, %v1955
        %v2052 = vadd.f32 %v1815, %v1956
        %v2053 = vadd.f32 %v1816, %v1957
        %v2054 = vadd.f32 %v1817, %v1958
        %v2055 = vadd.f32 %v1818, %v1959
        %v2056 = vadd.f32 %v1819, %v1960
        %v2057 = vadd.f32 %v1820, %v1961
        %v2058 = vadd.f32 %v1821, %v1962
        %v2059 = vadd.f32 %v1822, %v1963
        %v2060 = vadd.f32 %v1823, %v1964
        %v2061 = vadd.f32 %v1824, %v1965
        %v2062 = vadd.f32 %v1825, %v1966
        %v2063 = vadd.f32 %v1826, %v1967
        %v2064 = vadd.f32 %v1827, %v1968
        %v2065 = vadd.f32 %v1828, %v1969
        %v2066 = vadd.f32 %v1829, %v1970
        %v2067 = vadd.f32 %v1830, %v1971
        %v2068 = vadd.f32 %v1831, %v1972
        %v2069 = vadd.f32 %v1832, %v1973
        %v2070 = vadd.f32 %v1833, %v1974
        %v2071 = vadd.f32 %v1834, %v1975
        %v2072 = vadd.f32 %v1835, %v1976
        %v2073 = vadd.f32 %v1836, %v1977
        %v2074 = vadd.f32 %v1837, %v1978
        %v2075 = vadd.f32 %v1838, %v1979
        %v2076 = vadd.f32 %v1839, %v1980
        %v2077 = vadd.f32 %v1840, %v1981
        %v2078 = vadd.f32 %v1841, %v1982
        %v2079 = vadd.f32 %v1842, %v1983
        %v2080 = vadd.f32 %v1843, %v1984
        %v2081 = vadd.f32 %v1844, %v1985
        %s2082 = scalar_lea.vmem %s2, 3
        %v2083 = vld [vmem:[%s2082] sm:$0x1]
        %2085 = vset.pattern.permute.xlu0 0
        %2086 = vperm.xlu0 %2085, %v1011
        %v2087 = vpop.permute.xlu0 %2086
        %2090 = vset.pattern.permute.xlu0 0
        %2091 = vperm.xlu0 %2090, %v1012
        %v2092 = vpop.permute.xlu0 %2091
        %2095 = vset.pattern.permute.xlu0 0
        %2096 = vperm.xlu0 %2095, %v1013
        %v2097 = vpop.permute.xlu0 %2096
        %2100 = vset.pattern.permute.xlu0 0
        %2101 = vperm.xlu0 %2100, %v1014
        %v2102 = vpop.permute.xlu0 %2101
        %2105 = vset.pattern.permute.xlu0 0
        %2106 = vperm.xlu0 %2105, %v1015
        %v2107 = vpop.permute.xlu0 %2106
        %2110 = vset.pattern.permute.xlu0 0
        %2111 = vperm.xlu0 %2110, %v1016
        %v2112 = vpop.permute.xlu0 %2111
        %2115 = vset.pattern.permute.xlu0 0
        %2116 = vperm.xlu0 %2115, %v1017
        %v2117 = vpop.permute.xlu0 %2116
        %2120 = vset.pattern.permute.xlu0 0
        %2121 = vperm.xlu0 %2120, %v1018
        %v2122 = vpop.permute.xlu0 %2121
        %v2125 = vperm.slane %v2083, 0
        %v2127 = vmul.f32 %v1152, %v2125
        %v2128 = vmul.f32 %v1157, %v2125
        %v2129 = vmul.f32 %v1162, %v2125
        %v2130 = vmul.f32 %v1167, %v2125
        %v2131 = vmul.f32 %v1172, %v2125
        %v2132 = vmul.f32 %v1177, %v2125
        %v2133 = vmul.f32 %v1182, %v2125
        %v2134 = vmul.f32 %v1187, %v2125
        %v2135 = vmul.f32 %v1192, %v2125
        %v2136 = vmul.f32 %v1197, %v2125
        %v2137 = vmul.f32 %v1202, %v2125
        %v2138 = vmul.f32 %v1207, %v2125
        %v2139 = vmul.f32 %v1212, %v2125
        %v2140 = vmul.f32 %v1217, %v2125
        %v2141 = vmul.f32 %v1222, %v2125
        %v2142 = vmul.f32 %v1227, %v2125
        %v2143 = vmul.f32 %v1232, %v2125
        %v2144 = vmul.f32 %v1237, %v2125
        %v2145 = vmul.f32 %v1242, %v2125
        %v2146 = vmul.f32 %v1247, %v2125
        %v2147 = vmul.f32 %v1252, %v2125
        %v2148 = vmul.f32 %v1257, %v2125
        %v2149 = vmul.f32 %v1262, %v2125
        %v2150 = vmul.f32 %v1267, %v2125
        %v2151 = vmul.f32 %v1272, %v2125
        %v2152 = vmul.f32 %v1277, %v2125
        %v2153 = vmul.f32 %v1282, %v2125
        %v2154 = vmul.f32 %v1287, %v2125
        %v2155 = vmul.f32 %v1292, %v2125
        %v2156 = vmul.f32 %v1297, %v2125
        %v2157 = vmul.f32 %v1302, %v2125
        %v2158 = vmul.f32 %v1307, %v2125
        %v2159 = vmul.f32 %v1312, %v2125
        %v2160 = vmul.f32 %v1317, %v2125
        %v2161 = vmul.f32 %v1322, %v2125
        %v2162 = vmul.f32 %v1327, %v2125
        %v2163 = vmul.f32 %v1332, %v2125
        %v2164 = vmul.f32 %v1337, %v2125
        %v2165 = vmul.f32 %v1342, %v2125
        %v2166 = vmul.f32 %v1347, %v2125
        %v2167 = vmul.f32 %v1352, %v2125
        %v2168 = vmul.f32 %v1357, %v2125
        %v2169 = vmul.f32 %v1362, %v2125
        %v2170 = vmul.f32 %v1367, %v2125
        %v2171 = vmul.f32 %v1372, %v2125
        %v2172 = vmul.f32 %v1377, %v2125
        %v2173 = vmul.f32 %v1382, %v2125
        %v2174 = vmul.f32 %v1387, %v2125
        %v2175 = vmul.f32 %v1392, %v2125
        %v2176 = vmul.f32 %v1397, %v2125
        %v2177 = vmul.f32 %v1402, %v2125
        %v2178 = vmul.f32 %v1407, %v2125
        %v2179 = vmul.f32 %v1412, %v2125
        %v2180 = vmul.f32 %v1417, %v2125
        %v2181 = vmul.f32 %v1422, %v2125
        %v2182 = vmul.f32 %v1427, %v2125
        %v2183 = vmul.f32 %v1432, %v2125
        %v2184 = vmul.f32 %v1437, %v2125
        %v2185 = vmul.f32 %v1442, %v2125
        %v2186 = vmul.f32 %v1447, %v2125
        %v2187 = vmul.f32 %v1452, %v2125
        %v2188 = vmul.f32 %v1457, %v2125
        %v2189 = vmul.f32 %v1462, %v2125
        %v2190 = vmul.f32 %v1467, %v2125
        %v2191 = vmul.f32 %v1472, %v2125
        %v2192 = vmul.f32 %v1477, %v2125
        %v2193 = vmul.f32 %v1482, %v2125
        %v2194 = vmul.f32 %v1487, %v2125
        %v2195 = vmul.f32 %v1492, %v2125
        %v2196 = vmul.f32 %v1497, %v2125
        %v2197 = vmul.f32 %v1502, %v2125
        %v2198 = vmul.f32 %v1507, %v2125
        %v2199 = vmul.f32 %v1613, %v2125
        %v2200 = vmul.f32 %v1618, %v2125
        %v2201 = vmul.f32 %v1623, %v2125
        %v2202 = vmul.f32 %v1628, %v2125
        %v2203 = vmul.f32 %v1633, %v2125
        %v2204 = vmul.f32 %v1638, %v2125
        %v2205 = vmul.f32 %v1643, %v2125
        %v2206 = vmul.f32 %v1648, %v2125
        %v2207 = vmul.f32 %v1850, %v2125
        %v2208 = vmul.f32 %v1855, %v2125
        %v2209 = vmul.f32 %v1860, %v2125
        %v2210 = vmul.f32 %v1865, %v2125
        %v2211 = vmul.f32 %v1870, %v2125
        %v2212 = vmul.f32 %v1875, %v2125
        %v2213 = vmul.f32 %v1880, %v2125
        %v2214 = vmul.f32 %v1885, %v2125
        %v2215 = vmul.f32 %v2087, %v2125
        %v2216 = vmul.f32 %v2092, %v2125
        %v2217 = vmul.f32 %v2097, %v2125
        %v2218 = vmul.f32 %v2102, %v2125
        %v2219 = vmul.f32 %v2107, %v2125
        %v2220 = vmul.f32 %v2112, %v2125
        %v2221 = vmul.f32 %v2117, %v2125
        %v2222 = vmul.f32 %v2122, %v2125
        %v2223 = vadd.f32 %v1986, %v2127
        %v2224 = vadd.f32 %v1987, %v2128
        %v2225 = vadd.f32 %v1988, %v2129
        %v2226 = vadd.f32 %v1989, %v2130
        %v2227 = vadd.f32 %v1990, %v2131
        %v2228 = vadd.f32 %v1991, %v2132
        %v2229 = vadd.f32 %v1992, %v2133
        %v2230 = vadd.f32 %v1993, %v2134
        %v2231 = vadd.f32 %v1994, %v2135
        %v2232 = vadd.f32 %v1995, %v2136
        %v2233 = vadd.f32 %v1996, %v2137
        %v2234 = vadd.f32 %v1997, %v2138
        %v2235 = vadd.f32 %v1998, %v2139
        %v2236 = vadd.f32 %v1999, %v2140
        %v2237 = vadd.f32 %v2000, %v2141
        %v2238 = vadd.f32 %v2001, %v2142
        %v2239 = vadd.f32 %v2002, %v2143
        %v2240 = vadd.f32 %v2003, %v2144
        %v2241 = vadd.f32 %v2004, %v2145
        %v2242 = vadd.f32 %v2005, %v2146
        %v2243 = vadd.f32 %v2006, %v2147
        %v2244 = vadd.f32 %v2007, %v2148
        %v2245 = vadd.f32 %v2008, %v2149
        %v2246 = vadd.f32 %v2009, %v2150
        %v2247 = vadd.f32 %v2010, %v2151
        %v2248 = vadd.f32 %v2011, %v2152
        %v2249 = vadd.f32 %v2012, %v2153
        %v2250 = vadd.f32 %v2013, %v2154
        %v2251 = vadd.f32 %v2014, %v2155
        %v2252 = vadd.f32 %v2015, %v2156
        %v2253 = vadd.f32 %v2016, %v2157
        %v2254 = vadd.f32 %v2017, %v2158
        %v2255 = vadd.f32 %v2018, %v2159
        %v2256 = vadd.f32 %v2019, %v2160
        %v2257 = vadd.f32 %v2020, %v2161
        %v2258 = vadd.f32 %v2021, %v2162
        %v2259 = vadd.f32 %v2022, %v2163
        %v2260 = vadd.f32 %v2023, %v2164
        %v2261 = vadd.f32 %v2024, %v2165
        %v2262 = vadd.f32 %v2025, %v2166
        %v2263 = vadd.f32 %v2026, %v2167
        %v2264 = vadd.f32 %v2027, %v2168
        %v2265 = vadd.f32 %v2028, %v2169
        %v2266 = vadd.f32 %v2029, %v2170
        %v2267 = vadd.f32 %v2030, %v2171
        %v2268 = vadd.f32 %v2031, %v2172
        %v2269 = vadd.f32 %v2032, %v2173
        %v2270 = vadd.f32 %v2033, %v2174
        %v2271 = vadd.f32 %v2034, %v2175
        %v2272 = vadd.f32 %v2035, %v2176
        %v2273 = vadd.f32 %v2036, %v2177
        %v2274 = vadd.f32 %v2037, %v2178
        %v2275 = vadd.f32 %v2038, %v2179
        %v2276 = vadd.f32 %v2039, %v2180
        %v2277 = vadd.f32 %v2040, %v2181
        %v2278 = vadd.f32 %v2041, %v2182
        %v2279 = vadd.f32 %v2042, %v2183
        %v2280 = vadd.f32 %v2043, %v2184
        %v2281 = vadd.f32 %v2044, %v2185
        %v2282 = vadd.f32 %v2045, %v2186
        %v2283 = vadd.f32 %v2046, %v2187
        %v2284 = vadd.f32 %v2047, %v2188
        %v2285 = vadd.f32 %v2048, %v2189
        %v2286 = vadd.f32 %v2049, %v2190
        %v2287 = vadd.f32 %v2050, %v2191
        %v2288 = vadd.f32 %v2051, %v2192
        %v2289 = vadd.f32 %v2052, %v2193
        %v2290 = vadd.f32 %v2053, %v2194
        %v2291 = vadd.f32 %v2054, %v2195
        %v2292 = vadd.f32 %v2055, %v2196
        %v2293 = vadd.f32 %v2056, %v2197
        %v2294 = vadd.f32 %v2057, %v2198
        %v2295 = vadd.f32 %v2058, %v2199
        %v2296 = vadd.f32 %v2059, %v2200
        %v2297 = vadd.f32 %v2060, %v2201
        %v2298 = vadd.f32 %v2061, %v2202
        %v2299 = vadd.f32 %v2062, %v2203
        %v2300 = vadd.f32 %v2063, %v2204
        %v2301 = vadd.f32 %v2064, %v2205
        %v2302 = vadd.f32 %v2065, %v2206
        %v2303 = vadd.f32 %v2066, %v2207
        %v2304 = vadd.f32 %v2067, %v2208
        %v2305 = vadd.f32 %v2068, %v2209
        %v2306 = vadd.f32 %v2069, %v2210
        %v2307 = vadd.f32 %v2070, %v2211
        %v2308 = vadd.f32 %v2071, %v2212
        %v2309 = vadd.f32 %v2072, %v2213
        %v2310 = vadd.f32 %v2073, %v2214
        %v2311 = vadd.f32 %v2074, %v2215
        %v2312 = vadd.f32 %v2075, %v2216
        %v2313 = vadd.f32 %v2076, %v2217
        %v2314 = vadd.f32 %v2077, %v2218
        %v2315 = vadd.f32 %v2078, %v2219
        %v2316 = vadd.f32 %v2079, %v2220
        %v2317 = vadd.f32 %v2080, %v2221
        %v2318 = vadd.f32 %v2081, %v2222
        %s2319 = scalar_lea.vmem %s2, 4
        %v2320 = vld [vmem:[%s2319] sm:$0x1]
        %2322 = vset.pattern.permute.xlu0 0
        %2323 = vperm.xlu0 %2322, %v1019
        %v2324 = vpop.permute.xlu0 %2323
        %2327 = vset.pattern.permute.xlu0 0
        %2328 = vperm.xlu0 %2327, %v1020
        %v2329 = vpop.permute.xlu0 %2328
        %2332 = vset.pattern.permute.xlu0 0
        %2333 = vperm.xlu0 %2332, %v1021
        %v2334 = vpop.permute.xlu0 %2333
        %2337 = vset.pattern.permute.xlu0 0
        %2338 = vperm.xlu0 %2337, %v1022
        %v2339 = vpop.permute.xlu0 %2338
        %2342 = vset.pattern.permute.xlu0 0
        %2343 = vperm.xlu0 %2342, %v1023
        %v2344 = vpop.permute.xlu0 %2343
        %2347 = vset.pattern.permute.xlu0 0
        %2348 = vperm.xlu0 %2347, %v1024
        %v2349 = vpop.permute.xlu0 %2348
        %2352 = vset.pattern.permute.xlu0 0
        %2353 = vperm.xlu0 %2352, %v1025
        %v2354 = vpop.permute.xlu0 %2353
        %2357 = vset.pattern.permute.xlu0 0
        %2358 = vperm.xlu0 %2357, %v1026
        %v2359 = vpop.permute.xlu0 %2358
        %v2362 = vperm.slane %v2320, 0
        %v2364 = vmul.f32 %v1192, %v2362
        %v2365 = vmul.f32 %v1197, %v2362
        %v2366 = vmul.f32 %v1202, %v2362
        %v2367 = vmul.f32 %v1207, %v2362
        %v2368 = vmul.f32 %v1212, %v2362
        %v2369 = vmul.f32 %v1217, %v2362
        %v2370 = vmul.f32 %v1222, %v2362
        %v2371 = vmul.f32 %v1227, %v2362
        %v2372 = vmul.f32 %v1232, %v2362
        %v2373 = vmul.f32 %v1237, %v2362
        %v2374 = vmul.f32 %v1242, %v2362
        %v2375 = vmul.f32 %v1247, %v2362
        %v2376 = vmul.f32 %v1252, %v2362
        %v2377 = vmul.f32 %v1257, %v2362
        %v2378 = vmul.f32 %v1262, %v2362
        %v2379 = vmul.f32 %v1267, %v2362
        %v2380 = vmul.f32 %v1272, %v2362
        %v2381 = vmul.f32 %v1277, %v2362
        %v2382 = vmul.f32 %v1282, %v2362
        %v2383 = vmul.f32 %v1287, %v2362
        %v2384 = vmul.f32 %v1292, %v2362
        %v2385 = vmul.f32 %v1297, %v2362
        %v2386 = vmul.f32 %v1302, %v2362
        %v2387 = vmul.f32 %v1307, %v2362
        %v2388 = vmul.f32 %v1312, %v2362
        %v2389 = vmul.f32 %v1317, %v2362
        %v2390 = vmul.f32 %v1322, %v2362
        %v2391 = vmul.f32 %v1327, %v2362
        %v2392 = vmul.f32 %v1332, %v2362
        %v2393 = vmul.f32 %v1337, %v2362
        %v2394 = vmul.f32 %v1342, %v2362
        %v2395 = vmul.f32 %v1347, %v2362
        %v2396 = vmul.f32 %v1352, %v2362
        %v2397 = vmul.f32 %v1357, %v2362
        %v2398 = vmul.f32 %v1362, %v2362
        %v2399 = vmul.f32 %v1367, %v2362
        %v2400 = vmul.f32 %v1372, %v2362
        %v2401 = vmul.f32 %v1377, %v2362
        %v2402 = vmul.f32 %v1382, %v2362
        %v2403 = vmul.f32 %v1387, %v2362
        %v2404 = vmul.f32 %v1392, %v2362
        %v2405 = vmul.f32 %v1397, %v2362
        %v2406 = vmul.f32 %v1402, %v2362
        %v2407 = vmul.f32 %v1407, %v2362
        %v2408 = vmul.f32 %v1412, %v2362
        %v2409 = vmul.f32 %v1417, %v2362
        %v2410 = vmul.f32 %v1422, %v2362
        %v2411 = vmul.f32 %v1427, %v2362
        %v2412 = vmul.f32 %v1432, %v2362
        %v2413 = vmul.f32 %v1437, %v2362
        %v2414 = vmul.f32 %v1442, %v2362
        %v2415 = vmul.f32 %v1447, %v2362
        %v2416 = vmul.f32 %v1452, %v2362
        %v2417 = vmul.f32 %v1457, %v2362
        %v2418 = vmul.f32 %v1462, %v2362
        %v2419 = vmul.f32 %v1467, %v2362
        %v2420 = vmul.f32 %v1472, %v2362
        %v2421 = vmul.f32 %v1477, %v2362
        %v2422 = vmul.f32 %v1482, %v2362
        %v2423 = vmul.f32 %v1487, %v2362
        %v2424 = vmul.f32 %v1492, %v2362
        %v2425 = vmul.f32 %v1497, %v2362
        %v2426 = vmul.f32 %v1502, %v2362
        %v2427 = vmul.f32 %v1507, %v2362
        %v2428 = vmul.f32 %v1613, %v2362
        %v2429 = vmul.f32 %v1618, %v2362
        %v2430 = vmul.f32 %v1623, %v2362
        %v2431 = vmul.f32 %v1628, %v2362
        %v2432 = vmul.f32 %v1633, %v2362
        %v2433 = vmul.f32 %v1638, %v2362
        %v2434 = vmul.f32 %v1643, %v2362
        %v2435 = vmul.f32 %v1648, %v2362
        %v2436 = vmul.f32 %v1850, %v2362
        %v2437 = vmul.f32 %v1855, %v2362
        %v2438 = vmul.f32 %v1860, %v2362
        %v2439 = vmul.f32 %v1865, %v2362
        %v2440 = vmul.f32 %v1870, %v2362
        %v2441 = vmul.f32 %v1875, %v2362
        %v2442 = vmul.f32 %v1880, %v2362
        %v2443 = vmul.f32 %v1885, %v2362
        %v2444 = vmul.f32 %v2087, %v2362
        %v2445 = vmul.f32 %v2092, %v2362
        %v2446 = vmul.f32 %v2097, %v2362
        %v2447 = vmul.f32 %v2102, %v2362
        %v2448 = vmul.f32 %v2107, %v2362
        %v2449 = vmul.f32 %v2112, %v2362
        %v2450 = vmul.f32 %v2117, %v2362
        %v2451 = vmul.f32 %v2122, %v2362
        %v2452 = vmul.f32 %v2324, %v2362
        %v2453 = vmul.f32 %v2329, %v2362
        %v2454 = vmul.f32 %v2334, %v2362
        %v2455 = vmul.f32 %v2339, %v2362
        %v2456 = vmul.f32 %v2344, %v2362
        %v2457 = vmul.f32 %v2349, %v2362
        %v2458 = vmul.f32 %v2354, %v2362
        %v2459 = vmul.f32 %v2359, %v2362
        %v2460 = vadd.f32 %v2223, %v2364
        %v2461 = vadd.f32 %v2224, %v2365
        %v2462 = vadd.f32 %v2225, %v2366
        %v2463 = vadd.f32 %v2226, %v2367
        %v2464 = vadd.f32 %v2227, %v2368
        %v2465 = vadd.f32 %v2228, %v2369
        %v2466 = vadd.f32 %v2229, %v2370
        %v2467 = vadd.f32 %v2230, %v2371
        %v2468 = vadd.f32 %v2231, %v2372
        %v2469 = vadd.f32 %v2232, %v2373
        %v2470 = vadd.f32 %v2233, %v2374
        %v2471 = vadd.f32 %v2234, %v2375
        %v2472 = vadd.f32 %v2235, %v2376
        %v2473 = vadd.f32 %v2236, %v2377
        %v2474 = vadd.f32 %v2237, %v2378
        %v2475 = vadd.f32 %v2238, %v2379
        %v2476 = vadd.f32 %v2239, %v2380
        %v2477 = vadd.f32 %v2240, %v2381
        %v2478 = vadd.f32 %v2241, %v2382
        %v2479 = vadd.f32 %v2242, %v2383
        %v2480 = vadd.f32 %v2243, %v2384
        %v2481 = vadd.f32 %v2244, %v2385
        %v2482 = vadd.f32 %v2245, %v2386
        %v2483 = vadd.f32 %v2246, %v2387
        %v2484 = vadd.f32 %v2247, %v2388
        %v2485 = vadd.f32 %v2248, %v2389
        %v2486 = vadd.f32 %v2249, %v2390
        %v2487 = vadd.f32 %v2250, %v2391
        %v2488 = vadd.f32 %v2251, %v2392
        %v2489 = vadd.f32 %v2252, %v2393
        %v2490 = vadd.f32 %v2253, %v2394
        %v2491 = vadd.f32 %v2254, %v2395
        %v2492 = vadd.f32 %v2255, %v2396
        %v2493 = vadd.f32 %v2256, %v2397
        %v2494 = vadd.f32 %v2257, %v2398
        %v2495 = vadd.f32 %v2258, %v2399
        %v2496 = vadd.f32 %v2259, %v2400
        %v2497 = vadd.f32 %v2260, %v2401
        %v2498 = vadd.f32 %v2261, %v2402
        %v2499 = vadd.f32 %v2262, %v2403
        %v2500 = vadd.f32 %v2263, %v2404
        %v2501 = vadd.f32 %v2264, %v2405
        %v2502 = vadd.f32 %v2265, %v2406
        %v2503 = vadd.f32 %v2266, %v2407
        %v2504 = vadd.f32 %v2267, %v2408
        %v2505 = vadd.f32 %v2268, %v2409
        %v2506 = vadd.f32 %v2269, %v2410
        %v2507 = vadd.f32 %v2270, %v2411
        %v2508 = vadd.f32 %v2271, %v2412
        %v2509 = vadd.f32 %v2272, %v2413
        %v2510 = vadd.f32 %v2273, %v2414
        %v2511 = vadd.f32 %v2274, %v2415
        %v2512 = vadd.f32 %v2275, %v2416
        %v2513 = vadd.f32 %v2276, %v2417
        %v2514 = vadd.f32 %v2277, %v2418
        %v2515 = vadd.f32 %v2278, %v2419
        %v2516 = vadd.f32 %v2279, %v2420
        %v2517 = vadd.f32 %v2280, %v2421
        %v2518 = vadd.f32 %v2281, %v2422
        %v2519 = vadd.f32 %v2282, %v2423
        %v2520 = vadd.f32 %v2283, %v2424
        %v2521 = vadd.f32 %v2284, %v2425
        %v2522 = vadd.f32 %v2285, %v2426
        %v2523 = vadd.f32 %v2286, %v2427
        %v2524 = vadd.f32 %v2287, %v2428
        %v2525 = vadd.f32 %v2288, %v2429
        %v2526 = vadd.f32 %v2289, %v2430
        %v2527 = vadd.f32 %v2290, %v2431
        %v2528 = vadd.f32 %v2291, %v2432
        %v2529 = vadd.f32 %v2292, %v2433
        %v2530 = vadd.f32 %v2293, %v2434
        %v2531 = vadd.f32 %v2294, %v2435
        %v2532 = vadd.f32 %v2295, %v2436
        %v2533 = vadd.f32 %v2296, %v2437
        %v2534 = vadd.f32 %v2297, %v2438
        %v2535 = vadd.f32 %v2298, %v2439
        %v2536 = vadd.f32 %v2299, %v2440
        %v2537 = vadd.f32 %v2300, %v2441
        %v2538 = vadd.f32 %v2301, %v2442
        %v2539 = vadd.f32 %v2302, %v2443
        %v2540 = vadd.f32 %v2303, %v2444
        %v2541 = vadd.f32 %v2304, %v2445
        %v2542 = vadd.f32 %v2305, %v2446
        %v2543 = vadd.f32 %v2306, %v2447
        %v2544 = vadd.f32 %v2307, %v2448
        %v2545 = vadd.f32 %v2308, %v2449
        %v2546 = vadd.f32 %v2309, %v2450
        %v2547 = vadd.f32 %v2310, %v2451
        %v2548 = vadd.f32 %v2311, %v2452
        %v2549 = vadd.f32 %v2312, %v2453
        %v2550 = vadd.f32 %v2313, %v2454
        %v2551 = vadd.f32 %v2314, %v2455
        %v2552 = vadd.f32 %v2315, %v2456
        %v2553 = vadd.f32 %v2316, %v2457
        %v2554 = vadd.f32 %v2317, %v2458
        %v2555 = vadd.f32 %v2318, %v2459
        %v2557 = vperm.slane %v1027, 0
        %v2559 = vadd.f32 %v2460, %v2557
        %v2560 = vadd.f32 %v2461, %v2557
        %v2561 = vadd.f32 %v2462, %v2557
        %v2562 = vadd.f32 %v2463, %v2557
        %v2563 = vadd.f32 %v2464, %v2557
        %v2564 = vadd.f32 %v2465, %v2557
        %v2565 = vadd.f32 %v2466, %v2557
        %v2566 = vadd.f32 %v2467, %v2557
        %v2567 = vadd.f32 %v2468, %v2557
        %v2568 = vadd.f32 %v2469, %v2557
        %v2569 = vadd.f32 %v2470, %v2557
        %v2570 = vadd.f32 %v2471, %v2557
        %v2571 = vadd.f32 %v2472, %v2557
        %v2572 = vadd.f32 %v2473, %v2557
        %v2573 = vadd.f32 %v2474, %v2557
        %v2574 = vadd.f32 %v2475, %v2557
        %v2575 = vadd.f32 %v2476, %v2557
        %v2576 = vadd.f32 %v2477, %v2557
        %v2577 = vadd.f32 %v2478, %v2557
        %v2578 = vadd.f32 %v2479, %v2557
        %v2579 = vadd.f32 %v2480, %v2557
        %v2580 = vadd.f32 %v2481, %v2557
        %v2581 = vadd.f32 %v2482, %v2557
        %v2582 = vadd.f32 %v2483, %v2557
        %v2583 = vadd.f32 %v2484, %v2557
        %v2584 = vadd.f32 %v2485, %v2557
        %v2585 = vadd.f32 %v2486, %v2557
        %v2586 = vadd.f32 %v2487, %v2557
        %v2587 = vadd.f32 %v2488, %v2557
        %v2588 = vadd.f32 %v2489, %v2557
        %v2589 = vadd.f32 %v2490, %v2557
        %v2590 = vadd.f32 %v2491, %v2557
        %v2591 = vadd.f32 %v2492, %v2557
        %v2592 = vadd.f32 %v2493, %v2557
        %v2593 = vadd.f32 %v2494, %v2557
        %v2594 = vadd.f32 %v2495, %v2557
        %v2595 = vadd.f32 %v2496, %v2557
        %v2596 = vadd.f32 %v2497, %v2557
        %v2597 = vadd.f32 %v2498, %v2557
        %v2598 = vadd.f32 %v2499, %v2557
        %v2599 = vadd.f32 %v2500, %v2557
        %v2600 = vadd.f32 %v2501, %v2557
        %v2601 = vadd.f32 %v2502, %v2557
        %v2602 = vadd.f32 %v2503, %v2557
        %v2603 = vadd.f32 %v2504, %v2557
        %v2604 = vadd.f32 %v2505, %v2557
        %v2605 = vadd.f32 %v2506, %v2557
        %v2606 = vadd.f32 %v2507, %v2557
        %v2607 = vadd.f32 %v2508, %v2557
        %v2608 = vadd.f32 %v2509, %v2557
        %v2609 = vadd.f32 %v2510, %v2557
        %v2610 = vadd.f32 %v2511, %v2557
        %v2611 = vadd.f32 %v2512, %v2557
        %v2612 = vadd.f32 %v2513, %v2557
        %v2613 = vadd.f32 %v2514, %v2557
        %v2614 = vadd.f32 %v2515, %v2557
        %v2615 = vadd.f32 %v2516, %v2557
        %v2616 = vadd.f32 %v2517, %v2557
        %v2617 = vadd.f32 %v2518, %v2557
        %v2618 = vadd.f32 %v2519, %v2557
        %v2619 = vadd.f32 %v2520, %v2557
        %v2620 = vadd.f32 %v2521, %v2557
        %v2621 = vadd.f32 %v2522, %v2557
        %v2622 = vadd.f32 %v2523, %v2557
        %v2623 = vadd.f32 %v2524, %v2557
        %v2624 = vadd.f32 %v2525, %v2557
        %v2625 = vadd.f32 %v2526, %v2557
        %v2626 = vadd.f32 %v2527, %v2557
        %v2627 = vadd.f32 %v2528, %v2557
        %v2628 = vadd.f32 %v2529, %v2557
        %v2629 = vadd.f32 %v2530, %v2557
        %v2630 = vadd.f32 %v2531, %v2557
        %v2631 = vadd.f32 %v2532, %v2557
        %v2632 = vadd.f32 %v2533, %v2557
        %v2633 = vadd.f32 %v2534, %v2557
        %v2634 = vadd.f32 %v2535, %v2557
        %v2635 = vadd.f32 %v2536, %v2557
        %v2636 = vadd.f32 %v2537, %v2557
        %v2637 = vadd.f32 %v2538, %v2557
        %v2638 = vadd.f32 %v2539, %v2557
        %v2639 = vadd.f32 %v2540, %v2557
        %v2640 = vadd.f32 %v2541, %v2557
        %v2641 = vadd.f32 %v2542, %v2557
        %v2642 = vadd.f32 %v2543, %v2557
        %v2643 = vadd.f32 %v2544, %v2557
        %v2644 = vadd.f32 %v2545, %v2557
        %v2645 = vadd.f32 %v2546, %v2557
        %v2646 = vadd.f32 %v2547, %v2557
        %v2647 = vadd.f32 %v2548, %v2557
        %v2648 = vadd.f32 %v2549, %v2557
        %v2649 = vadd.f32 %v2550, %v2557
        %v2650 = vadd.f32 %v2551, %v2557
        %v2651 = vadd.f32 %v2552, %v2557
        %v2652 = vadd.f32 %v2553, %v2557
        %v2653 = vadd.f32 %v2554, %v2557
        %v2654 = vadd.f32 %v2555, %v2557
        %v2655 = vmax.f32 %v2559, 0.0
        %v2656 = vmax.f32 %v2560, 0.0
        %v2657 = vmax.f32 %v2561, 0.0
        %v2658 = vmax.f32 %v2562, 0.0
        %v2659 = vmax.f32 %v2563, 0.0
        %v2660 = vmax.f32 %v2564, 0.0
        %v2661 = vmax.f32 %v2565, 0.0
        %v2662 = vmax.f32 %v2566, 0.0
        %v2663 = vmax.f32 %v2567, 0.0
        %v2664 = vmax.f32 %v2568, 0.0
        %v2665 = vmax.f32 %v2569, 0.0
        %v2666 = vmax.f32 %v2570, 0.0
        %v2667 = vmax.f32 %v2571, 0.0
        %v2668 = vmax.f32 %v2572, 0.0
        %v2669 = vmax.f32 %v2573, 0.0
        %v2670 = vmax.f32 %v2574, 0.0
        %v2671 = vmax.f32 %v2575, 0.0
        %v2672 = vmax.f32 %v2576, 0.0
        %v2673 = vmax.f32 %v2577, 0.0
        %v2674 = vmax.f32 %v2578, 0.0
        %v2675 = vmax.f32 %v2579, 0.0
        %v2676 = vmax.f32 %v2580, 0.0
        %v2677 = vmax.f32 %v2581, 0.0
        %v2678 = vmax.f32 %v2582, 0.0
        %v2679 = vmax.f32 %v2583, 0.0
        %v2680 = vmax.f32 %v2584, 0.0
        %v2681 = vmax.f32 %v2585, 0.0
        %v2682 = vmax.f32 %v2586, 0.0
        %v2683 = vmax.f32 %v2587, 0.0
        %v2684 = vmax.f32 %v2588, 0.0
        %v2685 = vmax.f32 %v2589, 0.0
        %v2686 = vmax.f32 %v2590, 0.0
        %v2687 = vmax.f32 %v2591, 0.0
        %v2688 = vmax.f32 %v2592, 0.0
        %v2689 = vmax.f32 %v2593, 0.0
        %v2690 = vmax.f32 %v2594, 0.0
        %v2691 = vmax.f32 %v2595, 0.0
        %v2692 = vmax.f32 %v2596, 0.0
        %v2693 = vmax.f32 %v2597, 0.0
        %v2694 = vmax.f32 %v2598, 0.0
        %v2695 = vmax.f32 %v2599, 0.0
        %v2696 = vmax.f32 %v2600, 0.0
        %v2697 = vmax.f32 %v2601, 0.0
        %v2698 = vmax.f32 %v2602, 0.0
        %v2699 = vmax.f32 %v2603, 0.0
        %v2700 = vmax.f32 %v2604, 0.0
        %v2701 = vmax.f32 %v2605, 0.0
        %v2702 = vmax.f32 %v2606, 0.0
        %v2703 = vmax.f32 %v2607, 0.0
        %v2704 = vmax.f32 %v2608, 0.0
        %v2705 = vmax.f32 %v2609, 0.0
        %v2706 = vmax.f32 %v2610, 0.0
        %v2707 = vmax.f32 %v2611, 0.0
        %v2708 = vmax.f32 %v2612, 0.0
        %v2709 = vmax.f32 %v2613, 0.0
        %v2710 = vmax.f32 %v2614, 0.0
        %v2711 = vmax.f32 %v2615, 0.0
        %v2712 = vmax.f32 %v2616, 0.0
        %v2713 = vmax.f32 %v2617, 0.0
        %v2714 = vmax.f32 %v2618, 0.0
        %v2715 = vmax.f32 %v2619, 0.0
        %v2716 = vmax.f32 %v2620, 0.0
        %v2717 = vmax.f32 %v2621, 0.0
        %v2718 = vmax.f32 %v2622, 0.0
        %v2719 = vmax.f32 %v2623, 0.0
        %v2720 = vmax.f32 %v2624, 0.0
        %v2721 = vmax.f32 %v2625, 0.0
        %v2722 = vmax.f32 %v2626, 0.0
        %v2723 = vmax.f32 %v2627, 0.0
        %v2724 = vmax.f32 %v2628, 0.0
        %v2725 = vmax.f32 %v2629, 0.0
        %v2726 = vmax.f32 %v2630, 0.0
        %v2727 = vmax.f32 %v2631, 0.0
        %v2728 = vmax.f32 %v2632, 0.0
        %v2729 = vmax.f32 %v2633, 0.0
        %v2730 = vmax.f32 %v2634, 0.0
        %v2731 = vmax.f32 %v2635, 0.0
        %v2732 = vmax.f32 %v2636, 0.0
        %v2733 = vmax.f32 %v2637, 0.0
        %v2734 = vmax.f32 %v2638, 0.0
        %v2735 = vmax.f32 %v2639, 0.0
        %v2736 = vmax.f32 %v2640, 0.0
        %v2737 = vmax.f32 %v2641, 0.0
        %v2738 = vmax.f32 %v2642, 0.0
        %v2739 = vmax.f32 %v2643, 0.0
        %v2740 = vmax.f32 %v2644, 0.0
        %v2741 = vmax.f32 %v2645, 0.0
        %v2742 = vmax.f32 %v2646, 0.0
        %v2743 = vmax.f32 %v2647, 0.0
        %v2744 = vmax.f32 %v2648, 0.0
        %v2745 = vmax.f32 %v2649, 0.0
        %v2746 = vmax.f32 %v2650, 0.0
        %v2747 = vmax.f32 %v2651, 0.0
        %v2748 = vmax.f32 %v2652, 0.0
        %v2749 = vmax.f32 %v2653, 0.0
        %v2750 = vmax.f32 %v2654, 0.0
        %v2751 = vmax.f32 %v2655, %v2663
        %v2752 = vmax.f32 %v2656, %v2664
        %v2753 = vmax.f32 %v2657, %v2665
        %v2754 = vmax.f32 %v2658, %v2666
        %v2755 = vmax.f32 %v2659, %v2667
        %v2756 = vmax.f32 %v2660, %v2668
        %v2757 = vmax.f32 %v2661, %v2669
        %v2758 = vmax.f32 %v2662, %v2670
        %v2759 = vmax.f32 %v2671, %v2679
        %v2760 = vmax.f32 %v2672, %v2680
        %v2761 = vmax.f32 %v2673, %v2681
        %v2762 = vmax.f32 %v2674, %v2682
        %v2763 = vmax.f32 %v2675, %v2683
        %v2764 = vmax.f32 %v2676, %v2684
        %v2765 = vmax.f32 %v2677, %v2685
        %v2766 = vmax.f32 %v2678, %v2686
        %v2767 = vmax.f32 %v2687, %v2695
        %v2768 = vmax.f32 %v2688, %v2696
        %v2769 = vmax.f32 %v2689, %v2697
        %v2770 = vmax.f32 %v2690, %v2698
        %v2771 = vmax.f32 %v2691, %v2699
        %v2772 = vmax.f32 %v2692, %v2700
        %v2773 = vmax.f32 %v2693, %v2701
        %v2774 = vmax.f32 %v2694, %v2702
        %v2775 = vmax.f32 %v2703, %v2711
        %v2776 = vmax.f32 %v2704, %v2712
        %v2777 = vmax.f32 %v2705, %v2713
        %v2778 = vmax.f32 %v2706, %v2714
        %v2779 = vmax.f32 %v2707, %v2715
        %v2780 = vmax.f32 %v2708, %v2716
        %v2781 = vmax.f32 %v2709, %v2717
        %v2782 = vmax.f32 %v2710, %v2718
        %v2783 = vmax.f32 %v2719, %v2727
        %v2784 = vmax.f32 %v2720, %v2728
        %v2785 = vmax.f32 %v2721, %v2729
        %v2786 = vmax.f32 %v2722, %v2730
        %v2787 = vmax.f32 %v2723, %v2731
        %v2788 = vmax.f32 %v2724, %v2732
        %v2789 = vmax.f32 %v2725, %v2733
        %v2790 = vmax.f32 %v2726, %v2734
        %v2791 = vmax.f32 %v2735, %v2743
        %v2792 = vmax.f32 %v2736, %v2744
        %v2793 = vmax.f32 %v2737, %v2745
        %v2794 = vmax.f32 %v2738, %v2746
        %v2795 = vmax.f32 %v2739, %v2747
        %v2796 = vmax.f32 %v2740, %v2748
        %v2797 = vmax.f32 %v2741, %v2749
        %v2798 = vmax.f32 %v2742, %v2750
        %v2799 = vld [vmem:[%s5] sm:$0x1]
        %v2800 = vld [vmem:[%s4] sm:$0xff]
        %v2801 = vld [vmem:[%s4 + $0x8] sm:$0xff]
        %s2802 = scalar_lea.vmem %s4, 16
        %v2803 = vld [vmem:[%s2802] sm:$0xff]
        %v2804 = vld [vmem:[%s2802 + $0x8] sm:$0xff]
        %vm2805 = vcmask 130048
        %v2807 = vsel %vm2805, %v2759, 0
        %v2810 = vsel %vm2805, %v2760, 0
        %v2813 = vsel %vm2805, %v2761, 0
        %v2816 = vsel %vm2805, %v2762, 0
        %v2819 = vsel %vm2805, %v2763, 0
        %v2822 = vsel %vm2805, %v2764, 0
        %v2825 = vsel %vm2805, %v2765, 0
        %v2828 = vsel %vm2805, %v2766, 0
        %v2831 = vsel %vm2805, %v2767, 0
        %v2834 = vsel %vm2805, %v2768, 0
        %v2837 = vsel %vm2805, %v2769, 0
        %v2840 = vsel %vm2805, %v2770, 0
        %v2843 = vsel %vm2805, %v2771, 0
        %v2846 = vsel %vm2805, %v2772, 0
        %v2849 = vsel %vm2805, %v2773, 0
        %v2852 = vsel %vm2805, %v2774, 0
        %v2855 = vsel %vm2805, %v2775, 0
        %v2858 = vsel %vm2805, %v2776, 0
        %v2861 = vsel %vm2805, %v2777, 0
        %v2864 = vsel %vm2805, %v2778, 0
        %v2867 = vsel %vm2805, %v2779, 0
        %v2870 = vsel %vm2805, %v2780, 0
        %v2873 = vsel %vm2805, %v2781, 0
        %v2876 = vsel %vm2805, %v2782, 0
        %v2879 = vsel %vm2805, %v2783, 0
        %v2882 = vsel %vm2805, %v2784, 0
        %v2885 = vsel %vm2805, %v2785, 0
        %v2888 = vsel %vm2805, %v2786, 0
        %v2891 = vsel %vm2805, %v2787, 0
        %v2894 = vsel %vm2805, %v2788, 0
        %v2897 = vsel %vm2805, %v2789, 0
        %v2900 = vsel %vm2805, %v2790, 0
        %2902 = vmatpush.msra.mxu0 0.0
        %2903 = vmatpush.msra.mxu0 0.0
        %2904 = vmatpush.msra.mxu0 0.0
        %2905 = vmatpush.msra.mxu0 0.0
        %2906 = vmatpush.msra.mxu0 0.0
        %2907 = vmatpush.msra.mxu0 0.0
        %2908 = vmatpush.msra.mxu0 0.0
        %2909 = vmatpush.msra.mxu0 0.0
        %2910 = vmatpush.msra.mxu0 0.0
        %2911 = vmatpush.msra.mxu0 0.0
        %2912 = vmatpush.msra.mxu0 0.0
        %2913 = vmatpush.msra.mxu0 0.0
        %2914 = vmatpush.msra.mxu0 0.0
        %2915 = vmatpush.msra.mxu0 0.0
        %2916 = vmatpush.msra.mxu0 %v2804
        %2917 = vmatpush.msra.mxu0 %v2803
        %2918 = vmatmul.f32.gmra.mxu0 %v2807
        %v2919 = vpop.f32.mrf.mxu0
        %v2920 = vadd.f32 0.0, %v2919
        %2921 = vmatmul.f32.gmra.mxu0 %v2810
        %v2922 = vpop.f32.mrf.mxu0
        %v2923 = vadd.f32 0.0, %v2922
        %2924 = vmatmul.f32.gmra.mxu0 %v2813
        %v2925 = vpop.f32.mrf.mxu0
        %v2926 = vadd.f32 0.0, %v2925
        %2927 = vmatmul.f32.gmra.mxu0 %v2816
        %v2928 = vpop.f32.mrf.mxu0
        %v2929 = vadd.f32 0.0, %v2928
        %2930 = vmatmul.f32.gmra.mxu0 %v2819
        %v2931 = vpop.f32.mrf.mxu0
        %v2932 = vadd.f32 0.0, %v2931
        %2933 = vmatmul.f32.gmra.mxu0 %v2822
        %v2934 = vpop.f32.mrf.mxu0
        %v2935 = vadd.f32 0.0, %v2934
        %2936 = vmatmul.f32.gmra.mxu0 %v2825
        %v2937 = vpop.f32.mrf.mxu0
        %v2938 = vadd.f32 0.0, %v2937
        %2939 = vmatmul.f32.gmra.mxu0 %v2828
        %v2940 = vpop.f32.mrf.mxu0
        %v2941 = vadd.f32 0.0, %v2940
        %2942 = vmatmul.f32.gmra.mxu0 %v2831
        %v2943 = vpop.f32.mrf.mxu0
        %v2944 = vadd.f32 0.0, %v2943
        %2945 = vmatmul.f32.gmra.mxu0 %v2834
        %v2946 = vpop.f32.mrf.mxu0
        %v2947 = vadd.f32 0.0, %v2946
        %2948 = vmatmul.f32.gmra.mxu0 %v2837
        %v2949 = vpop.f32.mrf.mxu0
        %v2950 = vadd.f32 0.0, %v2949
        %2951 = vmatmul.f32.gmra.mxu0 %v2840
        %v2952 = vpop.f32.mrf.mxu0
        %v2953 = vadd.f32 0.0, %v2952
        %2954 = vmatmul.f32.gmra.mxu0 %v2843
        %v2955 = vpop.f32.mrf.mxu0
        %v2956 = vadd.f32 0.0, %v2955
        %2957 = vmatmul.f32.gmra.mxu0 %v2846
        %v2958 = vpop.f32.mrf.mxu0
        %v2959 = vadd.f32 0.0, %v2958
        %2960 = vmatmul.f32.gmra.mxu0 %v2849
        %v2961 = vpop.f32.mrf.mxu0
        %v2962 = vadd.f32 0.0, %v2961
        %2963 = vmatmul.f32.gmra.mxu0 %v2852
        %v2964 = vpop.f32.mrf.mxu0
        %v2965 = vadd.f32 0.0, %v2964
        %2966 = vmatmul.f32.gmra.mxu0 %v2855
        %v2967 = vpop.f32.mrf.mxu0
        %v2968 = vadd.f32 0.0, %v2967
        %2969 = vmatmul.f32.gmra.mxu0 %v2858
        %v2970 = vpop.f32.mrf.mxu0
        %v2971 = vadd.f32 0.0, %v2970
        %2972 = vmatmul.f32.gmra.mxu0 %v2861
        %v2973 = vpop.f32.mrf.mxu0
        %v2974 = vadd.f32 0.0, %v2973
        %2975 = vmatmul.f32.gmra.mxu0 %v2864
        %v2976 = vpop.f32.mrf.mxu0
        %v2977 = vadd.f32 0.0, %v2976
        %2978 = vmatmul.f32.gmra.mxu0 %v2867
        %v2979 = vpop.f32.mrf.mxu0
        %v2980 = vadd.f32 0.0, %v2979
        %2981 = vmatmul.f32.gmra.mxu0 %v2870
        %v2982 = vpop.f32.mrf.mxu0
        %v2983 = vadd.f32 0.0, %v2982
        %2984 = vmatmul.f32.gmra.mxu0 %v2873
        %v2985 = vpop.f32.mrf.mxu0
        %v2986 = vadd.f32 0.0, %v2985
        %2987 = vmatmul.f32.gmra.mxu0 %v2876
        %v2988 = vpop.f32.mrf.mxu0
        %v2989 = vadd.f32 0.0, %v2988
        %2990 = vmatmul.f32.gmra.mxu0 %v2879
        %v2991 = vpop.f32.mrf.mxu0
        %v2992 = vadd.f32 0.0, %v2991
        %2993 = vmatmul.f32.gmra.mxu0 %v2882
        %v2994 = vpop.f32.mrf.mxu0
        %v2995 = vadd.f32 0.0, %v2994
        %2996 = vmatmul.f32.gmra.mxu0 %v2885
        %v2997 = vpop.f32.mrf.mxu0
        %v2998 = vadd.f32 0.0, %v2997
        %2999 = vmatmul.f32.gmra.mxu0 %v2888
        %v3000 = vpop.f32.mrf.mxu0
        %v3001 = vadd.f32 0.0, %v3000
        %3002 = vmatmul.f32.gmra.mxu0 %v2891
        %v3003 = vpop.f32.mrf.mxu0
        %v3004 = vadd.f32 0.0, %v3003
        %3005 = vmatmul.f32.gmra.mxu0 %v2894
        %v3006 = vpop.f32.mrf.mxu0
        %v3007 = vadd.f32 0.0, %v3006
        %3008 = vmatmul.f32.gmra.mxu0 %v2897
        %v3009 = vpop.f32.mrf.mxu0
        %v3010 = vadd.f32 0.0, %v3009
        %3011 = vmatmul.f32.gmra.mxu0 %v2900
        %v3012 = vpop.f32.mrf.mxu0
        %v3013 = vadd.f32 0.0, %v3012
        %3014 = vdwg.mxu0
        %v3016 = vsel %vm2805, %v2751, 0
        %v3019 = vsel %vm2805, %v2752, 0
        %v3022 = vsel %vm2805, %v2753, 0
        %v3025 = vsel %vm2805, %v2754, 0
        %v3028 = vsel %vm2805, %v2755, 0
        %v3031 = vsel %vm2805, %v2756, 0
        %v3034 = vsel %vm2805, %v2757, 0
        %v3037 = vsel %vm2805, %v2758, 0
        %3039 = vmatpush.msra.mxu0 0.0
        %3040 = vmatpush.msra.mxu0 0.0
        %3041 = vmatpush.msra.mxu0 0.0
        %3042 = vmatpush.msra.mxu0 0.0
        %3043 = vmatpush.msra.mxu0 0.0
        %3044 = vmatpush.msra.mxu0 0.0
        %3045 = vmatpush.msra.mxu0 0.0
        %3046 = vmatpush.msra.mxu0 0.0
        %3047 = vmatpush.msra.mxu0 0.0
        %3048 = vmatpush.msra.mxu0 0.0
        %3049 = vmatpush.msra.mxu0 0.0
        %3050 = vmatpush.msra.mxu0 0.0
        %3051 = vmatpush.msra.mxu0 0.0
        %3052 = vmatpush.msra.mxu0 0.0
        %3053 = vmatpush.msra.mxu0 %v2801
        %3054 = vmatpush.msra.mxu0 %v2800
        %3055 = vmatmul.f32.gmra.mxu0 %v3016
        %v3056 = vpop.f32.mrf.mxu0
        %v3057 = vadd.f32 %v2920, %v3056
        %3058 = vmatmul.f32.gmra.mxu0 %v3019
        %v3059 = vpop.f32.mrf.mxu0
        %v3060 = vadd.f32 %v2923, %v3059
        %3061 = vmatmul.f32.gmra.mxu0 %v3022
        %v3062 = vpop.f32.mrf.mxu0
        %v3063 = vadd.f32 %v2926, %v3062
        %3064 = vmatmul.f32.gmra.mxu0 %v3025
        %v3065 = vpop.f32.mrf.mxu0
        %v3066 = vadd.f32 %v2929, %v3065
        %3067 = vmatmul.f32.gmra.mxu0 %v3028
        %v3068 = vpop.f32.mrf.mxu0
        %v3069 = vadd.f32 %v2932, %v3068
        %3070 = vmatmul.f32.gmra.mxu0 %v3031
        %v3071 = vpop.f32.mrf.mxu0
        %v3072 = vadd.f32 %v2935, %v3071
        %3073 = vmatmul.f32.gmra.mxu0 %v3034
        %v3074 = vpop.f32.mrf.mxu0
        %v3075 = vadd.f32 %v2938, %v3074
        %3076 = vmatmul.f32.gmra.mxu0 %v3037
        %v3077 = vpop.f32.mrf.mxu0
        %v3078 = vadd.f32 %v2941, %v3077
        %3079 = vmatmul.f32.gmra.mxu0 %v2807
        %v3080 = vpop.f32.mrf.mxu0
        %v3081 = vadd.f32 %v2944, %v3080
        %3082 = vmatmul.f32.gmra.mxu0 %v2810
        %v3083 = vpop.f32.mrf.mxu0
        %v3084 = vadd.f32 %v2947, %v3083
        %3085 = vmatmul.f32.gmra.mxu0 %v2813
        %v3086 = vpop.f32.mrf.mxu0
        %v3087 = vadd.f32 %v2950, %v3086
        %3088 = vmatmul.f32.gmra.mxu0 %v2816
        %v3089 = vpop.f32.mrf.mxu0
        %v3090 = vadd.f32 %v2953, %v3089
        %3091 = vmatmul.f32.gmra.mxu0 %v2819
        %v3092 = vpop.f32.mrf.mxu0
        %v3093 = vadd.f32 %v2956, %v3092
        %3094 = vmatmul.f32.gmra.mxu0 %v2822
        %v3095 = vpop.f32.mrf.mxu0
        %v3096 = vadd.f32 %v2959, %v3095
        %3097 = vmatmul.f32.gmra.mxu0 %v2825
        %v3098 = vpop.f32.mrf.mxu0
        %v3099 = vadd.f32 %v2962, %v3098
        %3100 = vmatmul.f32.gmra.mxu0 %v2828
        %v3101 = vpop.f32.mrf.mxu0
        %v3102 = vadd.f32 %v2965, %v3101
        %3103 = vmatmul.f32.gmra.mxu0 %v2831
        %v3104 = vpop.f32.mrf.mxu0
        %v3105 = vadd.f32 %v2968, %v3104
        %3106 = vmatmul.f32.gmra.mxu0 %v2834
        %v3107 = vpop.f32.mrf.mxu0
        %v3108 = vadd.f32 %v2971, %v3107
        %3109 = vmatmul.f32.gmra.mxu0 %v2837
        %v3110 = vpop.f32.mrf.mxu0
        %v3111 = vadd.f32 %v2974, %v3110
        %3112 = vmatmul.f32.gmra.mxu0 %v2840
        %v3113 = vpop.f32.mrf.mxu0
        %v3114 = vadd.f32 %v2977, %v3113
        %3115 = vmatmul.f32.gmra.mxu0 %v2843
        %v3116 = vpop.f32.mrf.mxu0
        %v3117 = vadd.f32 %v2980, %v3116
        %3118 = vmatmul.f32.gmra.mxu0 %v2846
        %v3119 = vpop.f32.mrf.mxu0
        %v3120 = vadd.f32 %v2983, %v3119
        %3121 = vmatmul.f32.gmra.mxu0 %v2849
        %v3122 = vpop.f32.mrf.mxu0
        %v3123 = vadd.f32 %v2986, %v3122
        %3124 = vmatmul.f32.gmra.mxu0 %v2852
        %v3125 = vpop.f32.mrf.mxu0
        %v3126 = vadd.f32 %v2989, %v3125
        %3127 = vmatmul.f32.gmra.mxu0 %v2855
        %v3128 = vpop.f32.mrf.mxu0
        %v3129 = vadd.f32 %v2992, %v3128
        %3130 = vmatmul.f32.gmra.mxu0 %v2858
        %v3131 = vpop.f32.mrf.mxu0
        %v3132 = vadd.f32 %v2995, %v3131
        %3133 = vmatmul.f32.gmra.mxu0 %v2861
        %v3134 = vpop.f32.mrf.mxu0
        %v3135 = vadd.f32 %v2998, %v3134
        %3136 = vmatmul.f32.gmra.mxu0 %v2864
        %v3137 = vpop.f32.mrf.mxu0
        %v3138 = vadd.f32 %v3001, %v3137
        %3139 = vmatmul.f32.gmra.mxu0 %v2867
        %v3140 = vpop.f32.mrf.mxu0
        %v3141 = vadd.f32 %v3004, %v3140
        %3142 = vmatmul.f32.gmra.mxu0 %v2870
        %v3143 = vpop.f32.mrf.mxu0
        %v3144 = vadd.f32 %v3007, %v3143
        %3145 = vmatmul.f32.gmra.mxu0 %v2873
        %v3146 = vpop.f32.mrf.mxu0
        %v3147 = vadd.f32 %v3010, %v3146
        %3148 = vmatmul.f32.gmra.mxu0 %v2876
        %v3149 = vpop.f32.mrf.mxu0
        %v3150 = vadd.f32 %v3013, %v3149
        %3151 = vdwg.mxu0
        %s3152 = scalar_lea.vmem %s4, 32
        %v3153 = vld [vmem:[%s3152] sm:$0xff]
        %v3154 = vld [vmem:[%s3152 + $0x8] sm:$0xff]
        %v3156 = vsel %vm2805, %v2791, 0
        %v3159 = vsel %vm2805, %v2792, 0
        %v3162 = vsel %vm2805, %v2793, 0
        %v3165 = vsel %vm2805, %v2794, 0
        %v3168 = vsel %vm2805, %v2795, 0
        %v3171 = vsel %vm2805, %v2796, 0
        %v3174 = vsel %vm2805, %v2797, 0
        %v3177 = vsel %vm2805, %v2798, 0
        %3179 = vmatpush.msra.mxu0 0.0
        %3180 = vmatpush.msra.mxu0 0.0
        %3181 = vmatpush.msra.mxu0 0.0
        %3182 = vmatpush.msra.mxu0 0.0
        %3183 = vmatpush.msra.mxu0 0.0
        %3184 = vmatpush.msra.mxu0 0.0
        %3185 = vmatpush.msra.mxu0 0.0
        %3186 = vmatpush.msra.mxu0 0.0
        %3187 = vmatpush.msra.mxu0 0.0
        %3188 = vmatpush.msra.mxu0 0.0
        %3189 = vmatpush.msra.mxu0 0.0
        %3190 = vmatpush.msra.mxu0 0.0
        %3191 = vmatpush.msra.mxu0 0.0
        %3192 = vmatpush.msra.mxu0 0.0
        %3193 = vmatpush.msra.mxu0 %v3154
        %3194 = vmatpush.msra.mxu0 %v3153
        %3195 = vmatmul.f32.gmra.mxu0 %v2831
        %v3196 = vpop.f32.mrf.mxu0
        %v3197 = vadd.f32 0.0, %v3196
        %3198 = vmatmul.f32.gmra.mxu0 %v2834
        %v3199 = vpop.f32.mrf.mxu0
        %v3200 = vadd.f32 0.0, %v3199
        %3201 = vmatmul.f32.gmra.mxu0 %v2837
        %v3202 = vpop.f32.mrf.mxu0
        %v3203 = vadd.f32 0.0, %v3202
        %3204 = vmatmul.f32.gmra.mxu0 %v2840
        %v3205 = vpop.f32.mrf.mxu0
        %v3206 = vadd.f32 0.0, %v3205
        %3207 = vmatmul.f32.gmra.mxu0 %v2843
        %v3208 = vpop.f32.mrf.mxu0
        %v3209 = vadd.f32 0.0, %v3208
        %3210 = vmatmul.f32.gmra.mxu0 %v2846
        %v3211 = vpop.f32.mrf.mxu0
        %v3212 = vadd.f32 0.0, %v3211
        %3213 = vmatmul.f32.gmra.mxu0 %v2849
        %v3214 = vpop.f32.mrf.mxu0
        %v3215 = vadd.f32 0.0, %v3214
        %3216 = vmatmul.f32.gmra.mxu0 %v2852
        %v3217 = vpop.f32.mrf.mxu0
        %v3218 = vadd.f32 0.0, %v3217
        %3219 = vmatmul.f32.gmra.mxu0 %v2855
        %v3220 = vpop.f32.mrf.mxu0
        %v3221 = vadd.f32 0.0, %v3220
        %3222 = vmatmul.f32.gmra.mxu0 %v2858
        %v3223 = vpop.f32.mrf.mxu0
        %v3224 = vadd.f32 0.0, %v3223
        %3225 = vmatmul.f32.gmra.mxu0 %v2861
        %v3226 = vpop.f32.mrf.mxu0
        %v3227 = vadd.f32 0.0, %v3226
        %3228 = vmatmul.f32.gmra.mxu0 %v2864
        %v3229 = vpop.f32.mrf.mxu0
        %v3230 = vadd.f32 0.0, %v3229
        %3231 = vmatmul.f32.gmra.mxu0 %v2867
        %v3232 = vpop.f32.mrf.mxu0
        %v3233 = vadd.f32 0.0, %v3232
        %3234 = vmatmul.f32.gmra.mxu0 %v2870
        %v3235 = vpop.f32.mrf.mxu0
        %v3236 = vadd.f32 0.0, %v3235
        %3237 = vmatmul.f32.gmra.mxu0 %v2873
        %v3238 = vpop.f32.mrf.mxu0
        %v3239 = vadd.f32 0.0, %v3238
        %3240 = vmatmul.f32.gmra.mxu0 %v2876
        %v3241 = vpop.f32.mrf.mxu0
        %v3242 = vadd.f32 0.0, %v3241
        %3243 = vmatmul.f32.gmra.mxu0 %v2879
        %v3244 = vpop.f32.mrf.mxu0
        %v3245 = vadd.f32 0.0, %v3244
        %3246 = vmatmul.f32.gmra.mxu0 %v2882
        %v3247 = vpop.f32.mrf.mxu0
        %v3248 = vadd.f32 0.0, %v3247
        %3249 = vmatmul.f32.gmra.mxu0 %v2885
        %v3250 = vpop.f32.mrf.mxu0
        %v3251 = vadd.f32 0.0, %v3250
        %3252 = vmatmul.f32.gmra.mxu0 %v2888
        %v3253 = vpop.f32.mrf.mxu0
        %v3254 = vadd.f32 0.0, %v3253
        %3255 = vmatmul.f32.gmra.mxu0 %v2891
        %v3256 = vpop.f32.mrf.mxu0
        %v3257 = vadd.f32 0.0, %v3256
        %3258 = vmatmul.f32.gmra.mxu0 %v2894
        %v3259 = vpop.f32.mrf.mxu0
        %v3260 = vadd.f32 0.0, %v3259
        %3261 = vmatmul.f32.gmra.mxu0 %v2897
        %v3262 = vpop.f32.mrf.mxu0
        %v3263 = vadd.f32 0.0, %v3262
        %3264 = vmatmul.f32.gmra.mxu0 %v2900
        %v3265 = vpop.f32.mrf.mxu0
        %v3266 = vadd.f32 0.0, %v3265
        %3267 = vmatmul.f32.gmra.mxu0 %v3156
        %v3268 = vpop.f32.mrf.mxu0
        %v3269 = vadd.f32 0.0, %v3268
        %3270 = vmatmul.f32.gmra.mxu0 %v3159
        %v3271 = vpop.f32.mrf.mxu0
        %v3272 = vadd.f32 0.0, %v3271
        %3273 = vmatmul.f32.gmra.mxu0 %v3162
        %v3274 = vpop.f32.mrf.mxu0
        %v3275 = vadd.f32 0.0, %v3274
        %3276 = vmatmul.f32.gmra.mxu0 %v3165
        %v3277 = vpop.f32.mrf.mxu0
        %v3278 = vadd.f32 0.0, %v3277
        %3279 = vmatmul.f32.gmra.mxu0 %v3168
        %v3280 = vpop.f32.mrf.mxu0
        %v3281 = vadd.f32 0.0, %v3280
        %3282 = vmatmul.f32.gmra.mxu0 %v3171
        %v3283 = vpop.f32.mrf.mxu0
        %v3284 = vadd.f32 0.0, %v3283
        %3285 = vmatmul.f32.gmra.mxu0 %v3174
        %v3286 = vpop.f32.mrf.mxu0
        %v3287 = vadd.f32 0.0, %v3286
        %3288 = vmatmul.f32.gmra.mxu0 %v3177
        %v3289 = vpop.f32.mrf.mxu0
        %v3290 = vadd.f32 0.0, %v3289
        %3291 = vdwg.mxu0
        %v3292 = vadd.f32 %v3057, %v3197
        %v3293 = vadd.f32 %v3060, %v3200
        %v3294 = vadd.f32 %v3063, %v3203
        %v3295 = vadd.f32 %v3066, %v3206
        %v3296 = vadd.f32 %v3069, %v3209
        %v3297 = vadd.f32 %v3072, %v3212
        %v3298 = vadd.f32 %v3075, %v3215
        %v3299 = vadd.f32 %v3078, %v3218
        %v3300 = vadd.f32 %v3081, %v3221
        %v3301 = vadd.f32 %v3084, %v3224
        %v3302 = vadd.f32 %v3087, %v3227
        %v3303 = vadd.f32 %v3090, %v3230
        %v3304 = vadd.f32 %v3093, %v3233
        %v3305 = vadd.f32 %v3096, %v3236
        %v3306 = vadd.f32 %v3099, %v3239
        %v3307 = vadd.f32 %v3102, %v3242
        %v3308 = vadd.f32 %v3105, %v3245
        %v3309 = vadd.f32 %v3108, %v3248
        %v3310 = vadd.f32 %v3111, %v3251
        %v3311 = vadd.f32 %v3114, %v3254
        %v3312 = vadd.f32 %v3117, %v3257
        %v3313 = vadd.f32 %v3120, %v3260
        %v3314 = vadd.f32 %v3123, %v3263
        %v3315 = vadd.f32 %v3126, %v3266
        %v3316 = vadd.f32 %v3129, %v3269
        %v3317 = vadd.f32 %v3132, %v3272
        %v3318 = vadd.f32 %v3135, %v3275
        %v3319 = vadd.f32 %v3138, %v3278
        %v3320 = vadd.f32 %v3141, %v3281
        %v3321 = vadd.f32 %v3144, %v3284
        %v3322 = vadd.f32 %v3147, %v3287
        %v3323 = vadd.f32 %v3150, %v3290
        %v3325 = vperm.slane %v2799, 0
        %v3327 = vadd.f32 %v3292, %v3325
        %v3328 = vadd.f32 %v3293, %v3325
        %v3329 = vadd.f32 %v3294, %v3325
        %v3330 = vadd.f32 %v3295, %v3325
        %v3331 = vadd.f32 %v3296, %v3325
        %v3332 = vadd.f32 %v3297, %v3325
        %v3333 = vadd.f32 %v3298, %v3325
        %v3334 = vadd.f32 %v3299, %v3325
        %v3335 = vadd.f32 %v3300, %v3325
        %v3336 = vadd.f32 %v3301, %v3325
        %v3337 = vadd.f32 %v3302, %v3325
        %v3338 = vadd.f32 %v3303, %v3325
        %v3339 = vadd.f32 %v3304, %v3325
        %v3340 = vadd.f32 %v3305, %v3325
        %v3341 = vadd.f32 %v3306, %v3325
        %v3342 = vadd.f32 %v3307, %v3325
        %v3343 = vadd.f32 %v3308, %v3325
        %v3344 = vadd.f32 %v3309, %v3325
        %v3345 = vadd.f32 %v3310, %v3325
        %v3346 = vadd.f32 %v3311, %v3325
        %v3347 = vadd.f32 %v3312, %v3325
        %v3348 = vadd.f32 %v3313, %v3325
        %v3349 = vadd.f32 %v3314, %v3325
        %v3350 = vadd.f32 %v3315, %v3325
        %v3351 = vadd.f32 %v3316, %v3325
        %v3352 = vadd.f32 %v3317, %v3325
        %v3353 = vadd.f32 %v3318, %v3325
        %v3354 = vadd.f32 %v3319, %v3325
        %v3355 = vadd.f32 %v3320, %v3325
        %v3356 = vadd.f32 %v3321, %v3325
        %v3357 = vadd.f32 %v3322, %v3325
        %v3358 = vadd.f32 %v3323, %v3325
        %v3359 = vmax.f32 %v3327, 0.0
        %v3360 = vmax.f32 %v3328, 0.0
        %v3361 = vmax.f32 %v3329, 0.0
        %v3362 = vmax.f32 %v3330, 0.0
        %v3363 = vmax.f32 %v3331, 0.0
        %v3364 = vmax.f32 %v3332, 0.0
        %v3365 = vmax.f32 %v3333, 0.0
        %v3366 = vmax.f32 %v3334, 0.0
        %v3367 = vmax.f32 %v3335, 0.0
        %v3368 = vmax.f32 %v3336, 0.0
        %v3369 = vmax.f32 %v3337, 0.0
        %v3370 = vmax.f32 %v3338, 0.0
        %v3371 = vmax.f32 %v3339, 0.0
        %v3372 = vmax.f32 %v3340, 0.0
        %v3373 = vmax.f32 %v3341, 0.0
        %v3374 = vmax.f32 %v3342, 0.0
        %v3375 = vmax.f32 %v3343, 0.0
        %v3376 = vmax.f32 %v3344, 0.0
        %v3377 = vmax.f32 %v3345, 0.0
        %v3378 = vmax.f32 %v3346, 0.0
        %v3379 = vmax.f32 %v3347, 0.0
        %v3380 = vmax.f32 %v3348, 0.0
        %v3381 = vmax.f32 %v3349, 0.0
        %v3382 = vmax.f32 %v3350, 0.0
        %v3383 = vmax.f32 %v3351, 0.0
        %v3384 = vmax.f32 %v3352, 0.0
        %v3385 = vmax.f32 %v3353, 0.0
        %v3386 = vmax.f32 %v3354, 0.0
        %v3387 = vmax.f32 %v3355, 0.0
        %v3388 = vmax.f32 %v3356, 0.0
        %v3389 = vmax.f32 %v3357, 0.0
        %v3390 = vmax.f32 %v3358, 0.0
        %v3391 = vmax.f32 %v3359, %v3367
        %v3392 = vmax.f32 %v3360, %v3368
        %v3393 = vmax.f32 %v3361, %v3369
        %v3394 = vmax.f32 %v3362, %v3370
        %v3395 = vmax.f32 %v3363, %v3371
        %v3396 = vmax.f32 %v3364, %v3372
        %v3397 = vmax.f32 %v3365, %v3373
        %v3398 = vmax.f32 %v3366, %v3374
        %v3399 = vmax.f32 %v3375, %v3383
        %v3400 = vmax.f32 %v3376, %v3384
        %v3401 = vmax.f32 %v3377, %v3385
        %v3402 = vmax.f32 %v3378, %v3386
        %v3403 = vmax.f32 %v3379, %v3387
        %v3404 = vmax.f32 %v3380, %v3388
        %v3405 = vmax.f32 %v3381, %v3389
        %v3406 = vmax.f32 %v3382, %v3390
        %vm3407 = vcmask 261120
        %v3408 = vsel %vm3407, %v3391, 0.0
        %v3409 = vsel %vm3407, %v3399, 0.0
        %v3410 = vadd.f32 %v3408, %v3409
        %v3411 = vsel %vm3407, %v3392, 0.0
        %v3412 = vsel %vm3407, %v3400, 0.0
        %v3413 = vadd.f32 %v3411, %v3412
        %v3414 = vsel %vm3407, %v3393, 0.0
        %v3415 = vsel %vm3407, %v3401, 0.0
        %v3416 = vadd.f32 %v3414, %v3415
        %v3417 = vsel %vm3407, %v3394, 0.0
        %v3418 = vsel %vm3407, %v3402, 0.0
        %v3419 = vadd.f32 %v3417, %v3418
        %v3420 = vsel %vm3407, %v3395, 0.0
        %v3421 = vsel %vm3407, %v3403, 0.0
        %v3422 = vadd.f32 %v3420, %v3421
        %v3423 = vsel %vm3407, %v3396, 0.0
        %v3424 = vsel %vm3407, %v3404, 0.0
        %v3425 = vadd.f32 %v3423, %v3424
        %v3426 = vsel %vm3407, %v3397, 0.0
        %v3427 = vsel %vm3407, %v3405, 0.0
        %v3428 = vadd.f32 %v3426, %v3427
        %v3429 = vsel %vm3407, %v3398, 0.0
        %v3430 = vsel %vm3407, %v3406, 0.0
        %v3431 = vadd.f32 %v3429, %v3430
        %v3432 = vrcp.pop 2.0
        %v3433 = vmul.f32 2.0, %v3432
        %v3434 = vsub.f32 1.0, %v3433
        %v3435 = vmul.f32 %v3432, %v3434
        %v3436 = vadd.f32 %v3432, %v3435
        %vm3437 = vweird.f32 %v3432
        %v3438 = vsel %vm3437, %v3432, %v3436
        %v3439 = vmul.f32 %v3410, %v3438
        %v3440 = vmul.f32 %v3413, %v3438
        %v3441 = vmul.f32 %v3416, %v3438
        %v3442 = vmul.f32 %v3419, %v3438
        %v3443 = vmul.f32 %v3422, %v3438
        %v3444 = vmul.f32 %v3425, %v3438
        %v3445 = vmul.f32 %v3428, %v3438
        %v3446 = vmul.f32 %v3431, %v3438
        %v3447 = vld [vmem:[%s6] sm:$0xff]
        %v3448 = vld [vmem:[%s6 + $0x8] sm:$0xff]
        %v3449 = vld [vmem:[%s6 + $0x10] sm:$0xff]
        %v3450 = vld [vmem:[%s6 + $0x18] sm:$0xff]
        %v3451 = vld [vmem:[%s896] sm:$0xff]
        %v3452 = vld [vmem:[%s896 + $0x8] sm:$0xff]
        %v3453 = vld [vmem:[%s896 + $0x10] sm:$0xff]
        %v3454 = vld [vmem:[%s896 + $0x18] sm:$0xff]
        %v3455 = vld [vmem:[%s896 + $0x20] sm:$0xff]
        %v3456 = vld [vmem:[%s896 + $0x28] sm:$0xff]
        %v3457 = vld [vmem:[%s896 + $0x30] sm:$0xff]
        %v3458 = vld [vmem:[%s896 + $0x38] sm:$0xff]
        %v3459 = vld [vmem:[%s7] sm:$0x3]
        %vm3460 = vcmask 15360
        %v3462 = vsel %vm3460, %v3451, 0
        %v3465 = vsel %vm3460, %v3452, 0
        %v3468 = vsel %vm3460, %v3453, 0
        %v3471 = vsel %vm3460, %v3454, 0
        %v3474 = vsel %vm3460, %v3455, 0
        %v3477 = vsel %vm3460, %v3456, 0
        %v3480 = vsel %vm3460, %v3457, 0
        %v3483 = vsel %vm3460, %v3458, 0
        %vm3485 = vcmask 1041408
        %v3487 = vsel %vm3485, %v3459, 0
        %3489 = vmatpush.msra.mxu0 0.0
        %3490 = vmatpush.msra.mxu0 0.0
        %3491 = vmatpush.msra.mxu0 0.0
        %3492 = vmatpush.msra.mxu0 0.0
        %3493 = vmatpush.msra.mxu0 0.0
        %3494 = vmatpush.msra.mxu0 0.0
        %3495 = vmatpush.msra.mxu0 0.0
        %3496 = vmatpush.msra.mxu0 0.0
        %3497 = vmatpush.msra.mxu0 0.0
        %3498 = vmatpush.msra.mxu0 0.0
        %3499 = vmatpush.msra.mxu0 0.0
        %3500 = vmatpush.msra.mxu0 0.0
        %3501 = vmatpush.msra.mxu0 0.0
        %3502 = vmatpush.msra.mxu0 0.0
        %3503 = vmatpush.msra.mxu0 0.0
        %3504 = vmatpush.msra.mxu0 %v3487
        %3505 = vmatmul.f32.gmra.mxu0 %v3462
        %v3506 = vpop.f32.mrf.mxu0
        %v3507 = vadd.f32 0.0, %v3506
        %3508 = vmatmul.f32.gmra.mxu0 %v3465
        %v3509 = vpop.f32.mrf.mxu0
        %v3510 = vadd.f32 0.0, %v3509
        %3511 = vmatmul.f32.gmra.mxu0 %v3468
        %v3512 = vpop.f32.mrf.mxu0
        %v3513 = vadd.f32 0.0, %v3512
        %3514 = vmatmul.f32.gmra.mxu0 %v3471
        %v3515 = vpop.f32.mrf.mxu0
        %v3516 = vadd.f32 0.0, %v3515
        %3517 = vmatmul.f32.gmra.mxu0 %v3474
        %v3518 = vpop.f32.mrf.mxu0
        %v3519 = vadd.f32 0.0, %v3518
        %3520 = vmatmul.f32.gmra.mxu0 %v3477
        %v3521 = vpop.f32.mrf.mxu0
        %v3522 = vadd.f32 0.0, %v3521
        %3523 = vmatmul.f32.gmra.mxu0 %v3480
        %v3524 = vpop.f32.mrf.mxu0
        %v3525 = vadd.f32 0.0, %v3524
        %3526 = vmatmul.f32.gmra.mxu0 %v3483
        %v3527 = vpop.f32.mrf.mxu0
        %v3528 = vadd.f32 0.0, %v3527
        %3529 = vdwg.mxu0
        %v3531 = vsel %vm3407, %v3439, 0
        %v3534 = vsel %vm3407, %v3440, 0
        %v3537 = vsel %vm3407, %v3441, 0
        %v3540 = vsel %vm3407, %v3442, 0
        %v3543 = vsel %vm3407, %v3443, 0
        %v3546 = vsel %vm3407, %v3444, 0
        %v3549 = vsel %vm3407, %v3445, 0
        %v3552 = vsel %vm3407, %v3446, 0
        %3554 = vmatpush.msra.mxu0 0.0
        %3555 = vmatpush.msra.mxu0 0.0
        %3556 = vmatpush.msra.mxu0 0.0
        %3557 = vmatpush.msra.mxu0 0.0
        %3558 = vmatpush.msra.mxu0 0.0
        %3559 = vmatpush.msra.mxu0 0.0
        %3560 = vmatpush.msra.mxu0 0.0
        %3561 = vmatpush.msra.mxu0 0.0
        %3562 = vmatpush.msra.mxu0 0.0
        %3563 = vmatpush.msra.mxu0 0.0
        %3564 = vmatpush.msra.mxu0 0.0
        %3565 = vmatpush.msra.mxu0 0.0
        %3566 = vmatpush.msra.mxu0 %v3450
        %3567 = vmatpush.msra.mxu0 %v3449
        %3568 = vmatpush.msra.mxu0 %v3448
        %3569 = vmatpush.msra.mxu0 %v3447
        %3570 = vmatmul.f32.gmra.mxu0 %v3531
        %v3571 = vpop.f32.mrf.mxu0
        %v3572 = vadd.f32 %v3507, %v3571
        %3573 = vmatmul.f32.gmra.mxu0 %v3534
        %v3574 = vpop.f32.mrf.mxu0
        %v3575 = vadd.f32 %v3510, %v3574
        %3576 = vmatmul.f32.gmra.mxu0 %v3537
        %v3577 = vpop.f32.mrf.mxu0
        %v3578 = vadd.f32 %v3513, %v3577
        %3579 = vmatmul.f32.gmra.mxu0 %v3540
        %v3580 = vpop.f32.mrf.mxu0
        %v3581 = vadd.f32 %v3516, %v3580
        %3582 = vmatmul.f32.gmra.mxu0 %v3543
        %v3583 = vpop.f32.mrf.mxu0
        %v3584 = vadd.f32 %v3519, %v3583
        %3585 = vmatmul.f32.gmra.mxu0 %v3546
        %v3586 = vpop.f32.mrf.mxu0
        %v3587 = vadd.f32 %v3522, %v3586
        %3588 = vmatmul.f32.gmra.mxu0 %v3549
        %v3589 = vpop.f32.mrf.mxu0
        %v3590 = vadd.f32 %v3525, %v3589
        %3591 = vmatmul.f32.gmra.mxu0 %v3552
        %v3592 = vpop.f32.mrf.mxu0
        %v3593 = vadd.f32 %v3528, %v3592
        %3594 = vdwg.mxu0
        %v3595 = vld [vmem:[%s8] sm:$0x1]
        %v3597 = vperm.slane %v3595, 0
        %v3599 = vadd.f32 %v3572, %v3597
        %v3600 = vadd.f32 %v3575, %v3597
        %v3601 = vadd.f32 %v3578, %v3597
        %v3602 = vadd.f32 %v3581, %v3597
        %v3603 = vadd.f32 %v3584, %v3597
        %v3604 = vadd.f32 %v3587, %v3597
        %v3605 = vadd.f32 %v3590, %v3597
        %v3606 = vadd.f32 %v3593, %v3597
        %v3607 = vmax.f32 %v3599, 0.0
        %v3608 = vmax.f32 %v3600, 0.0
        %v3609 = vmax.f32 %v3601, 0.0
        %v3610 = vmax.f32 %v3602, 0.0
        %v3611 = vmax.f32 %v3603, 0.0
        %v3612 = vmax.f32 %v3604, 0.0
        %v3613 = vmax.f32 %v3605, 0.0
        %v3614 = vmax.f32 %v3606, 0.0
        %3617 = vrot.lane.b32.xlu0 %v3609, 32
        %v3618 = vpop.permute.xlu0 %3617
        %3619 = vrot.lane.b32.xlu0 %v3610, 32
        %v3620 = vpop.permute.xlu0 %3619
        %3625 = vrot.lane.b32.xlu0 %v3611, 64
        %v3626 = vpop.permute.xlu0 %3625
        %3627 = vrot.lane.b32.xlu0 %v3612, 64
        %v3628 = vpop.permute.xlu0 %3627
        %3633 = vrot.lane.b32.xlu0 %v3613, 96
        %v3634 = vpop.permute.xlu0 %3633
        %3635 = vrot.lane.b32.xlu0 %v3614, 96
        %v3636 = vpop.permute.xlu0 %3635
        %v3639 = vsel %vm3407, %v3607, %v3618
        %v3640 = vsel %vm3407, %v3608, %v3620
        %vm3641 = vcmask 523264
        %v3642 = vsel %vm3641, %v3639, %v3626
        %v3643 = vsel %vm3641, %v3640, %v3628
        %vm3644 = vcmask 785408
        %v3645 = vsel %vm3644, %v3642, %v3634
        %v3646 = vsel %vm3644, %v3643, %v3636
        %3647 = vst [vmem:[%s890] sm:$0xff] %v3645
        %3648 = vst [vmem:[%s890 + $0x8] sm:$0xff] %v3646
        %s3649 = sand.u32 %s230, 1
        %s3650 = scalar_lea.sflag [#allocation4], %s3649
        %s3651 = sand.u32 %s230, 1
        %s3652 = smul.addr %s3651, 16
        %s3653 = scalar_lea.vmem [#allocation3], %s3652
        // Predicated region
        $region95: #{tpu_custom_call.1} parent=89 // pred_check
          %p3654 = pneg %p240
        $region96: #{tpu_custom_call.1} parent=89 // pred_check_branch
          %3656 = sbr.rel (%p3654) target = $region98
        $region97: #{tpu_custom_call.1} parent=89 // pred_region
          %s3657 = smul.u32 2, %s23
          %3659 = vsyncadd %s3650, 0
          %s3660 = smul.addr %s3657, 8
          %s3661 = scalar_lea.hbm %s9, %s3660
          %s3662 = sshll.u32 %s3653, 4
          %s3663 = int_to_ptr.vmem [resolvable:$true] %s3662
          %s3664 = sshll.u32 %s3661, 4
          %s3665 = int_to_ptr.hbm [resolvable:$true] %s3664
          %3670 = dma.vmem_to_hbm [thread:$0]  %s3663, 256, %s3665, %s3650, 128, 128, 8
        $region98: #{tpu_custom_call.1} parent=89 // pred_fallthru
          _
      $region90: #{tpu_custom_call.1} parent=5 // pred_fallthru
        _
      %p3671 = scmp.le.s32.totalorder 2, %s18
      // Predicated region
      $region99: #{tpu_custom_call.1} parent=5 // pred_check
        %p3672 = pneg %p3671
      $region100: #{tpu_custom_call.1} parent=5 // pred_check_branch
        %3674 = sbr.rel (%p3672) target = $region102
      $region101: #{tpu_custom_call.1} parent=5 // pred_region
        %s3675 = ssub.s32 %s18, 2
        // Predicated region
        $region103: #{tpu_custom_call.1} parent=101 // pred_check
          %p3676 = pneg %p246
        $region104: #{tpu_custom_call.1} parent=101 // pred_check_branch
          %3678 = sbr.rel (%p3676) target = $region106
        $region105: #{tpu_custom_call.1} parent=101 // pred_region
          %s3679 = sand.u32 %s231, 1
          %s3680 = scalar_lea.sflag [#allocation4], %s3679
          %s3681 = sand.u32 %s231, 1
          %s3682 = smul.addr %s3681, 16
          %s3683 = scalar_lea.vmem [#allocation3], %s3682
          %3685 = dma.done %s3680, 256
        $region106: #{tpu_custom_call.1} parent=101 // pred_fallthru
          _
      $region102: #{tpu_custom_call.1} parent=5 // pred_fallthru
        _
    $region6: #{tpu_custom_call.1} parent=1 // loop_footer
      %s22 = sadd.s32 1, %s18
    $region7: #{tpu_custom_call.1} parent=1 // loop_footer_branch
      %17 = sbr.rel target = $region3
    $region8: #{tpu_custom_call.1} parent=1 // loop_exit
      _
    %3686 = vsyncpa [#allocation4], 1
    %s3687 = scalar_lea.sflag [#allocation4], 1
    %3688 = vsyncpa %s3687, 1

</llo_original>
